<compile_context>
chip_gen: v7x
topology: tpu7x:2x2x1
jax: 0.10.0
libtpu: 0.0.40
codegen_flags: <defaults>
</compile_context>

<pallas_src>
import functools

import jax
import jax.numpy as jnp
from jax.experimental import pallas as pl
from jax.experimental.pallas import tpu as pltpu


def _upsample_conv_kernel(xp_ref, w_ref, o_ref, acc_ref, *, H, W, C_in, C_out):
    """3x3 stride-1 'same' conv (no bias) of one NHWC image.

    xp_ref : (1, H+2, W+2, C_in)   zero halo-padded input image
    w_ref  : (3, 3, C_in, C_out)   conv weights, tap-major
    o_ref  : (1, H, W, C_out)      conv output (pre pixel-shuffle)
    acc_ref: (H*W, C_out) f32      VMEM accumulator
    """
    acc_ref[...] = jnp.zeros_like(acc_ref)
    # 9 shifted matmuls: one MXU dot per (ky, kx) tap, accumulated in f32.
    for ky in range(3):
        for kx in range(3):
            patch = xp_ref[0, ky:ky + H, kx:kx + W, :]            # (H, W, C_in)
            lhs = patch.reshape(H * W, C_in).astype(jnp.float32)
            rhs = w_ref[ky, kx].astype(jnp.float32)               # (C_in, C_out)
            acc_ref[...] += jnp.dot(lhs, rhs, preferred_element_type=jnp.float32)
    o_ref[0] = acc_ref[...].reshape(H, W, C_out).astype(o_ref.dtype)


def upsample_forward(x, weight):
    """Pallas equivalent of Upsample.forward.

    x      : (N, C, H, W)      NCHW input (like PyTorch)
    weight : (2C, C, 3, 3)     PyTorch Conv2d weight layout (OIHW)
    returns: (N, C//2, 2H, 2W) NCHW output
    """
    N, C, H, W = x.shape
    C_out = 2 * C
    assert weight.shape == (C_out, C, 3, 3), weight.shape
    assert C_out % 4 == 0, "PixelShuffle(2) needs conv output channels % 4 == 0"

    # NCHW -> NHWC (channels on lanes); 1-pixel zero halo for the 'same' conv.
    x_nhwc = jnp.transpose(x, (0, 2, 3, 1))
    xp = jnp.pad(x_nhwc, ((0, 0), (1, 1), (1, 1), (0, 0)))
    # OIHW -> (ky, kx, C_in, C_out) so each tap is a matmul RHS.
    w_k = jnp.transpose(weight, (2, 3, 1, 0))

    flops = 2 * N * H * W * C * C_out * 9
    bytes_accessed = (xp.size + w_k.size + N * H * W * C_out) * 4

    # TODO(synk): for very large images, tile H with halo blocks (manual DMA /
    # pl.Element) instead of whole-image blocks to bound VMEM per grid step.
    y_nhwc = pl.pallas_call(
        functools.partial(_upsample_conv_kernel, H=H, W=W, C_in=C, C_out=C_out),
        out_shape=jax.ShapeDtypeStruct((N, H, W, C_out), x.dtype),
        grid_spec=pltpu.PrefetchScalarGridSpec(
            num_scalar_prefetch=0,
            grid=(N,),  # one image per grid step
            in_specs=[
                pl.BlockSpec((1, H + 2, W + 2, C), lambda n: (n, 0, 0, 0)),
                pl.BlockSpec((3, 3, C, C_out), lambda n: (0, 0, 0, 0)),  # resident
            ],
            out_specs=pl.BlockSpec((1, H, W, C_out), lambda n: (n, 0, 0, 0)),
            scratch_shapes=[pltpu.VMEM((H * W, C_out), jnp.float32)],
        ),
        compiler_params=pltpu.CompilerParams(
            dimension_semantics=("parallel",),  # batch is independent (megacore on v7x)
        ),
        cost_estimate=pl.CostEstimate(
            flops=flops, transcendentals=0, bytes_accessed=bytes_accessed),
    )(xp, w_k)

    # PixelShuffle(2): out[n, c, 2h+i, 2w+j] = conv[n, c*4 + 2i + j, h, w]
    Cps = C_out // 4
    y6 = y_nhwc.reshape(N, H, W, Cps, 2, 2)                        # (n,h,w,c,i,j)
    out_nhwc = jnp.transpose(y6, (0, 1, 4, 2, 5, 3)).reshape(N, 2 * H, 2 * W, Cps)
    return jnp.transpose(out_nhwc, (0, 3, 1, 2))                   # back to NCHW


if __name__ == "__main__":
    key = jax.random.PRNGKey(0)
    k1, k2 = jax.random.split(key)
    N, n_feat, H, W = 2, 4, 16, 16
    x = jax.random.normal(k1, (N, n_feat, H, W), dtype=jnp.float32)
    weight = jax.random.normal(k2, (2 * n_feat, n_feat, 3, 3), dtype=jnp.float32) * 0.1

    out = upsample_forward(x, weight)
    out = jax.block_until_ready(out)

    # Reference: XLA conv (highest precision) + pixel shuffle.
    y_ref = jax.lax.conv_general_dilated(
        x, weight, window_strides=(1, 1), padding=((1, 1), (1, 1)),
        dimension_numbers=("NCHW", "OIHW", "NCHW"),
        precision=jax.lax.Precision.HIGHEST)
    Cps = (2 * n_feat) // 4
    ref = y_ref.reshape(N, Cps, 2, 2, H, W).transpose(0, 1, 4, 2, 5, 3)
    ref = ref.reshape(N, Cps, 2 * H, 2 * W)

    assert out.shape == (N, Cps, 2 * H, 2 * W), out.shape
    assert jnp.allclose(out, ref, rtol=1e-4, atol=1e-4), float(
        jnp.max(jnp.abs(out - ref)))

    print("KERNEL_OK")
</pallas_src>

<mosaic_0001>
module attributes {stable_mosaic.version = 11 : i64} {
  func.func @_upsample_conv_kernel(%arg0: i32, %arg1: memref<1x18x18x4xf32, #tpu.memory_space<vmem>>, %arg2: memref<3x3x4x8xf32, #tpu.memory_space<vmem>>, %arg3: memref<1x16x16x8xf32, #tpu.memory_space<vmem>>, %arg4: memref<256x8xf32, #tpu.memory_space<vmem>>) attributes {dimension_semantics = [#tpu.dimension_semantics<parallel>], iteration_bounds = array<i64: 2>, scalar_prefetch = 0 : i64, scratch_operands = 1 : i64, tpu.core_type = #tpu.core_type<tc>, window_params = [{transform_indices = @transform_0, window_bounds = array<i64: 1, 18, 18, 4>}, {pipeline_mode = #tpu.pipeline_mode<synchronous>, transform_indices = @transform_1, window_bounds = array<i64: 3, 3, 4, 8>}, {transform_indices = @transform_2, window_bounds = array<i64: 1, 16, 16, 8>}]} {
    %cst = arith.constant 0.000000e+00 : f32
    %0 = vector.broadcast %cst : f32 to vector<256x8xf32>
    %c0 = arith.constant 0 : index
    %c0_0 = arith.constant 0 : index
    %1 = vector.load %arg4[%c0, %c0_0] : memref<256x8xf32, #tpu.memory_space<vmem>>, vector<256x8xf32>
    tpu.vector_store %arg4[%c0, %c0_0], %0 {strides = array<i32>} : memref<256x8xf32, #tpu.memory_space<vmem>>, vector<256x8xf32>,
    %c0_1 = arith.constant 0 : index
    %c0_2 = arith.constant 0 : index
    %c0_3 = arith.constant 0 : index
    %c0_4 = arith.constant 0 : index
    %2 = vector.load %arg1[%c0_1, %c0_2, %c0_3, %c0_4] : memref<1x18x18x4xf32, #tpu.memory_space<vmem>>, vector<1x16x16x4xf32>
    %3 = vector.shape_cast %2 : vector<1x16x16x4xf32> to vector<16x16x4xf32>
    %4 = vector.shape_cast %3 : vector<16x16x4xf32> to vector<256x4xf32>
    %c0_5 = arith.constant 0 : index
    %c0_6 = arith.constant 0 : index
    %c0_7 = arith.constant 0 : index
    %c0_8 = arith.constant 0 : index
    %5 = vector.load %arg2[%c0_5, %c0_6, %c0_7, %c0_8] : memref<3x3x4x8xf32, #tpu.memory_space<vmem>>, vector<1x1x4x8xf32>
    %6 = vector.shape_cast %5 : vector<1x1x4x8xf32> to vector<4x8xf32>
    %c0_9 = arith.constant 0 : index
    %c0_10 = arith.constant 0 : index
    %7 = vector.load %arg4[%c0_9, %c0_10] : memref<256x8xf32, #tpu.memory_space<vmem>>, vector<256x8xf32>
    %cst_11 = arith.constant dense<0.000000e+00> : vector<256x8xf32>
    %8 = tpu.matmul %4, %6, %cst_11 {dimension_numbers = #tpu.dot_dimension_numbers<[1], [0], [0], [1], [0, 0, 1, 1], [], []>} : vector<256x4xf32>, vector<4x8xf32>, vector<256x8xf32> -> vector<256x8xf32>
    %9 = arith.addf %7, %8 : vector<256x8xf32>
    %c0_12 = arith.constant 0 : index
    %c0_13 = arith.constant 0 : index
    %10 = vector.load %arg4[%c0_12, %c0_13] : memref<256x8xf32, #tpu.memory_space<vmem>>, vector<256x8xf32>
    tpu.vector_store %arg4[%c0_12, %c0_13], %9 {strides = array<i32>} : memref<256x8xf32, #tpu.memory_space<vmem>>, vector<256x8xf32>,
    %c0_14 = arith.constant 0 : index
    %c0_15 = arith.constant 0 : index
    %c1 = arith.constant 1 : index
    %c0_16 = arith.constant 0 : index
    %11 = vector.load %arg1[%c0_14, %c0_15, %c1, %c0_16] : memref<1x18x18x4xf32, #tpu.memory_space<vmem>>, vector<1x16x16x4xf32>
    %12 = vector.shape_cast %11 : vector<1x16x16x4xf32> to vector<16x16x4xf32>
    %13 = vector.shape_cast %12 : vector<16x16x4xf32> to vector<256x4xf32>
    %c0_17 = arith.constant 0 : index
    %c1_18 = arith.constant 1 : index
    %c0_19 = arith.constant 0 : index
    %c0_20 = arith.constant 0 : index
    %14 = vector.load %arg2[%c0_17, %c1_18, %c0_19, %c0_20] : memref<3x3x4x8xf32, #tpu.memory_space<vmem>>, vector<1x1x4x8xf32>
    %15 = vector.shape_cast %14 : vector<1x1x4x8xf32> to vector<4x8xf32>
    %c0_21 = arith.constant 0 : index
    %c0_22 = arith.constant 0 : index
    %16 = vector.load %arg4[%c0_21, %c0_22] : memref<256x8xf32, #tpu.memory_space<vmem>>, vector<256x8xf32>
    %cst_23 = arith.constant dense<0.000000e+00> : vector<256x8xf32>
    %17 = tpu.matmul %13, %15, %cst_23 {dimension_numbers = #tpu.dot_dimension_numbers<[1], [0], [0], [1], [0, 0, 1, 1], [], []>} : vector<256x4xf32>, vector<4x8xf32>, vector<256x8xf32> -> vector<256x8xf32>
    %18 = arith.addf %16, %17 : vector<256x8xf32>
    %c0_24 = arith.constant 0 : index
    %c0_25 = arith.constant 0 : index
    %19 = vector.load %arg4[%c0_24, %c0_25] : memref<256x8xf32, #tpu.memory_space<vmem>>, vector<256x8xf32>
    tpu.vector_store %arg4[%c0_24, %c0_25], %18 {strides = array<i32>} : memref<256x8xf32, #tpu.memory_space<vmem>>, vector<256x8xf32>,
    %c0_26 = arith.constant 0 : index
    %c0_27 = arith.constant 0 : index
    %c2 = arith.constant 2 : index
    %c0_28 = arith.constant 0 : index
    %20 = vector.load %arg1[%c0_26, %c0_27, %c2, %c0_28] : memref<1x18x18x4xf32, #tpu.memory_space<vmem>>, vector<1x16x16x4xf32>
    %21 = vector.shape_cast %20 : vector<1x16x16x4xf32> to vector<16x16x4xf32>
    %22 = vector.shape_cast %21 : vector<16x16x4xf32> to vector<256x4xf32>
    %c0_29 = arith.constant 0 : index
    %c2_30 = arith.constant 2 : index
    %c0_31 = arith.constant 0 : index
    %c0_32 = arith.constant 0 : index
    %23 = vector.load %arg2[%c0_29, %c2_30, %c0_31, %c0_32] : memref<3x3x4x8xf32, #tpu.memory_space<vmem>>, vector<1x1x4x8xf32>
    %24 = vector.shape_cast %23 : vector<1x1x4x8xf32> to vector<4x8xf32>
    %c0_33 = arith.constant 0 : index
    %c0_34 = arith.constant 0 : index
    %25 = vector.load %arg4[%c0_33, %c0_34] : memref<256x8xf32, #tpu.memory_space<vmem>>, vector<256x8xf32>
    %cst_35 = arith.constant dense<0.000000e+00> : vector<256x8xf32>
    %26 = tpu.matmul %22, %24, %cst_35 {dimension_numbers = #tpu.dot_dimension_numbers<[1], [0], [0], [1], [0, 0, 1, 1], [], []>} : vector<256x4xf32>, vector<4x8xf32>, vector<256x8xf32> -> vector<256x8xf32>
    %27 = arith.addf %25, %26 : vector<256x8xf32>
    %c0_36 = arith.constant 0 : index
    %c0_37 = arith.constant 0 : index
    %28 = vector.load %arg4[%c0_36, %c0_37] : memref<256x8xf32, #tpu.memory_space<vmem>>, vector<256x8xf32>
    tpu.vector_store %arg4[%c0_36, %c0_37], %27 {strides = array<i32>} : memref<256x8xf32, #tpu.memory_space<vmem>>, vector<256x8xf32>,
    %c0_38 = arith.constant 0 : index
    %c1_39 = arith.constant 1 : index
    %c0_40 = arith.constant 0 : index
    %c0_41 = arith.constant 0 : index
    %29 = vector.load %arg1[%c0_38, %c1_39, %c0_40, %c0_41] : memref<1x18x18x4xf32, #tpu.memory_space<vmem>>, vector<1x16x16x4xf32>
    %30 = vector.shape_cast %29 : vector<1x16x16x4xf32> to vector<16x16x4xf32>
    %31 = vector.shape_cast %30 : vector<16x16x4xf32> to vector<256x4xf32>
    %c1_42 = arith.constant 1 : index
    %c0_43 = arith.constant 0 : index
    %c0_44 = arith.constant 0 : index
    %c0_45 = arith.constant 0 : index
    %32 = vector.load %arg2[%c1_42, %c0_43, %c0_44, %c0_45] : memref<3x3x4x8xf32, #tpu.memory_space<vmem>>, vector<1x1x4x8xf32>
    %33 = vector.shape_cast %32 : vector<1x1x4x8xf32> to vector<4x8xf32>
    %c0_46 = arith.constant 0 : index
    %c0_47 = arith.constant 0 : index
    %34 = vector.load %arg4[%c0_46, %c0_47] : memref<256x8xf32, #tpu.memory_space<vmem>>, vector<256x8xf32>
    %cst_48 = arith.constant dense<0.000000e+00> : vector<256x8xf32>
    %35 = tpu.matmul %31, %33, %cst_48 {dimension_numbers = #tpu.dot_dimension_numbers<[1], [0], [0], [1], [0, 0, 1, 1], [], []>} : vector<256x4xf32>, vector<4x8xf32>, vector<256x8xf32> -> vector<256x8xf32>
    %36 = arith.addf %34, %35 : vector<256x8xf32>
    %c0_49 = arith.constant 0 : index
    %c0_50 = arith.constant 0 : index
    %37 = vector.load %arg4[%c0_49, %c0_50] : memref<256x8xf32, #tpu.memory_space<vmem>>, vector<256x8xf32>
    tpu.vector_store %arg4[%c0_49, %c0_50], %36 {strides = array<i32>} : memref<256x8xf32, #tpu.memory_space<vmem>>, vector<256x8xf32>,
    %c0_51 = arith.constant 0 : index
    %c1_52 = arith.constant 1 : index
    %c1_53 = arith.constant 1 : index
    %c0_54 = arith.constant 0 : index
    %38 = vector.load %arg1[%c0_51, %c1_52, %c1_53, %c0_54] : memref<1x18x18x4xf32, #tpu.memory_space<vmem>>, vector<1x16x16x4xf32>
    %39 = vector.shape_cast %38 : vector<1x16x16x4xf32> to vector<16x16x4xf32>
    %40 = vector.shape_cast %39 : vector<16x16x4xf32> to vector<256x4xf32>
    %c1_55 = arith.constant 1 : index
    %c1_56 = arith.constant 1 : index
    %c0_57 = arith.constant 0 : index
    %c0_58 = arith.constant 0 : index
    %41 = vector.load %arg2[%c1_55, %c1_56, %c0_57, %c0_58] : memref<3x3x4x8xf32, #tpu.memory_space<vmem>>, vector<1x1x4x8xf32>
    %42 = vector.shape_cast %41 : vector<1x1x4x8xf32> to vector<4x8xf32>
    %c0_59 = arith.constant 0 : index
    %c0_60 = arith.constant 0 : index
    %43 = vector.load %arg4[%c0_59, %c0_60] : memref<256x8xf32, #tpu.memory_space<vmem>>, vector<256x8xf32>
    %cst_61 = arith.constant dense<0.000000e+00> : vector<256x8xf32>
    %44 = tpu.matmul %40, %42, %cst_61 {dimension_numbers = #tpu.dot_dimension_numbers<[1], [0], [0], [1], [0, 0, 1, 1], [], []>} : vector<256x4xf32>, vector<4x8xf32>, vector<256x8xf32> -> vector<256x8xf32>
    %45 = arith.addf %43, %44 : vector<256x8xf32>
    %c0_62 = arith.constant 0 : index
    %c0_63 = arith.constant 0 : index
    %46 = vector.load %arg4[%c0_62, %c0_63] : memref<256x8xf32, #tpu.memory_space<vmem>>, vector<256x8xf32>
    tpu.vector_store %arg4[%c0_62, %c0_63], %45 {strides = array<i32>} : memref<256x8xf32, #tpu.memory_space<vmem>>, vector<256x8xf32>,
    %c0_64 = arith.constant 0 : index
    %c1_65 = arith.constant 1 : index
    %c2_66 = arith.constant 2 : index
    %c0_67 = arith.constant 0 : index
    %47 = vector.load %arg1[%c0_64, %c1_65, %c2_66, %c0_67] : memref<1x18x18x4xf32, #tpu.memory_space<vmem>>, vector<1x16x16x4xf32>
    %48 = vector.shape_cast %47 : vector<1x16x16x4xf32> to vector<16x16x4xf32>
    %49 = vector.shape_cast %48 : vector<16x16x4xf32> to vector<256x4xf32>
    %c1_68 = arith.constant 1 : index
    %c2_69 = arith.constant 2 : index
    %c0_70 = arith.constant 0 : index
    %c0_71 = arith.constant 0 : index
    %50 = vector.load %arg2[%c1_68, %c2_69, %c0_70, %c0_71] : memref<3x3x4x8xf32, #tpu.memory_space<vmem>>, vector<1x1x4x8xf32>
    %51 = vector.shape_cast %50 : vector<1x1x4x8xf32> to vector<4x8xf32>
    %c0_72 = arith.constant 0 : index
    %c0_73 = arith.constant 0 : index
    %52 = vector.load %arg4[%c0_72, %c0_73] : memref<256x8xf32, #tpu.memory_space<vmem>>, vector<256x8xf32>
    %cst_74 = arith.constant dense<0.000000e+00> : vector<256x8xf32>
    %53 = tpu.matmul %49, %51, %cst_74 {dimension_numbers = #tpu.dot_dimension_numbers<[1], [0], [0], [1], [0, 0, 1, 1], [], []>} : vector<256x4xf32>, vector<4x8xf32>, vector<256x8xf32> -> vector<256x8xf32>
    %54 = arith.addf %52, %53 : vector<256x8xf32>
    %c0_75 = arith.constant 0 : index
    %c0_76 = arith.constant 0 : index
    %55 = vector.load %arg4[%c0_75, %c0_76] : memref<256x8xf32, #tpu.memory_space<vmem>>, vector<256x8xf32>
    tpu.vector_store %arg4[%c0_75, %c0_76], %54 {strides = array<i32>} : memref<256x8xf32, #tpu.memory_space<vmem>>, vector<256x8xf32>,
    %c0_77 = arith.constant 0 : index
    %c2_78 = arith.constant 2 : index
    %c0_79 = arith.constant 0 : index
    %c0_80 = arith.constant 0 : index
    %56 = vector.load %arg1[%c0_77, %c2_78, %c0_79, %c0_80] : memref<1x18x18x4xf32, #tpu.memory_space<vmem>>, vector<1x16x16x4xf32>
    %57 = vector.shape_cast %56 : vector<1x16x16x4xf32> to vector<16x16x4xf32>
    %58 = vector.shape_cast %57 : vector<16x16x4xf32> to vector<256x4xf32>
    %c2_81 = arith.constant 2 : index
    %c0_82 = arith.constant 0 : index
    %c0_83 = arith.constant 0 : index
    %c0_84 = arith.constant 0 : index
    %59 = vector.load %arg2[%c2_81, %c0_82, %c0_83, %c0_84] : memref<3x3x4x8xf32, #tpu.memory_space<vmem>>, vector<1x1x4x8xf32>
    %60 = vector.shape_cast %59 : vector<1x1x4x8xf32> to vector<4x8xf32>
    %c0_85 = arith.constant 0 : index
    %c0_86 = arith.constant 0 : index
    %61 = vector.load %arg4[%c0_85, %c0_86] : memref<256x8xf32, #tpu.memory_space<vmem>>, vector<256x8xf32>
    %cst_87 = arith.constant dense<0.000000e+00> : vector<256x8xf32>
    %62 = tpu.matmul %58, %60, %cst_87 {dimension_numbers = #tpu.dot_dimension_numbers<[1], [0], [0], [1], [0, 0, 1, 1], [], []>} : vector<256x4xf32>, vector<4x8xf32>, vector<256x8xf32> -> vector<256x8xf32>
    %63 = arith.addf %61, %62 : vector<256x8xf32>
    %c0_88 = arith.constant 0 : index
    %c0_89 = arith.constant 0 : index
    %64 = vector.load %arg4[%c0_88, %c0_89] : memref<256x8xf32, #tpu.memory_space<vmem>>, vector<256x8xf32>
    tpu.vector_store %arg4[%c0_88, %c0_89], %63 {strides = array<i32>} : memref<256x8xf32, #tpu.memory_space<vmem>>, vector<256x8xf32>,
    %c0_90 = arith.constant 0 : index
    %c2_91 = arith.constant 2 : index
    %c1_92 = arith.constant 1 : index
    %c0_93 = arith.constant 0 : index
    %65 = vector.load %arg1[%c0_90, %c2_91, %c1_92, %c0_93] : memref<1x18x18x4xf32, #tpu.memory_space<vmem>>, vector<1x16x16x4xf32>
    %66 = vector.shape_cast %65 : vector<1x16x16x4xf32> to vector<16x16x4xf32>
    %67 = vector.shape_cast %66 : vector<16x16x4xf32> to vector<256x4xf32>
    %c2_94 = arith.constant 2 : index
    %c1_95 = arith.constant 1 : index
    %c0_96 = arith.constant 0 : index
    %c0_97 = arith.constant 0 : index
    %68 = vector.load %arg2[%c2_94, %c1_95, %c0_96, %c0_97] : memref<3x3x4x8xf32, #tpu.memory_space<vmem>>, vector<1x1x4x8xf32>
    %69 = vector.shape_cast %68 : vector<1x1x4x8xf32> to vector<4x8xf32>
    %c0_98 = arith.constant 0 : index
    %c0_99 = arith.constant 0 : index
    %70 = vector.load %arg4[%c0_98, %c0_99] : memref<256x8xf32, #tpu.memory_space<vmem>>, vector<256x8xf32>
    %cst_100 = arith.constant dense<0.000000e+00> : vector<256x8xf32>
    %71 = tpu.matmul %67, %69, %cst_100 {dimension_numbers = #tpu.dot_dimension_numbers<[1], [0], [0], [1], [0, 0, 1, 1], [], []>} : vector<256x4xf32>, vector<4x8xf32>, vector<256x8xf32> -> vector<256x8xf32>
    %72 = arith.addf %70, %71 : vector<256x8xf32>
    %c0_101 = arith.constant 0 : index
    %c0_102 = arith.constant 0 : index
    %73 = vector.load %arg4[%c0_101, %c0_102] : memref<256x8xf32, #tpu.memory_space<vmem>>, vector<256x8xf32>
    tpu.vector_store %arg4[%c0_101, %c0_102], %72 {strides = array<i32>} : memref<256x8xf32, #tpu.memory_space<vmem>>, vector<256x8xf32>,
    %c0_103 = arith.constant 0 : index
    %c2_104 = arith.constant 2 : index
    %c2_105 = arith.constant 2 : index
    %c0_106 = arith.constant 0 : index
    %74 = vector.load %arg1[%c0_103, %c2_104, %c2_105, %c0_106] : memref<1x18x18x4xf32, #tpu.memory_space<vmem>>, vector<1x16x16x4xf32>
    %75 = vector.shape_cast %74 : vector<1x16x16x4xf32> to vector<16x16x4xf32>
    %76 = vector.shape_cast %75 : vector<16x16x4xf32> to vector<256x4xf32>
    %c2_107 = arith.constant 2 : index
    %c2_108 = arith.constant 2 : index
    %c0_109 = arith.constant 0 : index
    %c0_110 = arith.constant 0 : index
    %77 = vector.load %arg2[%c2_107, %c2_108, %c0_109, %c0_110] : memref<3x3x4x8xf32, #tpu.memory_space<vmem>>, vector<1x1x4x8xf32>
    %78 = vector.shape_cast %77 : vector<1x1x4x8xf32> to vector<4x8xf32>
    %c0_111 = arith.constant 0 : index
    %c0_112 = arith.constant 0 : index
    %79 = vector.load %arg4[%c0_111, %c0_112] : memref<256x8xf32, #tpu.memory_space<vmem>>, vector<256x8xf32>
    %cst_113 = arith.constant dense<0.000000e+00> : vector<256x8xf32>
    %80 = tpu.matmul %76, %78, %cst_113 {dimension_numbers = #tpu.dot_dimension_numbers<[1], [0], [0], [1], [0, 0, 1, 1], [], []>} : vector<256x4xf32>, vector<4x8xf32>, vector<256x8xf32> -> vector<256x8xf32>
    %81 = arith.addf %79, %80 : vector<256x8xf32>
    %c0_114 = arith.constant 0 : index
    %c0_115 = arith.constant 0 : index
    %82 = vector.load %arg4[%c0_114, %c0_115] : memref<256x8xf32, #tpu.memory_space<vmem>>, vector<256x8xf32>
    tpu.vector_store %arg4[%c0_114, %c0_115], %81 {strides = array<i32>} : memref<256x8xf32, #tpu.memory_space<vmem>>, vector<256x8xf32>,
    %c0_116 = arith.constant 0 : index
    %c0_117 = arith.constant 0 : index
    %83 = vector.load %arg4[%c0_116, %c0_117] : memref<256x8xf32, #tpu.memory_space<vmem>>, vector<256x8xf32>
    %84 = vector.shape_cast %83 : vector<256x8xf32> to vector<16x16x8xf32>
    %c0_118 = arith.constant 0 : index
    %c0_119 = arith.constant 0 : index
    %c0_120 = arith.constant 0 : index
    %c0_121 = arith.constant 0 : index
    %85 = vector.load %arg3[%c0_118, %c0_119, %c0_120, %c0_121] : memref<1x16x16x8xf32, #tpu.memory_space<vmem>>, vector<1x16x16x8xf32>
    %86 = vector.shape_cast %85 : vector<1x16x16x8xf32> to vector<16x16x8xf32>
    %87 = vector.shape_cast %84 : vector<16x16x8xf32> to vector<1x16x16x8xf32>
    tpu.vector_store %arg3[%c0_118, %c0_119, %c0_120, %c0_121], %87 {strides = array<i32>} : memref<1x16x16x8xf32, #tpu.memory_space<vmem>>, vector<1x16x16x8xf32>,
    return
  }
  func.func @transform_0(%arg0: i32) -> (i32, i32, i32, i32) {
    %c0_i32 = arith.constant 0 : i32
    %c0_i32_0 = arith.constant 0 : i32
    %c0_i32_1 = arith.constant 0 : i32
    %c0_i32_2 = arith.constant 0 : i32
    return %arg0, %c0_i32, %c0_i32_0, %c0_i32_1 : i32, i32, i32, i32
  }
  func.func @transform_1(%arg0: i32) -> (i32, i32, i32, i32) {
    %c0_i32 = arith.constant 0 : i32
    %c0_i32_0 = arith.constant 0 : i32
    %c0_i32_1 = arith.constant 0 : i32
    %c0_i32_2 = arith.constant 0 : i32
    %c0_i32_3 = arith.constant 0 : i32
    return %c0_i32, %c0_i32_0, %c0_i32_1, %c0_i32_2 : i32, i32, i32, i32
  }
  func.func @transform_2(%arg0: i32) -> (i32, i32, i32, i32) {
    %c0_i32 = arith.constant 0 : i32
    %c0_i32_0 = arith.constant 0 : i32
    %c0_i32_1 = arith.constant 0 : i32
    %c0_i32_2 = arith.constant 0 : i32
    return %arg0, %c0_i32, %c0_i32_0, %c0_i32_1 : i32, i32, i32, i32
  }
}

</mosaic_0001>

<llo_original>
// kernel: tpu_custom_call.1
$region0: #{tpu_custom_call.1}
  #allocation0 [shape = 'u32[]', space=smem, size = 0x4, offset = 0x4, fixed_abs, tag = 'smem constant byte address 0x4 - core index']
  #allocation1 [shape = 'u32[144,128]{1,0:T(1,128)}', space=vmem, size = 0x12000, scoped, tag = 'internal scratch']
  #allocation2 [shape = 'f32[256,8]{1,0:T(8,128)}', space=vmem, size = 0x20000, scoped, tag = 'scratch operand']
  %s0 = inlined_call_operand.vmem [shape: f32[2,18,18,4], index: 0, kind: input, shape index: {}]
  %s1 = inlined_call_operand.vmem [shape: f32[3,3,4,8], index: 1, kind: input, shape index: {}]
  %s2 = inlined_call_operand.vmem [shape: f32[2,16,16,8], index: 2, kind: output, shape index: {}]
  %s3 = sld [smem:[#allocation0]]
  $region41: #{tpu_custom_call.1} parent=0
    _
  %s5 = ssub.s32 1, %s3
  %s6 = scalar_select 0, %s5, %s3
  loop: start=0, step=1, limit=4
  $region2: #{tpu_custom_call.1} parent=0 // loop_pre_header
    _
  $region3: #{tpu_custom_call.1} parent=0 // loop_header
    %s8 = sphi 0, %s12
    %p9 = scmp.ge.s32.totalorder %s8, 4
    %s18 = sphi 0, %s20
    %s21 = sphi 0, %s18
    %s22 = sphi 0, %s21
    %s38 = sphi 0, %s22
    %s42 = sphi 0, %s42
    %s44 = sphi 0, %s42
    %s45 = sphi 0, %s44
    %s59 = sphi 0, %s45
    %s65 = sphi 0, %s67
    %s68 = sphi 0, %s65
    %s69 = sphi 0, %s68
    %s85 = sphi 0, %s69
  $region4: #{tpu_custom_call.1} parent=0 // loop_header_branch
    %11 = sbr.rel (%p9) target = $region8
  $region5: #{tpu_custom_call.1} parent=0 // loop_body
    %s13 = ssub.s32 %s8, 1
    %s14 = ssub.s32 %s8, 2
    %s15 = sadd.s32 %s8, 1
    %s16 = ssub.s32 %s8, %s15
    %p17 = scmp.eq.s32.totalorder %s16, 0
    %s19 = sadd.s32 %s18, 1
    %s20 = scalar_select %p17, %s18, %s19
    %p23 = pneg %p17
    %p24 = scmp.eq.s32.totalorder %s8, 1
    %p25 = por %p23, %p24
    %p26 = scmp.ne.s32.totalorder %s18, %s21
    %p27 = scmp.eq.s32.totalorder %s8, 0
    %p28 = por %p26, %p27
    %p29 = scmp.ne.s32.totalorder %s18, %s21
    %p30 = scmp.eq.s32.totalorder %s13, 1
    %p31 = por %p29, %p30
    %p32 = scmp.ne.s32.totalorder %s21, %s22
    %p33 = scmp.eq.s32.totalorder %s13, 0
    %p34 = por %p32, %p33
    %p35 = scmp.ne.s32.totalorder %s21, %s22
    %p36 = scmp.eq.s32.totalorder %s14, 1
    %p37 = por %p35, %p36
    %p39 = scmp.ne.s32.totalorder %s22, %s38
    %p40 = scmp.eq.s32.totalorder %s14, 0
    %p41 = por %p39, %p40
    %s43 = sadd.s32 %s42, 1
    %p46 = scmp.eq.s32.totalorder %s8, 1
    %p47 = scmp.ne.s32.totalorder %s42, %s44
    %p48 = scmp.eq.s32.totalorder %s8, 0
    %p49 = por %p47, %p48
    %p50 = scmp.ne.s32.totalorder %s42, %s44
    %p51 = scmp.eq.s32.totalorder %s13, 1
    %p52 = por %p50, %p51
    %p53 = scmp.ne.s32.totalorder %s44, %s45
    %p54 = scmp.eq.s32.totalorder %s13, 0
    %p55 = por %p53, %p54
    %p56 = scmp.ne.s32.totalorder %s44, %s45
    %p57 = scmp.eq.s32.totalorder %s14, 1
    %p58 = por %p56, %p57
    %p60 = scmp.ne.s32.totalorder %s45, %s59
    %p61 = scmp.eq.s32.totalorder %s14, 0
    %p62 = por %p60, %p61
    %s63 = ssub.s32 %s8, %s15
    %p64 = scmp.eq.s32.totalorder %s63, 0
    %s66 = sadd.s32 %s65, 1
    %s67 = scalar_select %p64, %s65, %s66
    %p70 = pneg %p64
    %p71 = scmp.eq.s32.totalorder %s8, 1
    %p72 = por %p70, %p71
    %p73 = scmp.ne.s32.totalorder %s65, %s68
    %p74 = scmp.eq.s32.totalorder %s8, 0
    %p75 = por %p73, %p74
    %p76 = scmp.ne.s32.totalorder %s65, %s68
    %p77 = scmp.eq.s32.totalorder %s13, 1
    %p78 = por %p76, %p77
    %p79 = scmp.ne.s32.totalorder %s68, %s69
    %p80 = scmp.eq.s32.totalorder %s13, 0
    %p81 = por %p79, %p80
    %p82 = scmp.ne.s32.totalorder %s68, %s69
    %p83 = scmp.eq.s32.totalorder %s14, 1
    %p84 = por %p82, %p83
    %p86 = scmp.ne.s32.totalorder %s69, %s85
    %p87 = scmp.eq.s32.totalorder %s14, 0
    %p88 = por %p86, %p87
    %p89 = scmp.le.s32.totalorder 1, %s8
    %p90 = scmp.lt.s32.totalorder %s8, 3
    %p91 = pnand %p89, %p90
    %p92 = pneg %p91
    // Predicated region
    $region9: #{tpu_custom_call.1} parent=5 // pred_check
      _
    $region10: #{tpu_custom_call.1} parent=5 // pred_check_branch
      %94 = sbr.rel (%p91) target = $region12
    $region11: #{tpu_custom_call.1} parent=5 // pred_region
      %s95 = ssub.s32 %s8, 1
      // Predicated region
      $region13: #{tpu_custom_call.1} parent=11 // pred_check
        %p96 = pneg %p55
      $region14: #{tpu_custom_call.1} parent=11 // pred_check_branch
        %98 = sbr.rel (%p96) target = $region16
      $region15: #{tpu_custom_call.1} parent=11 // pred_region
        _
      $region16: #{tpu_custom_call.1} parent=11 // pred_fallthru
        _
    $region12: #{tpu_custom_call.1} parent=5 // pred_fallthru
      _
    %p99 = scmp.lt.s32.totalorder %s8, 2
    // Predicated region
    $region17: #{tpu_custom_call.1} parent=5 // pred_check
      %p100 = pneg %p99
    $region18: #{tpu_custom_call.1} parent=5 // pred_check_branch
      %102 = sbr.rel (%p100) target = $region20
    $region19: #{tpu_custom_call.1} parent=5 // pred_region
      // Predicated region
      $region21: #{tpu_custom_call.1} parent=19 // pred_check
        %p103 = pneg %p28
      $region22: #{tpu_custom_call.1} parent=19 // pred_check_branch
        %105 = sbr.rel (%p103) target = $region24
      $region23: #{tpu_custom_call.1} parent=19 // pred_region
        %p106 = scmp.lt.s32.totalorder %s8, 1
        %s107 = scalar_select %p106, %s8, 1
        %s108 = smul.addr %s107, 54
        %s109 = smul.addr %s108, 8
        %s110 = scalar_lea.vmem %s0, %s109
      $region24: #{tpu_custom_call.1} parent=19 // pred_fallthru
        _
    $region20: #{tpu_custom_call.1} parent=5 // pred_fallthru
      _
    %p111 = scmp.le.s32.totalorder 1, %s8
    %p112 = scmp.lt.s32.totalorder %s8, 3
    %p113 = pnand %p111, %p112
    %p114 = pneg %p113
    // Predicated region
    $region25: #{tpu_custom_call.1} parent=5 // pred_check
      _
    $region26: #{tpu_custom_call.1} parent=5 // pred_check_branch
      %116 = sbr.rel (%p113) target = $region28
    $region27: #{tpu_custom_call.1} parent=5 // pred_region
      %s117 = ssub.s32 %s8, 1
      %p118 = scmp.lt.s32.totalorder %s13, 1
      %s119 = scalar_select %p118, %s13, 1
      %s120 = smul.addr %s119, 54
      %s121 = smul.addr %s120, 8
      %s122 = scalar_lea.vmem %s0, %s121
      %p123 = pneg %p34
      %p124 = pneg %p31
      %p125 = pneg %p55
      %p126 = pneg %p52
      %p127 = pneg %p81
      %p128 = pneg %p78
      %p129 = scmp.lt.s32.totalorder %s13, 1
      %s130 = scalar_select %p129, %s13, 1
      %s131 = smul.addr %s130, 32
      %s132 = smul.addr %s131, 8
      %s133 = scalar_lea.vmem %s2, %s132
      %p134 = scmp.lt.s32.totalorder %s13, 1
      %s135 = scalar_select %p134, %s13, 1
      %s136 = smul.addr %s135, 54
      %s137 = smul.addr %s136, 8
      %s138 = scalar_lea.vmem %s0, %s137
      %p139 = scmp.lt.s32.totalorder %s13, 1
      %s140 = scalar_select %p139, %s13, 1
      %s141 = smul.addr %s140, 32
      %s142 = smul.addr %s141, 8
      %s143 = scalar_lea.vmem %s2, %s142
      %vm144 = vcmask 64512
      %145 = vst.msk [vmem:[#allocation2] sm:$0xff] %vm144, 0.0
      %146 = vst.msk [vmem:[#allocation2 + $0x8] sm:$0xff] %vm144, 0.0
      %147 = vst.msk [vmem:[#allocation2 + $0x10] sm:$0xff] %vm144, 0.0
      %148 = vst.msk [vmem:[#allocation2 + $0x18] sm:$0xff] %vm144, 0.0
      %149 = vst.msk [vmem:[#allocation2 + $0x20] sm:$0xff] %vm144, 0.0
      %150 = vst.msk [vmem:[#allocation2 + $0x28] sm:$0xff] %vm144, 0.0
      %151 = vst.msk [vmem:[#allocation2 + $0x30] sm:$0xff] %vm144, 0.0
      %152 = vst.msk [vmem:[#allocation2 + $0x38] sm:$0xff] %vm144, 0.0
      %153 = vst.msk [vmem:[#allocation2 + $0x40] sm:$0xff] %vm144, 0.0
      %154 = vst.msk [vmem:[#allocation2 + $0x48] sm:$0xff] %vm144, 0.0
      %155 = vst.msk [vmem:[#allocation2 + $0x50] sm:$0xff] %vm144, 0.0
      %156 = vst.msk [vmem:[#allocation2 + $0x58] sm:$0xff] %vm144, 0.0
      %157 = vst.msk [vmem:[#allocation2 + $0x60] sm:$0xff] %vm144, 0.0
      %158 = vst.msk [vmem:[#allocation2 + $0x68] sm:$0xff] %vm144, 0.0
      %159 = vst.msk [vmem:[#allocation2 + $0x70] sm:$0xff] %vm144, 0.0
      %160 = vst.msk [vmem:[#allocation2 + $0x78] sm:$0xff] %vm144, 0.0
      %161 = vst.msk [vmem:[#allocation2 + $0x80] sm:$0xff] %vm144, 0.0
      %162 = vst.msk [vmem:[#allocation2 + $0x88] sm:$0xff] %vm144, 0.0
      %163 = vst.msk [vmem:[#allocation2 + $0x90] sm:$0xff] %vm144, 0.0
      %164 = vst.msk [vmem:[#allocation2 + $0x98] sm:$0xff] %vm144, 0.0
      %165 = vst.msk [vmem:[#allocation2 + $0xa0] sm:$0xff] %vm144, 0.0
      %166 = vst.msk [vmem:[#allocation2 + $0xa8] sm:$0xff] %vm144, 0.0
      %167 = vst.msk [vmem:[#allocation2 + $0xb0] sm:$0xff] %vm144, 0.0
      %168 = vst.msk [vmem:[#allocation2 + $0xb8] sm:$0xff] %vm144, 0.0
      %169 = vst.msk [vmem:[#allocation2 + $0xc0] sm:$0xff] %vm144, 0.0
      %170 = vst.msk [vmem:[#allocation2 + $0xc8] sm:$0xff] %vm144, 0.0
      %171 = vst.msk [vmem:[#allocation2 + $0xd0] sm:$0xff] %vm144, 0.0
      %172 = vst.msk [vmem:[#allocation2 + $0xd8] sm:$0xff] %vm144, 0.0
      %173 = vst.msk [vmem:[#allocation2 + $0xe0] sm:$0xff] %vm144, 0.0
      %174 = vst.msk [vmem:[#allocation2 + $0xe8] sm:$0xff] %vm144, 0.0
      %175 = vst.msk [vmem:[#allocation2 + $0xf0] sm:$0xff] %vm144, 0.0
      %176 = vst.msk [vmem:[#allocation2 + $0xf8] sm:$0xff] %vm144, 0.0
      %v177 = vld [vmem:[%s138] sm:$0xff]
      %v178 = vld [vmem:[%s138 + $0x8] sm:$0xff]
      %v179 = vld [vmem:[%s138 + $0x18] sm:$0xff]
      %v180 = vld [vmem:[%s138 + $0x20] sm:$0xff]
      %v181 = vld [vmem:[%s138 + $0x30] sm:$0xff]
      %v182 = vld [vmem:[%s138 + $0x38] sm:$0xff]
      %v183 = vld [vmem:[%s138 + $0x48] sm:$0xff]
      %v184 = vld [vmem:[%s138 + $0x50] sm:$0xff]
      %v185 = vld [vmem:[%s138 + $0x60] sm:$0xff]
      %v186 = vld [vmem:[%s138 + $0x68] sm:$0xff]
      %v187 = vld [vmem:[%s138 + $0x78] sm:$0xff]
      %v188 = vld [vmem:[%s138 + $0x80] sm:$0xff]
      %v189 = vld [vmem:[%s138 + $0x90] sm:$0xff]
      %v190 = vld [vmem:[%s138 + $0x98] sm:$0xff]
      %v191 = vld [vmem:[%s138 + $0xa8] sm:$0xff]
      %v192 = vld [vmem:[%s138 + $0xb0] sm:$0xff]
      %v193 = vld [vmem:[%s138 + $0xc0] sm:$0xff]
      %v194 = vld [vmem:[%s138 + $0xc8] sm:$0xff]
      %v195 = vld [vmem:[%s138 + $0xd8] sm:$0xff]
      %v196 = vld [vmem:[%s138 + $0xe0] sm:$0xff]
      %v197 = vld [vmem:[%s138 + $0xf0] sm:$0xff]
      %v198 = vld [vmem:[%s138 + $0xf8] sm:$0xff]
      %v199 = vld [vmem:[%s138 + $0x108] sm:$0xff]
      %v200 = vld [vmem:[%s138 + $0x110] sm:$0xff]
      %v201 = vld [vmem:[%s138 + $0x120] sm:$0xff]
      %v202 = vld [vmem:[%s138 + $0x128] sm:$0xff]
      %v203 = vld [vmem:[%s138 + $0x138] sm:$0xff]
      %v204 = vld [vmem:[%s138 + $0x140] sm:$0xff]
      %v205 = vld [vmem:[%s138 + $0x150] sm:$0xff]
      %v206 = vld [vmem:[%s138 + $0x158] sm:$0xff]
      %v207 = vld [vmem:[%s138 + $0x168] sm:$0xff]
      %v208 = vld [vmem:[%s138 + $0x170] sm:$0xff]
      %v209 = vld [vmem:[%s1] sm:$0xf]
      %v210 = vld [vmem:[#allocation2] sm:$0xff]
      %v211 = vld [vmem:[#allocation2 + $0x8] sm:$0xff]
      %v212 = vld [vmem:[#allocation2 + $0x10] sm:$0xff]
      %v213 = vld [vmem:[#allocation2 + $0x18] sm:$0xff]
      %v214 = vld [vmem:[#allocation2 + $0x20] sm:$0xff]
      %v215 = vld [vmem:[#allocation2 + $0x28] sm:$0xff]
      %v216 = vld [vmem:[#allocation2 + $0x30] sm:$0xff]
      %v217 = vld [vmem:[#allocation2 + $0x38] sm:$0xff]
      %v218 = vld [vmem:[#allocation2 + $0x40] sm:$0xff]
      %v219 = vld [vmem:[#allocation2 + $0x48] sm:$0xff]
      %v220 = vld [vmem:[#allocation2 + $0x50] sm:$0xff]
      %v221 = vld [vmem:[#allocation2 + $0x58] sm:$0xff]
      %v222 = vld [vmem:[#allocation2 + $0x60] sm:$0xff]
      %v223 = vld [vmem:[#allocation2 + $0x68] sm:$0xff]
      %v224 = vld [vmem:[#allocation2 + $0x70] sm:$0xff]
      %v225 = vld [vmem:[#allocation2 + $0x78] sm:$0xff]
      %v226 = vld [vmem:[#allocation2 + $0x80] sm:$0xff]
      %v227 = vld [vmem:[#allocation2 + $0x88] sm:$0xff]
      %v228 = vld [vmem:[#allocation2 + $0x90] sm:$0xff]
      %v229 = vld [vmem:[#allocation2 + $0x98] sm:$0xff]
      %v230 = vld [vmem:[#allocation2 + $0xa0] sm:$0xff]
      %v231 = vld [vmem:[#allocation2 + $0xa8] sm:$0xff]
      %v232 = vld [vmem:[#allocation2 + $0xb0] sm:$0xff]
      %v233 = vld [vmem:[#allocation2 + $0xb8] sm:$0xff]
      %v234 = vld [vmem:[#allocation2 + $0xc0] sm:$0xff]
      %v235 = vld [vmem:[#allocation2 + $0xc8] sm:$0xff]
      %v236 = vld [vmem:[#allocation2 + $0xd0] sm:$0xff]
      %v237 = vld [vmem:[#allocation2 + $0xd8] sm:$0xff]
      %v238 = vld [vmem:[#allocation2 + $0xe0] sm:$0xff]
      %v239 = vld [vmem:[#allocation2 + $0xe8] sm:$0xff]
      %v240 = vld [vmem:[#allocation2 + $0xf0] sm:$0xff]
      %v241 = vld [vmem:[#allocation2 + $0xf8] sm:$0xff]
      %vm242 = vcmask 31744
      %v244 = vsel %vm242, %v177, 0
      %v247 = vsel %vm242, %v178, 0
      %v250 = vsel %vm242, %v179, 0
      %v253 = vsel %vm242, %v180, 0
      %v256 = vsel %vm242, %v181, 0
      %v259 = vsel %vm242, %v182, 0
      %v262 = vsel %vm242, %v183, 0
      %v265 = vsel %vm242, %v184, 0
      %v268 = vsel %vm242, %v185, 0
      %v271 = vsel %vm242, %v186, 0
      %v274 = vsel %vm242, %v187, 0
      %v277 = vsel %vm242, %v188, 0
      %v280 = vsel %vm242, %v189, 0
      %v283 = vsel %vm242, %v190, 0
      %v286 = vsel %vm242, %v191, 0
      %v289 = vsel %vm242, %v192, 0
      %v292 = vsel %vm242, %v193, 0
      %v295 = vsel %vm242, %v194, 0
      %v298 = vsel %vm242, %v195, 0
      %v301 = vsel %vm242, %v196, 0
      %v304 = vsel %vm242, %v197, 0
      %v307 = vsel %vm242, %v198, 0
      %v310 = vsel %vm242, %v199, 0
      %v313 = vsel %vm242, %v200, 0
      %v316 = vsel %vm242, %v201, 0
      %v319 = vsel %vm242, %v202, 0
      %v322 = vsel %vm242, %v203, 0
      %v325 = vsel %vm242, %v204, 0
      %v328 = vsel %vm242, %v205, 0
      %v331 = vsel %vm242, %v206, 0
      %v334 = vsel %vm242, %v207, 0
      %v337 = vsel %vm242, %v208, 0
      %vm339 = vcmask 1043456
      %v341 = vsel %vm339, %v209, 0
      %343 = vmatprep.subr.mxu0 0.0
      %344 = vmatpush1.msra.mxu0 %v341
      %345 = vmatprep.subr.mxu0 0.0
      %346 = vmatpush1.msra.mxu0 0.0
      %347 = vmatprep.subr.mxu0 0.0
      %348 = vmatpush1.msra.mxu0 0.0
      %349 = vmatprep.subr.mxu0 0.0
      %350 = vmatpush1.msra.mxu0 0.0
      %351 = vmatprep.subr.mxu0 0.0
      %352 = vmatpush1.msra.mxu0 0.0
      %353 = vmatprep.subr.mxu0 0.0
      %354 = vmatpush1.msra.mxu0 0.0
      %355 = vmatprep.subr.mxu0 0.0
      %356 = vmatpush1.msra.mxu0 0.0
      %357 = vmatprep.subr.mxu0 0.0
      %358 = vmatpush1.msra.mxu0 0.0
      %359 = vmatprep.subr.mxu0 0.0
      %360 = vmatpush1.msra.mxu0 0.0
      %361 = vmatprep.subr.mxu0 0.0
      %362 = vmatpush1.msra.mxu0 0.0
      %363 = vmatprep.subr.mxu0 0.0
      %364 = vmatpush1.msra.mxu0 0.0
      %365 = vmatprep.subr.mxu0 0.0
      %366 = vmatpush1.msra.mxu0 0.0
      %367 = vmatprep.subr.mxu0 0.0
      %368 = vmatpush1.msra.mxu0 0.0
      %369 = vmatprep.subr.mxu0 0.0
      %370 = vmatpush1.msra.mxu0 0.0
      %371 = vmatprep.subr.mxu0 0.0
      %372 = vmatpush1.msra.mxu0 0.0
      %373 = vmatprep.subr.mxu0 0.0
      %374 = vmatpush1.msra.mxu0 0.0
      %375 = vmatprep.subr.mxu0 0.0
      %376 = vmatpush1.msra.mxu0 0.0
      %377 = vmatprep.subr.mxu0 0.0
      %378 = vmatpush1.msra.mxu0 0.0
      %379 = vmatprep.subr.mxu0 0.0
      %380 = vmatpush1.msra.mxu0 0.0
      %381 = vmatprep.subr.mxu0 0.0
      %382 = vmatpush1.msra.mxu0 0.0
      %383 = vmatprep.subr.mxu0 0.0
      %384 = vmatpush1.msra.mxu0 0.0
      %385 = vmatprep.subr.mxu0 0.0
      %386 = vmatpush1.msra.mxu0 0.0
      %387 = vmatprep.subr.mxu0 0.0
      %388 = vmatpush1.msra.mxu0 0.0
      %389 = vmatprep.subr.mxu0 0.0
      %390 = vmatpush1.msra.mxu0 0.0
      %391 = vmatprep.subr.mxu0 0.0
      %392 = vmatpush1.msra.mxu0 0.0
      %393 = vmatprep.subr.mxu0 0.0
      %394 = vmatpush1.msra.mxu0 0.0
      %395 = vmatprep.subr.mxu0 0.0
      %396 = vmatpush1.msra.mxu0 0.0
      %397 = vmatprep.subr.mxu0 0.0
      %398 = vmatpush1.msra.mxu0 0.0
      %399 = vmatprep.subr.mxu0 0.0
      %400 = vmatpush1.msra.mxu0 0.0
      %401 = vmatprep.subr.mxu0 0.0
      %402 = vmatpush1.msra.mxu0 0.0
      %403 = vmatprep.subr.mxu0 0.0
      %404 = vmatpush1.msra.mxu0 0.0
      %405 = vmatprep.subr.mxu0 0.0
      %406 = vmatpush1.msra.mxu0 0.0
      %407 = vmatprep.mubr.f32.mxu0 0.0
      %408 = vmatmul.mubr.f32.gmra.mrb[0].mxu0 %v244
      %v409 = vpop.f32.mrb[0].mxu0
      %v410 = vadd.f32 0.0, %v409
      %v411 = vpop.f32.mrb[0].mxu0
      %412 = vmatprep.mubr.f32.mxu0 0.0
      %413 = vmatmul.mubr.f32.gmra.mrb[0].mxu0 %v247
      %v414 = vpop.f32.mrb[0].mxu0
      %v415 = vadd.f32 0.0, %v414
      %v416 = vpop.f32.mrb[0].mxu0
      %417 = vmatprep.mubr.f32.mxu0 0.0
      %418 = vmatmul.mubr.f32.gmra.mrb[0].mxu0 %v250
      %v419 = vpop.f32.mrb[0].mxu0
      %v420 = vadd.f32 0.0, %v419
      %v421 = vpop.f32.mrb[0].mxu0
      %422 = vmatprep.mubr.f32.mxu0 0.0
      %423 = vmatmul.mubr.f32.gmra.mrb[0].mxu0 %v253
      %v424 = vpop.f32.mrb[0].mxu0
      %v425 = vadd.f32 0.0, %v424
      %v426 = vpop.f32.mrb[0].mxu0
      %427 = vmatprep.mubr.f32.mxu0 0.0
      %428 = vmatmul.mubr.f32.gmra.mrb[0].mxu0 %v256
      %v429 = vpop.f32.mrb[0].mxu0
      %v430 = vadd.f32 0.0, %v429
      %v431 = vpop.f32.mrb[0].mxu0
      %432 = vmatprep.mubr.f32.mxu0 0.0
      %433 = vmatmul.mubr.f32.gmra.mrb[0].mxu0 %v259
      %v434 = vpop.f32.mrb[0].mxu0
      %v435 = vadd.f32 0.0, %v434
      %v436 = vpop.f32.mrb[0].mxu0
      %437 = vmatprep.mubr.f32.mxu0 0.0
      %438 = vmatmul.mubr.f32.gmra.mrb[0].mxu0 %v262
      %v439 = vpop.f32.mrb[0].mxu0
      %v440 = vadd.f32 0.0, %v439
      %v441 = vpop.f32.mrb[0].mxu0
      %442 = vmatprep.mubr.f32.mxu0 0.0
      %443 = vmatmul.mubr.f32.gmra.mrb[0].mxu0 %v265
      %v444 = vpop.f32.mrb[0].mxu0
      %v445 = vadd.f32 0.0, %v444
      %v446 = vpop.f32.mrb[0].mxu0
      %447 = vmatprep.mubr.f32.mxu0 0.0
      %448 = vmatmul.mubr.f32.gmra.mrb[0].mxu0 %v268
      %v449 = vpop.f32.mrb[0].mxu0
      %v450 = vadd.f32 0.0, %v449
      %v451 = vpop.f32.mrb[0].mxu0
      %452 = vmatprep.mubr.f32.mxu0 0.0
      %453 = vmatmul.mubr.f32.gmra.mrb[0].mxu0 %v271
      %v454 = vpop.f32.mrb[0].mxu0
      %v455 = vadd.f32 0.0, %v454
      %v456 = vpop.f32.mrb[0].mxu0
      %457 = vmatprep.mubr.f32.mxu0 0.0
      %458 = vmatmul.mubr.f32.gmra.mrb[0].mxu0 %v274
      %v459 = vpop.f32.mrb[0].mxu0
      %v460 = vadd.f32 0.0, %v459
      %v461 = vpop.f32.mrb[0].mxu0
      %462 = vmatprep.mubr.f32.mxu0 0.0
      %463 = vmatmul.mubr.f32.gmra.mrb[0].mxu0 %v277
      %v464 = vpop.f32.mrb[0].mxu0
      %v465 = vadd.f32 0.0, %v464
      %v466 = vpop.f32.mrb[0].mxu0
      %467 = vmatprep.mubr.f32.mxu0 0.0
      %468 = vmatmul.mubr.f32.gmra.mrb[0].mxu0 %v280
      %v469 = vpop.f32.mrb[0].mxu0
      %v470 = vadd.f32 0.0, %v469
      %v471 = vpop.f32.mrb[0].mxu0
      %472 = vmatprep.mubr.f32.mxu0 0.0
      %473 = vmatmul.mubr.f32.gmra.mrb[0].mxu0 %v283
      %v474 = vpop.f32.mrb[0].mxu0
      %v475 = vadd.f32 0.0, %v474
      %v476 = vpop.f32.mrb[0].mxu0
      %477 = vmatprep.mubr.f32.mxu0 0.0
      %478 = vmatmul.mubr.f32.gmra.mrb[0].mxu0 %v286
      %v479 = vpop.f32.mrb[0].mxu0
      %v480 = vadd.f32 0.0, %v479
      %v481 = vpop.f32.mrb[0].mxu0
      %482 = vmatprep.mubr.f32.mxu0 0.0
      %483 = vmatmul.mubr.f32.gmra.mrb[0].mxu0 %v289
      %v484 = vpop.f32.mrb[0].mxu0
      %v485 = vadd.f32 0.0, %v484
      %v486 = vpop.f32.mrb[0].mxu0
      %487 = vmatprep.mubr.f32.mxu0 0.0
      %488 = vmatmul.mubr.f32.gmra.mrb[0].mxu0 %v292
      %v489 = vpop.f32.mrb[0].mxu0
      %v490 = vadd.f32 0.0, %v489
      %v491 = vpop.f32.mrb[0].mxu0
      %492 = vmatprep.mubr.f32.mxu0 0.0
      %493 = vmatmul.mubr.f32.gmra.mrb[0].mxu0 %v295
      %v494 = vpop.f32.mrb[0].mxu0
      %v495 = vadd.f32 0.0, %v494
      %v496 = vpop.f32.mrb[0].mxu0
      %497 = vmatprep.mubr.f32.mxu0 0.0
      %498 = vmatmul.mubr.f32.gmra.mrb[0].mxu0 %v298
      %v499 = vpop.f32.mrb[0].mxu0
      %v500 = vadd.f32 0.0, %v499
      %v501 = vpop.f32.mrb[0].mxu0
      %502 = vmatprep.mubr.f32.mxu0 0.0
      %503 = vmatmul.mubr.f32.gmra.mrb[0].mxu0 %v301
      %v504 = vpop.f32.mrb[0].mxu0
      %v505 = vadd.f32 0.0, %v504
      %v506 = vpop.f32.mrb[0].mxu0
      %507 = vmatprep.mubr.f32.mxu0 0.0
      %508 = vmatmul.mubr.f32.gmra.mrb[0].mxu0 %v304
      %v509 = vpop.f32.mrb[0].mxu0
      %v510 = vadd.f32 0.0, %v509
      %v511 = vpop.f32.mrb[0].mxu0
      %512 = vmatprep.mubr.f32.mxu0 0.0
      %513 = vmatmul.mubr.f32.gmra.mrb[0].mxu0 %v307
      %v514 = vpop.f32.mrb[0].mxu0
      %v515 = vadd.f32 0.0, %v514
      %v516 = vpop.f32.mrb[0].mxu0
      %517 = vmatprep.mubr.f32.mxu0 0.0
      %518 = vmatmul.mubr.f32.gmra.mrb[0].mxu0 %v310
      %v519 = vpop.f32.mrb[0].mxu0
      %v520 = vadd.f32 0.0, %v519
      %v521 = vpop.f32.mrb[0].mxu0
      %522 = vmatprep.mubr.f32.mxu0 0.0
      %523 = vmatmul.mubr.f32.gmra.mrb[0].mxu0 %v313
      %v524 = vpop.f32.mrb[0].mxu0
      %v525 = vadd.f32 0.0, %v524
      %v526 = vpop.f32.mrb[0].mxu0
      %527 = vmatprep.mubr.f32.mxu0 0.0
      %528 = vmatmul.mubr.f32.gmra.mrb[0].mxu0 %v316
      %v529 = vpop.f32.mrb[0].mxu0
      %v530 = vadd.f32 0.0, %v529
      %v531 = vpop.f32.mrb[0].mxu0
      %532 = vmatprep.mubr.f32.mxu0 0.0
      %533 = vmatmul.mubr.f32.gmra.mrb[0].mxu0 %v319
      %v534 = vpop.f32.mrb[0].mxu0
      %v535 = vadd.f32 0.0, %v534
      %v536 = vpop.f32.mrb[0].mxu0
      %537 = vmatprep.mubr.f32.mxu0 0.0
      %538 = vmatmul.mubr.f32.gmra.mrb[0].mxu0 %v322
      %v539 = vpop.f32.mrb[0].mxu0
      %v540 = vadd.f32 0.0, %v539
      %v541 = vpop.f32.mrb[0].mxu0
      %542 = vmatprep.mubr.f32.mxu0 0.0
      %543 = vmatmul.mubr.f32.gmra.mrb[0].mxu0 %v325
      %v544 = vpop.f32.mrb[0].mxu0
      %v545 = vadd.f32 0.0, %v544
      %v546 = vpop.f32.mrb[0].mxu0
      %547 = vmatprep.mubr.f32.mxu0 0.0
      %548 = vmatmul.mubr.f32.gmra.mrb[0].mxu0 %v328
      %v549 = vpop.f32.mrb[0].mxu0
      %v550 = vadd.f32 0.0, %v549
      %v551 = vpop.f32.mrb[0].mxu0
      %552 = vmatprep.mubr.f32.mxu0 0.0
      %553 = vmatmul.mubr.f32.gmra.mrb[0].mxu0 %v331
      %v554 = vpop.f32.mrb[0].mxu0
      %v555 = vadd.f32 0.0, %v554
      %v556 = vpop.f32.mrb[0].mxu0
      %557 = vmatprep.mubr.f32.mxu0 0.0
      %558 = vmatmul.mubr.f32.gmra.mrb[0].mxu0 %v334
      %v559 = vpop.f32.mrb[0].mxu0
      %v560 = vadd.f32 0.0, %v559
      %v561 = vpop.f32.mrb[0].mxu0
      %562 = vmatprep.mubr.f32.mxu0 0.0
      %563 = vmatmul.mubr.f32.gmra.mrb[0].mxu0 %v337
      %v564 = vpop.f32.mrb[0].mxu0
      %v565 = vadd.f32 0.0, %v564
      %v566 = vpop.f32.mrb[0].mxu0
      %567 = vdwg.mxu0
      %v568 = vadd.f32 %v210, %v410
      %v569 = vadd.f32 %v211, %v415
      %v570 = vadd.f32 %v212, %v420
      %v571 = vadd.f32 %v213, %v425
      %v572 = vadd.f32 %v214, %v430
      %v573 = vadd.f32 %v215, %v435
      %v574 = vadd.f32 %v216, %v440
      %v575 = vadd.f32 %v217, %v445
      %v576 = vadd.f32 %v218, %v450
      %v577 = vadd.f32 %v219, %v455
      %v578 = vadd.f32 %v220, %v460
      %v579 = vadd.f32 %v221, %v465
      %v580 = vadd.f32 %v222, %v470
      %v581 = vadd.f32 %v223, %v475
      %v582 = vadd.f32 %v224, %v480
      %v583 = vadd.f32 %v225, %v485
      %v584 = vadd.f32 %v226, %v490
      %v585 = vadd.f32 %v227, %v495
      %v586 = vadd.f32 %v228, %v500
      %v587 = vadd.f32 %v229, %v505
      %v588 = vadd.f32 %v230, %v510
      %v589 = vadd.f32 %v231, %v515
      %v590 = vadd.f32 %v232, %v520
      %v591 = vadd.f32 %v233, %v525
      %v592 = vadd.f32 %v234, %v530
      %v593 = vadd.f32 %v235, %v535
      %v594 = vadd.f32 %v236, %v540
      %v595 = vadd.f32 %v237, %v545
      %v596 = vadd.f32 %v238, %v550
      %v597 = vadd.f32 %v239, %v555
      %v598 = vadd.f32 %v240, %v560
      %v599 = vadd.f32 %v241, %v565
      %600 = vst.msk [vmem:[#allocation2] sm:$0xff] %vm144, %v568
      %601 = vst.msk [vmem:[#allocation2 + $0x8] sm:$0xff] %vm144, %v569
      %602 = vst.msk [vmem:[#allocation2 + $0x10] sm:$0xff] %vm144, %v570
      %603 = vst.msk [vmem:[#allocation2 + $0x18] sm:$0xff] %vm144, %v571
      %604 = vst.msk [vmem:[#allocation2 + $0x20] sm:$0xff] %vm144, %v572
      %605 = vst.msk [vmem:[#allocation2 + $0x28] sm:$0xff] %vm144, %v573
      %606 = vst.msk [vmem:[#allocation2 + $0x30] sm:$0xff] %vm144, %v574
      %607 = vst.msk [vmem:[#allocation2 + $0x38] sm:$0xff] %vm144, %v575
      %608 = vst.msk [vmem:[#allocation2 + $0x40] sm:$0xff] %vm144, %v576
      %609 = vst.msk [vmem:[#allocation2 + $0x48] sm:$0xff] %vm144, %v577
      %610 = vst.msk [vmem:[#allocation2 + $0x50] sm:$0xff] %vm144, %v578
      %611 = vst.msk [vmem:[#allocation2 + $0x58] sm:$0xff] %vm144, %v579
      %612 = vst.msk [vmem:[#allocation2 + $0x60] sm:$0xff] %vm144, %v580
      %613 = vst.msk [vmem:[#allocation2 + $0x68] sm:$0xff] %vm144, %v581
      %614 = vst.msk [vmem:[#allocation2 + $0x70] sm:$0xff] %vm144, %v582
      %615 = vst.msk [vmem:[#allocation2 + $0x78] sm:$0xff] %vm144, %v583
      %616 = vst.msk [vmem:[#allocation2 + $0x80] sm:$0xff] %vm144, %v584
      %617 = vst.msk [vmem:[#allocation2 + $0x88] sm:$0xff] %vm144, %v585
      %618 = vst.msk [vmem:[#allocation2 + $0x90] sm:$0xff] %vm144, %v586
      %619 = vst.msk [vmem:[#allocation2 + $0x98] sm:$0xff] %vm144, %v587
      %620 = vst.msk [vmem:[#allocation2 + $0xa0] sm:$0xff] %vm144, %v588
      %621 = vst.msk [vmem:[#allocation2 + $0xa8] sm:$0xff] %vm144, %v589
      %622 = vst.msk [vmem:[#allocation2 + $0xb0] sm:$0xff] %vm144, %v590
      %623 = vst.msk [vmem:[#allocation2 + $0xb8] sm:$0xff] %vm144, %v591
      %624 = vst.msk [vmem:[#allocation2 + $0xc0] sm:$0xff] %vm144, %v592
      %625 = vst.msk [vmem:[#allocation2 + $0xc8] sm:$0xff] %vm144, %v593
      %626 = vst.msk [vmem:[#allocation2 + $0xd0] sm:$0xff] %vm144, %v594
      %627 = vst.msk [vmem:[#allocation2 + $0xd8] sm:$0xff] %vm144, %v595
      %628 = vst.msk [vmem:[#allocation2 + $0xe0] sm:$0xff] %vm144, %v596
      %629 = vst.msk [vmem:[#allocation2 + $0xe8] sm:$0xff] %vm144, %v597
      %630 = vst.msk [vmem:[#allocation2 + $0xf0] sm:$0xff] %vm144, %v598
      %631 = vst.msk [vmem:[#allocation2 + $0xf8] sm:$0xff] %vm144, %v599
      %v632 = vld [vmem:[%s138 + $0x1] sm:$0xff]
      %v633 = vld [vmem:[%s138 + $0x9] sm:$0xff]
      %v634 = vld [vmem:[%s138 + $0x19] sm:$0xff]
      %v635 = vld [vmem:[%s138 + $0x21] sm:$0xff]
      %v636 = vld [vmem:[%s138 + $0x31] sm:$0xff]
      %v637 = vld [vmem:[%s138 + $0x39] sm:$0xff]
      %v638 = vld [vmem:[%s138 + $0x49] sm:$0xff]
      %v639 = vld [vmem:[%s138 + $0x51] sm:$0xff]
      %v640 = vld [vmem:[%s138 + $0x61] sm:$0xff]
      %v641 = vld [vmem:[%s138 + $0x69] sm:$0xff]
      %v642 = vld [vmem:[%s138 + $0x79] sm:$0xff]
      %v643 = vld [vmem:[%s138 + $0x81] sm:$0xff]
      %v644 = vld [vmem:[%s138 + $0x91] sm:$0xff]
      %v645 = vld [vmem:[%s138 + $0x99] sm:$0xff]
      %v646 = vld [vmem:[%s138 + $0xa9] sm:$0xff]
      %v647 = vld [vmem:[%s138 + $0xb1] sm:$0xff]
      %v648 = vld [vmem:[%s138 + $0xc1] sm:$0xff]
      %v649 = vld [vmem:[%s138 + $0xc9] sm:$0xff]
      %v650 = vld [vmem:[%s138 + $0xd9] sm:$0xff]
      %v651 = vld [vmem:[%s138 + $0xe1] sm:$0xff]
      %v652 = vld [vmem:[%s138 + $0xf1] sm:$0xff]
      %v653 = vld [vmem:[%s138 + $0xf9] sm:$0xff]
      %v654 = vld [vmem:[%s138 + $0x109] sm:$0xff]
      %v655 = vld [vmem:[%s138 + $0x111] sm:$0xff]
      %v656 = vld [vmem:[%s138 + $0x121] sm:$0xff]
      %v657 = vld [vmem:[%s138 + $0x129] sm:$0xff]
      %v658 = vld [vmem:[%s138 + $0x139] sm:$0xff]
      %v659 = vld [vmem:[%s138 + $0x141] sm:$0xff]
      %v660 = vld [vmem:[%s138 + $0x151] sm:$0xff]
      %v661 = vld [vmem:[%s138 + $0x159] sm:$0xff]
      %v662 = vld [vmem:[%s138 + $0x169] sm:$0xff]
      %v663 = vld [vmem:[%s138 + $0x171] sm:$0xff]
      %s664 = scalar_lea.vmem %s1, 4
      %v665 = vld [vmem:[%s664] sm:$0xf]
      %v666 = vld [vmem:[#allocation2] sm:$0xff]
      %v667 = vld [vmem:[#allocation2 + $0x8] sm:$0xff]
      %v668 = vld [vmem:[#allocation2 + $0x10] sm:$0xff]
      %v669 = vld [vmem:[#allocation2 + $0x18] sm:$0xff]
      %v670 = vld [vmem:[#allocation2 + $0x20] sm:$0xff]
      %v671 = vld [vmem:[#allocation2 + $0x28] sm:$0xff]
      %v672 = vld [vmem:[#allocation2 + $0x30] sm:$0xff]
      %v673 = vld [vmem:[#allocation2 + $0x38] sm:$0xff]
      %v674 = vld [vmem:[#allocation2 + $0x40] sm:$0xff]
      %v675 = vld [vmem:[#allocation2 + $0x48] sm:$0xff]
      %v676 = vld [vmem:[#allocation2 + $0x50] sm:$0xff]
      %v677 = vld [vmem:[#allocation2 + $0x58] sm:$0xff]
      %v678 = vld [vmem:[#allocation2 + $0x60] sm:$0xff]
      %v679 = vld [vmem:[#allocation2 + $0x68] sm:$0xff]
      %v680 = vld [vmem:[#allocation2 + $0x70] sm:$0xff]
      %v681 = vld [vmem:[#allocation2 + $0x78] sm:$0xff]
      %v682 = vld [vmem:[#allocation2 + $0x80] sm:$0xff]
      %v683 = vld [vmem:[#allocation2 + $0x88] sm:$0xff]
      %v684 = vld [vmem:[#allocation2 + $0x90] sm:$0xff]
      %v685 = vld [vmem:[#allocation2 + $0x98] sm:$0xff]
      %v686 = vld [vmem:[#allocation2 + $0xa0] sm:$0xff]
      %v687 = vld [vmem:[#allocation2 + $0xa8] sm:$0xff]
      %v688 = vld [vmem:[#allocation2 + $0xb0] sm:$0xff]
      %v689 = vld [vmem:[#allocation2 + $0xb8] sm:$0xff]
      %v690 = vld [vmem:[#allocation2 + $0xc0] sm:$0xff]
      %v691 = vld [vmem:[#allocation2 + $0xc8] sm:$0xff]
      %v692 = vld [vmem:[#allocation2 + $0xd0] sm:$0xff]
      %v693 = vld [vmem:[#allocation2 + $0xd8] sm:$0xff]
      %v694 = vld [vmem:[#allocation2 + $0xe0] sm:$0xff]
      %v695 = vld [vmem:[#allocation2 + $0xe8] sm:$0xff]
      %v696 = vld [vmem:[#allocation2 + $0xf0] sm:$0xff]
      %v697 = vld [vmem:[#allocation2 + $0xf8] sm:$0xff]
      %v699 = vsel %vm242, %v632, 0
      %v702 = vsel %vm242, %v633, 0
      %v705 = vsel %vm242, %v634, 0
      %v708 = vsel %vm242, %v635, 0
      %v711 = vsel %vm242, %v636, 0
      %v714 = vsel %vm242, %v637, 0
      %v717 = vsel %vm242, %v638, 0
      %v720 = vsel %vm242, %v639, 0
      %v723 = vsel %vm242, %v640, 0
      %v726 = vsel %vm242, %v641, 0
      %v729 = vsel %vm242, %v642, 0
      %v732 = vsel %vm242, %v643, 0
      %v735 = vsel %vm242, %v644, 0
      %v738 = vsel %vm242, %v645, 0
      %v741 = vsel %vm242, %v646, 0
      %v744 = vsel %vm242, %v647, 0
      %v747 = vsel %vm242, %v648, 0
      %v750 = vsel %vm242, %v649, 0
      %v753 = vsel %vm242, %v650, 0
      %v756 = vsel %vm242, %v651, 0
      %v759 = vsel %vm242, %v652, 0
      %v762 = vsel %vm242, %v653, 0
      %v765 = vsel %vm242, %v654, 0
      %v768 = vsel %vm242, %v655, 0
      %v771 = vsel %vm242, %v656, 0
      %v774 = vsel %vm242, %v657, 0
      %v777 = vsel %vm242, %v658, 0
      %v780 = vsel %vm242, %v659, 0
      %v783 = vsel %vm242, %v660, 0
      %v786 = vsel %vm242, %v661, 0
      %v789 = vsel %vm242, %v662, 0
      %v792 = vsel %vm242, %v663, 0
      %v795 = vsel %vm339, %v665, 0
      %797 = vmatprep.subr.mxu0 0.0
      %798 = vmatpush1.msra.mxu0 %v795
      %799 = vmatprep.subr.mxu0 0.0
      %800 = vmatpush1.msra.mxu0 0.0
      %801 = vmatprep.subr.mxu0 0.0
      %802 = vmatpush1.msra.mxu0 0.0
      %803 = vmatprep.subr.mxu0 0.0
      %804 = vmatpush1.msra.mxu0 0.0
      %805 = vmatprep.subr.mxu0 0.0
      %806 = vmatpush1.msra.mxu0 0.0
      %807 = vmatprep.subr.mxu0 0.0
      %808 = vmatpush1.msra.mxu0 0.0
      %809 = vmatprep.subr.mxu0 0.0
      %810 = vmatpush1.msra.mxu0 0.0
      %811 = vmatprep.subr.mxu0 0.0
      %812 = vmatpush1.msra.mxu0 0.0
      %813 = vmatprep.subr.mxu0 0.0
      %814 = vmatpush1.msra.mxu0 0.0
      %815 = vmatprep.subr.mxu0 0.0
      %816 = vmatpush1.msra.mxu0 0.0
      %817 = vmatprep.subr.mxu0 0.0
      %818 = vmatpush1.msra.mxu0 0.0
      %819 = vmatprep.subr.mxu0 0.0
      %820 = vmatpush1.msra.mxu0 0.0
      %821 = vmatprep.subr.mxu0 0.0
      %822 = vmatpush1.msra.mxu0 0.0
      %823 = vmatprep.subr.mxu0 0.0
      %824 = vmatpush1.msra.mxu0 0.0
      %825 = vmatprep.subr.mxu0 0.0
      %826 = vmatpush1.msra.mxu0 0.0
      %827 = vmatprep.subr.mxu0 0.0
      %828 = vmatpush1.msra.mxu0 0.0
      %829 = vmatprep.subr.mxu0 0.0
      %830 = vmatpush1.msra.mxu0 0.0
      %831 = vmatprep.subr.mxu0 0.0
      %832 = vmatpush1.msra.mxu0 0.0
      %833 = vmatprep.subr.mxu0 0.0
      %834 = vmatpush1.msra.mxu0 0.0
      %835 = vmatprep.subr.mxu0 0.0
      %836 = vmatpush1.msra.mxu0 0.0
      %837 = vmatprep.subr.mxu0 0.0
      %838 = vmatpush1.msra.mxu0 0.0
      %839 = vmatprep.subr.mxu0 0.0
      %840 = vmatpush1.msra.mxu0 0.0
      %841 = vmatprep.subr.mxu0 0.0
      %842 = vmatpush1.msra.mxu0 0.0
      %843 = vmatprep.subr.mxu0 0.0
      %844 = vmatpush1.msra.mxu0 0.0
      %845 = vmatprep.subr.mxu0 0.0
      %846 = vmatpush1.msra.mxu0 0.0
      %847 = vmatprep.subr.mxu0 0.0
      %848 = vmatpush1.msra.mxu0 0.0
      %849 = vmatprep.subr.mxu0 0.0
      %850 = vmatpush1.msra.mxu0 0.0
      %851 = vmatprep.subr.mxu0 0.0
      %852 = vmatpush1.msra.mxu0 0.0
      %853 = vmatprep.subr.mxu0 0.0
      %854 = vmatpush1.msra.mxu0 0.0
      %855 = vmatprep.subr.mxu0 0.0
      %856 = vmatpush1.msra.mxu0 0.0
      %857 = vmatprep.subr.mxu0 0.0
      %858 = vmatpush1.msra.mxu0 0.0
      %859 = vmatprep.subr.mxu0 0.0
      %860 = vmatpush1.msra.mxu0 0.0
      %861 = vmatprep.mubr.f32.mxu0 0.0
      %862 = vmatmul.mubr.f32.gmra.mrb[0].mxu0 %v699
      %v863 = vpop.f32.mrb[0].mxu0
      %v864 = vadd.f32 0.0, %v863
      %v865 = vpop.f32.mrb[0].mxu0
      %866 = vmatprep.mubr.f32.mxu0 0.0
      %867 = vmatmul.mubr.f32.gmra.mrb[0].mxu0 %v702
      %v868 = vpop.f32.mrb[0].mxu0
      %v869 = vadd.f32 0.0, %v868
      %v870 = vpop.f32.mrb[0].mxu0
      %871 = vmatprep.mubr.f32.mxu0 0.0
      %872 = vmatmul.mubr.f32.gmra.mrb[0].mxu0 %v705
      %v873 = vpop.f32.mrb[0].mxu0
      %v874 = vadd.f32 0.0, %v873
      %v875 = vpop.f32.mrb[0].mxu0
      %876 = vmatprep.mubr.f32.mxu0 0.0
      %877 = vmatmul.mubr.f32.gmra.mrb[0].mxu0 %v708
      %v878 = vpop.f32.mrb[0].mxu0
      %v879 = vadd.f32 0.0, %v878
      %v880 = vpop.f32.mrb[0].mxu0
      %881 = vmatprep.mubr.f32.mxu0 0.0
      %882 = vmatmul.mubr.f32.gmra.mrb[0].mxu0 %v711
      %v883 = vpop.f32.mrb[0].mxu0
      %v884 = vadd.f32 0.0, %v883
      %v885 = vpop.f32.mrb[0].mxu0
      %886 = vmatprep.mubr.f32.mxu0 0.0
      %887 = vmatmul.mubr.f32.gmra.mrb[0].mxu0 %v714
      %v888 = vpop.f32.mrb[0].mxu0
      %v889 = vadd.f32 0.0, %v888
      %v890 = vpop.f32.mrb[0].mxu0
      %891 = vmatprep.mubr.f32.mxu0 0.0
      %892 = vmatmul.mubr.f32.gmra.mrb[0].mxu0 %v717
      %v893 = vpop.f32.mrb[0].mxu0
      %v894 = vadd.f32 0.0, %v893
      %v895 = vpop.f32.mrb[0].mxu0
      %896 = vmatprep.mubr.f32.mxu0 0.0
      %897 = vmatmul.mubr.f32.gmra.mrb[0].mxu0 %v720
      %v898 = vpop.f32.mrb[0].mxu0
      %v899 = vadd.f32 0.0, %v898
      %v900 = vpop.f32.mrb[0].mxu0
      %901 = vmatprep.mubr.f32.mxu0 0.0
      %902 = vmatmul.mubr.f32.gmra.mrb[0].mxu0 %v723
      %v903 = vpop.f32.mrb[0].mxu0
      %v904 = vadd.f32 0.0, %v903
      %v905 = vpop.f32.mrb[0].mxu0
      %906 = vmatprep.mubr.f32.mxu0 0.0
      %907 = vmatmul.mubr.f32.gmra.mrb[0].mxu0 %v726
      %v908 = vpop.f32.mrb[0].mxu0
      %v909 = vadd.f32 0.0, %v908
      %v910 = vpop.f32.mrb[0].mxu0
      %911 = vmatprep.mubr.f32.mxu0 0.0
      %912 = vmatmul.mubr.f32.gmra.mrb[0].mxu0 %v729
      %v913 = vpop.f32.mrb[0].mxu0
      %v914 = vadd.f32 0.0, %v913
      %v915 = vpop.f32.mrb[0].mxu0
      %916 = vmatprep.mubr.f32.mxu0 0.0
      %917 = vmatmul.mubr.f32.gmra.mrb[0].mxu0 %v732
      %v918 = vpop.f32.mrb[0].mxu0
      %v919 = vadd.f32 0.0, %v918
      %v920 = vpop.f32.mrb[0].mxu0
      %921 = vmatprep.mubr.f32.mxu0 0.0
      %922 = vmatmul.mubr.f32.gmra.mrb[0].mxu0 %v735
      %v923 = vpop.f32.mrb[0].mxu0
      %v924 = vadd.f32 0.0, %v923
      %v925 = vpop.f32.mrb[0].mxu0
      %926 = vmatprep.mubr.f32.mxu0 0.0
      %927 = vmatmul.mubr.f32.gmra.mrb[0].mxu0 %v738
      %v928 = vpop.f32.mrb[0].mxu0
      %v929 = vadd.f32 0.0, %v928
      %v930 = vpop.f32.mrb[0].mxu0
      %931 = vmatprep.mubr.f32.mxu0 0.0
      %932 = vmatmul.mubr.f32.gmra.mrb[0].mxu0 %v741
      %v933 = vpop.f32.mrb[0].mxu0
      %v934 = vadd.f32 0.0, %v933
      %v935 = vpop.f32.mrb[0].mxu0
      %936 = vmatprep.mubr.f32.mxu0 0.0
      %937 = vmatmul.mubr.f32.gmra.mrb[0].mxu0 %v744
      %v938 = vpop.f32.mrb[0].mxu0
      %v939 = vadd.f32 0.0, %v938
      %v940 = vpop.f32.mrb[0].mxu0
      %941 = vmatprep.mubr.f32.mxu0 0.0
      %942 = vmatmul.mubr.f32.gmra.mrb[0].mxu0 %v747
      %v943 = vpop.f32.mrb[0].mxu0
      %v944 = vadd.f32 0.0, %v943
      %v945 = vpop.f32.mrb[0].mxu0
      %946 = vmatprep.mubr.f32.mxu0 0.0
      %947 = vmatmul.mubr.f32.gmra.mrb[0].mxu0 %v750
      %v948 = vpop.f32.mrb[0].mxu0
      %v949 = vadd.f32 0.0, %v948
      %v950 = vpop.f32.mrb[0].mxu0
      %951 = vmatprep.mubr.f32.mxu0 0.0
      %952 = vmatmul.mubr.f32.gmra.mrb[0].mxu0 %v753
      %v953 = vpop.f32.mrb[0].mxu0
      %v954 = vadd.f32 0.0, %v953
      %v955 = vpop.f32.mrb[0].mxu0
      %956 = vmatprep.mubr.f32.mxu0 0.0
      %957 = vmatmul.mubr.f32.gmra.mrb[0].mxu0 %v756
      %v958 = vpop.f32.mrb[0].mxu0
      %v959 = vadd.f32 0.0, %v958
      %v960 = vpop.f32.mrb[0].mxu0
      %961 = vmatprep.mubr.f32.mxu0 0.0
      %962 = vmatmul.mubr.f32.gmra.mrb[0].mxu0 %v759
      %v963 = vpop.f32.mrb[0].mxu0
      %v964 = vadd.f32 0.0, %v963
      %v965 = vpop.f32.mrb[0].mxu0
      %966 = vmatprep.mubr.f32.mxu0 0.0
      %967 = vmatmul.mubr.f32.gmra.mrb[0].mxu0 %v762
      %v968 = vpop.f32.mrb[0].mxu0
      %v969 = vadd.f32 0.0, %v968
      %v970 = vpop.f32.mrb[0].mxu0
      %971 = vmatprep.mubr.f32.mxu0 0.0
      %972 = vmatmul.mubr.f32.gmra.mrb[0].mxu0 %v765
      %v973 = vpop.f32.mrb[0].mxu0
      %v974 = vadd.f32 0.0, %v973
      %v975 = vpop.f32.mrb[0].mxu0
      %976 = vmatprep.mubr.f32.mxu0 0.0
      %977 = vmatmul.mubr.f32.gmra.mrb[0].mxu0 %v768
      %v978 = vpop.f32.mrb[0].mxu0
      %v979 = vadd.f32 0.0, %v978
      %v980 = vpop.f32.mrb[0].mxu0
      %981 = vmatprep.mubr.f32.mxu0 0.0
      %982 = vmatmul.mubr.f32.gmra.mrb[0].mxu0 %v771
      %v983 = vpop.f32.mrb[0].mxu0
      %v984 = vadd.f32 0.0, %v983
      %v985 = vpop.f32.mrb[0].mxu0
      %986 = vmatprep.mubr.f32.mxu0 0.0
      %987 = vmatmul.mubr.f32.gmra.mrb[0].mxu0 %v774
      %v988 = vpop.f32.mrb[0].mxu0
      %v989 = vadd.f32 0.0, %v988
      %v990 = vpop.f32.mrb[0].mxu0
      %991 = vmatprep.mubr.f32.mxu0 0.0
      %992 = vmatmul.mubr.f32.gmra.mrb[0].mxu0 %v777
      %v993 = vpop.f32.mrb[0].mxu0
      %v994 = vadd.f32 0.0, %v993
      %v995 = vpop.f32.mrb[0].mxu0
      %996 = vmatprep.mubr.f32.mxu0 0.0
      %997 = vmatmul.mubr.f32.gmra.mrb[0].mxu0 %v780
      %v998 = vpop.f32.mrb[0].mxu0
      %v999 = vadd.f32 0.0, %v998
      %v1000 = vpop.f32.mrb[0].mxu0
      %1001 = vmatprep.mubr.f32.mxu0 0.0
      %1002 = vmatmul.mubr.f32.gmra.mrb[0].mxu0 %v783
      %v1003 = vpop.f32.mrb[0].mxu0
      %v1004 = vadd.f32 0.0, %v1003
      %v1005 = vpop.f32.mrb[0].mxu0
      %1006 = vmatprep.mubr.f32.mxu0 0.0
      %1007 = vmatmul.mubr.f32.gmra.mrb[0].mxu0 %v786
      %v1008 = vpop.f32.mrb[0].mxu0
      %v1009 = vadd.f32 0.0, %v1008
      %v1010 = vpop.f32.mrb[0].mxu0
      %1011 = vmatprep.mubr.f32.mxu0 0.0
      %1012 = vmatmul.mubr.f32.gmra.mrb[0].mxu0 %v789
      %v1013 = vpop.f32.mrb[0].mxu0
      %v1014 = vadd.f32 0.0, %v1013
      %v1015 = vpop.f32.mrb[0].mxu0
      %1016 = vmatprep.mubr.f32.mxu0 0.0
      %1017 = vmatmul.mubr.f32.gmra.mrb[0].mxu0 %v792
      %v1018 = vpop.f32.mrb[0].mxu0
      %v1019 = vadd.f32 0.0, %v1018
      %v1020 = vpop.f32.mrb[0].mxu0
      %1021 = vdwg.mxu0
      %v1022 = vadd.f32 %v666, %v864
      %v1023 = vadd.f32 %v667, %v869
      %v1024 = vadd.f32 %v668, %v874
      %v1025 = vadd.f32 %v669, %v879
      %v1026 = vadd.f32 %v670, %v884
      %v1027 = vadd.f32 %v671, %v889
      %v1028 = vadd.f32 %v672, %v894
      %v1029 = vadd.f32 %v673, %v899
      %v1030 = vadd.f32 %v674, %v904
      %v1031 = vadd.f32 %v675, %v909
      %v1032 = vadd.f32 %v676, %v914
      %v1033 = vadd.f32 %v677, %v919
      %v1034 = vadd.f32 %v678, %v924
      %v1035 = vadd.f32 %v679, %v929
      %v1036 = vadd.f32 %v680, %v934
      %v1037 = vadd.f32 %v681, %v939
      %v1038 = vadd.f32 %v682, %v944
      %v1039 = vadd.f32 %v683, %v949
      %v1040 = vadd.f32 %v684, %v954
      %v1041 = vadd.f32 %v685, %v959
      %v1042 = vadd.f32 %v686, %v964
      %v1043 = vadd.f32 %v687, %v969
      %v1044 = vadd.f32 %v688, %v974
      %v1045 = vadd.f32 %v689, %v979
      %v1046 = vadd.f32 %v690, %v984
      %v1047 = vadd.f32 %v691, %v989
      %v1048 = vadd.f32 %v692, %v994
      %v1049 = vadd.f32 %v693, %v999
      %v1050 = vadd.f32 %v694, %v1004
      %v1051 = vadd.f32 %v695, %v1009
      %v1052 = vadd.f32 %v696, %v1014
      %v1053 = vadd.f32 %v697, %v1019
      %1054 = vst.msk [vmem:[#allocation2] sm:$0xff] %vm144, %v1022
      %1055 = vst.msk [vmem:[#allocation2 + $0x8] sm:$0xff] %vm144, %v1023
      %1056 = vst.msk [vmem:[#allocation2 + $0x10] sm:$0xff] %vm144, %v1024
      %1057 = vst.msk [vmem:[#allocation2 + $0x18] sm:$0xff] %vm144, %v1025
      %1058 = vst.msk [vmem:[#allocation2 + $0x20] sm:$0xff] %vm144, %v1026
      %1059 = vst.msk [vmem:[#allocation2 + $0x28] sm:$0xff] %vm144, %v1027
      %1060 = vst.msk [vmem:[#allocation2 + $0x30] sm:$0xff] %vm144, %v1028
      %1061 = vst.msk [vmem:[#allocation2 + $0x38] sm:$0xff] %vm144, %v1029
      %1062 = vst.msk [vmem:[#allocation2 + $0x40] sm:$0xff] %vm144, %v1030
      %1063 = vst.msk [vmem:[#allocation2 + $0x48] sm:$0xff] %vm144, %v1031
      %1064 = vst.msk [vmem:[#allocation2 + $0x50] sm:$0xff] %vm144, %v1032
      %1065 = vst.msk [vmem:[#allocation2 + $0x58] sm:$0xff] %vm144, %v1033
      %1066 = vst.msk [vmem:[#allocation2 + $0x60] sm:$0xff] %vm144, %v1034
      %1067 = vst.msk [vmem:[#allocation2 + $0x68] sm:$0xff] %vm144, %v1035
      %1068 = vst.msk [vmem:[#allocation2 + $0x70] sm:$0xff] %vm144, %v1036
      %1069 = vst.msk [vmem:[#allocation2 + $0x78] sm:$0xff] %vm144, %v1037
      %1070 = vst.msk [vmem:[#allocation2 + $0x80] sm:$0xff] %vm144, %v1038
      %1071 = vst.msk [vmem:[#allocation2 + $0x88] sm:$0xff] %vm144, %v1039
      %1072 = vst.msk [vmem:[#allocation2 + $0x90] sm:$0xff] %vm144, %v1040
      %1073 = vst.msk [vmem:[#allocation2 + $0x98] sm:$0xff] %vm144, %v1041
      %1074 = vst.msk [vmem:[#allocation2 + $0xa0] sm:$0xff] %vm144, %v1042
      %1075 = vst.msk [vmem:[#allocation2 + $0xa8] sm:$0xff] %vm144, %v1043
      %1076 = vst.msk [vmem:[#allocation2 + $0xb0] sm:$0xff] %vm144, %v1044
      %1077 = vst.msk [vmem:[#allocation2 + $0xb8] sm:$0xff] %vm144, %v1045
      %1078 = vst.msk [vmem:[#allocation2 + $0xc0] sm:$0xff] %vm144, %v1046
      %1079 = vst.msk [vmem:[#allocation2 + $0xc8] sm:$0xff] %vm144, %v1047
      %1080 = vst.msk [vmem:[#allocation2 + $0xd0] sm:$0xff] %vm144, %v1048
      %1081 = vst.msk [vmem:[#allocation2 + $0xd8] sm:$0xff] %vm144, %v1049
      %1082 = vst.msk [vmem:[#allocation2 + $0xe0] sm:$0xff] %vm144, %v1050
      %1083 = vst.msk [vmem:[#allocation2 + $0xe8] sm:$0xff] %vm144, %v1051
      %1084 = vst.msk [vmem:[#allocation2 + $0xf0] sm:$0xff] %vm144, %v1052
      %1085 = vst.msk [vmem:[#allocation2 + $0xf8] sm:$0xff] %vm144, %v1053
      %v1086 = vld [vmem:[%s138 + $0x2] sm:$0xff]
      %v1087 = vld [vmem:[%s138 + $0xa] sm:$0xff]
      %v1088 = vld [vmem:[%s138 + $0x1a] sm:$0xff]
      %v1089 = vld [vmem:[%s138 + $0x22] sm:$0xff]
      %v1090 = vld [vmem:[%s138 + $0x32] sm:$0xff]
      %v1091 = vld [vmem:[%s138 + $0x3a] sm:$0xff]
      %v1092 = vld [vmem:[%s138 + $0x4a] sm:$0xff]
      %v1093 = vld [vmem:[%s138 + $0x52] sm:$0xff]
      %v1094 = vld [vmem:[%s138 + $0x62] sm:$0xff]
      %v1095 = vld [vmem:[%s138 + $0x6a] sm:$0xff]
      %v1096 = vld [vmem:[%s138 + $0x7a] sm:$0xff]
      %v1097 = vld [vmem:[%s138 + $0x82] sm:$0xff]
      %v1098 = vld [vmem:[%s138 + $0x92] sm:$0xff]
      %v1099 = vld [vmem:[%s138 + $0x9a] sm:$0xff]
      %v1100 = vld [vmem:[%s138 + $0xaa] sm:$0xff]
      %v1101 = vld [vmem:[%s138 + $0xb2] sm:$0xff]
      %v1102 = vld [vmem:[%s138 + $0xc2] sm:$0xff]
      %v1103 = vld [vmem:[%s138 + $0xca] sm:$0xff]
      %v1104 = vld [vmem:[%s138 + $0xda] sm:$0xff]
      %v1105 = vld [vmem:[%s138 + $0xe2] sm:$0xff]
      %v1106 = vld [vmem:[%s138 + $0xf2] sm:$0xff]
      %v1107 = vld [vmem:[%s138 + $0xfa] sm:$0xff]
      %v1108 = vld [vmem:[%s138 + $0x10a] sm:$0xff]
      %v1109 = vld [vmem:[%s138 + $0x112] sm:$0xff]
      %v1110 = vld [vmem:[%s138 + $0x122] sm:$0xff]
      %v1111 = vld [vmem:[%s138 + $0x12a] sm:$0xff]
      %v1112 = vld [vmem:[%s138 + $0x13a] sm:$0xff]
      %v1113 = vld [vmem:[%s138 + $0x142] sm:$0xff]
      %v1114 = vld [vmem:[%s138 + $0x152] sm:$0xff]
      %v1115 = vld [vmem:[%s138 + $0x15a] sm:$0xff]
      %v1116 = vld [vmem:[%s138 + $0x16a] sm:$0xff]
      %v1117 = vld [vmem:[%s138 + $0x172] sm:$0xff]
      %s1118 = scalar_lea.vmem %s1, 8
      %v1119 = vld [vmem:[%s1118] sm:$0xf]
      %v1120 = vld [vmem:[#allocation2] sm:$0xff]
      %v1121 = vld [vmem:[#allocation2 + $0x8] sm:$0xff]
      %v1122 = vld [vmem:[#allocation2 + $0x10] sm:$0xff]
      %v1123 = vld [vmem:[#allocation2 + $0x18] sm:$0xff]
      %v1124 = vld [vmem:[#allocation2 + $0x20] sm:$0xff]
      %v1125 = vld [vmem:[#allocation2 + $0x28] sm:$0xff]
      %v1126 = vld [vmem:[#allocation2 + $0x30] sm:$0xff]
      %v1127 = vld [vmem:[#allocation2 + $0x38] sm:$0xff]
      %v1128 = vld [vmem:[#allocation2 + $0x40] sm:$0xff]
      %v1129 = vld [vmem:[#allocation2 + $0x48] sm:$0xff]
      %v1130 = vld [vmem:[#allocation2 + $0x50] sm:$0xff]
      %v1131 = vld [vmem:[#allocation2 + $0x58] sm:$0xff]
      %v1132 = vld [vmem:[#allocation2 + $0x60] sm:$0xff]
      %v1133 = vld [vmem:[#allocation2 + $0x68] sm:$0xff]
      %v1134 = vld [vmem:[#allocation2 + $0x70] sm:$0xff]
      %v1135 = vld [vmem:[#allocation2 + $0x78] sm:$0xff]
      %v1136 = vld [vmem:[#allocation2 + $0x80] sm:$0xff]
      %v1137 = vld [vmem:[#allocation2 + $0x88] sm:$0xff]
      %v1138 = vld [vmem:[#allocation2 + $0x90] sm:$0xff]
      %v1139 = vld [vmem:[#allocation2 + $0x98] sm:$0xff]
      %v1140 = vld [vmem:[#allocation2 + $0xa0] sm:$0xff]
      %v1141 = vld [vmem:[#allocation2 + $0xa8] sm:$0xff]
      %v1142 = vld [vmem:[#allocation2 + $0xb0] sm:$0xff]
      %v1143 = vld [vmem:[#allocation2 + $0xb8] sm:$0xff]
      %v1144 = vld [vmem:[#allocation2 + $0xc0] sm:$0xff]
      %v1145 = vld [vmem:[#allocation2 + $0xc8] sm:$0xff]
      %v1146 = vld [vmem:[#allocation2 + $0xd0] sm:$0xff]
      %v1147 = vld [vmem:[#allocation2 + $0xd8] sm:$0xff]
      %v1148 = vld [vmem:[#allocation2 + $0xe0] sm:$0xff]
      %v1149 = vld [vmem:[#allocation2 + $0xe8] sm:$0xff]
      %v1150 = vld [vmem:[#allocation2 + $0xf0] sm:$0xff]
      %v1151 = vld [vmem:[#allocation2 + $0xf8] sm:$0xff]
      %v1153 = vsel %vm242, %v1086, 0
      %v1156 = vsel %vm242, %v1087, 0
      %v1159 = vsel %vm242, %v1088, 0
      %v1162 = vsel %vm242, %v1089, 0
      %v1165 = vsel %vm242, %v1090, 0
      %v1168 = vsel %vm242, %v1091, 0
      %v1171 = vsel %vm242, %v1092, 0
      %v1174 = vsel %vm242, %v1093, 0
      %v1177 = vsel %vm242, %v1094, 0
      %v1180 = vsel %vm242, %v1095, 0
      %v1183 = vsel %vm242, %v1096, 0
      %v1186 = vsel %vm242, %v1097, 0
      %v1189 = vsel %vm242, %v1098, 0
      %v1192 = vsel %vm242, %v1099, 0
      %v1195 = vsel %vm242, %v1100, 0
      %v1198 = vsel %vm242, %v1101, 0
      %v1201 = vsel %vm242, %v1102, 0
      %v1204 = vsel %vm242, %v1103, 0
      %v1207 = vsel %vm242, %v1104, 0
      %v1210 = vsel %vm242, %v1105, 0
      %v1213 = vsel %vm242, %v1106, 0
      %v1216 = vsel %vm242, %v1107, 0
      %v1219 = vsel %vm242, %v1108, 0
      %v1222 = vsel %vm242, %v1109, 0
      %v1225 = vsel %vm242, %v1110, 0
      %v1228 = vsel %vm242, %v1111, 0
      %v1231 = vsel %vm242, %v1112, 0
      %v1234 = vsel %vm242, %v1113, 0
      %v1237 = vsel %vm242, %v1114, 0
      %v1240 = vsel %vm242, %v1115, 0
      %v1243 = vsel %vm242, %v1116, 0
      %v1246 = vsel %vm242, %v1117, 0
      %v1249 = vsel %vm339, %v1119, 0
      %1251 = vmatprep.subr.mxu0 0.0
      %1252 = vmatpush1.msra.mxu0 %v1249
      %1253 = vmatprep.subr.mxu0 0.0
      %1254 = vmatpush1.msra.mxu0 0.0
      %1255 = vmatprep.subr.mxu0 0.0
      %1256 = vmatpush1.msra.mxu0 0.0
      %1257 = vmatprep.subr.mxu0 0.0
      %1258 = vmatpush1.msra.mxu0 0.0
      %1259 = vmatprep.subr.mxu0 0.0
      %1260 = vmatpush1.msra.mxu0 0.0
      %1261 = vmatprep.subr.mxu0 0.0
      %1262 = vmatpush1.msra.mxu0 0.0
      %1263 = vmatprep.subr.mxu0 0.0
      %1264 = vmatpush1.msra.mxu0 0.0
      %1265 = vmatprep.subr.mxu0 0.0
      %1266 = vmatpush1.msra.mxu0 0.0
      %1267 = vmatprep.subr.mxu0 0.0
      %1268 = vmatpush1.msra.mxu0 0.0
      %1269 = vmatprep.subr.mxu0 0.0
      %1270 = vmatpush1.msra.mxu0 0.0
      %1271 = vmatprep.subr.mxu0 0.0
      %1272 = vmatpush1.msra.mxu0 0.0
      %1273 = vmatprep.subr.mxu0 0.0
      %1274 = vmatpush1.msra.mxu0 0.0
      %1275 = vmatprep.subr.mxu0 0.0
      %1276 = vmatpush1.msra.mxu0 0.0
      %1277 = vmatprep.subr.mxu0 0.0
      %1278 = vmatpush1.msra.mxu0 0.0
      %1279 = vmatprep.subr.mxu0 0.0
      %1280 = vmatpush1.msra.mxu0 0.0
      %1281 = vmatprep.subr.mxu0 0.0
      %1282 = vmatpush1.msra.mxu0 0.0
      %1283 = vmatprep.subr.mxu0 0.0
      %1284 = vmatpush1.msra.mxu0 0.0
      %1285 = vmatprep.subr.mxu0 0.0
      %1286 = vmatpush1.msra.mxu0 0.0
      %1287 = vmatprep.subr.mxu0 0.0
      %1288 = vmatpush1.msra.mxu0 0.0
      %1289 = vmatprep.subr.mxu0 0.0
      %1290 = vmatpush1.msra.mxu0 0.0
      %1291 = vmatprep.subr.mxu0 0.0
      %1292 = vmatpush1.msra.mxu0 0.0
      %1293 = vmatprep.subr.mxu0 0.0
      %1294 = vmatpush1.msra.mxu0 0.0
      %1295 = vmatprep.subr.mxu0 0.0
      %1296 = vmatpush1.msra.mxu0 0.0
      %1297 = vmatprep.subr.mxu0 0.0
      %1298 = vmatpush1.msra.mxu0 0.0
      %1299 = vmatprep.subr.mxu0 0.0
      %1300 = vmatpush1.msra.mxu0 0.0
      %1301 = vmatprep.subr.mxu0 0.0
      %1302 = vmatpush1.msra.mxu0 0.0
      %1303 = vmatprep.subr.mxu0 0.0
      %1304 = vmatpush1.msra.mxu0 0.0
      %1305 = vmatprep.subr.mxu0 0.0
      %1306 = vmatpush1.msra.mxu0 0.0
      %1307 = vmatprep.subr.mxu0 0.0
      %1308 = vmatpush1.msra.mxu0 0.0
      %1309 = vmatprep.subr.mxu0 0.0
      %1310 = vmatpush1.msra.mxu0 0.0
      %1311 = vmatprep.subr.mxu0 0.0
      %1312 = vmatpush1.msra.mxu0 0.0
      %1313 = vmatprep.subr.mxu0 0.0
      %1314 = vmatpush1.msra.mxu0 0.0
      %1315 = vmatprep.mubr.f32.mxu0 0.0
      %1316 = vmatmul.mubr.f32.gmra.mrb[0].mxu0 %v1153
      %v1317 = vpop.f32.mrb[0].mxu0
      %v1318 = vadd.f32 0.0, %v1317
      %v1319 = vpop.f32.mrb[0].mxu0
      %1320 = vmatprep.mubr.f32.mxu0 0.0
      %1321 = vmatmul.mubr.f32.gmra.mrb[0].mxu0 %v1156
      %v1322 = vpop.f32.mrb[0].mxu0
      %v1323 = vadd.f32 0.0, %v1322
      %v1324 = vpop.f32.mrb[0].mxu0
      %1325 = vmatprep.mubr.f32.mxu0 0.0
      %1326 = vmatmul.mubr.f32.gmra.mrb[0].mxu0 %v1159
      %v1327 = vpop.f32.mrb[0].mxu0
      %v1328 = vadd.f32 0.0, %v1327
      %v1329 = vpop.f32.mrb[0].mxu0
      %1330 = vmatprep.mubr.f32.mxu0 0.0
      %1331 = vmatmul.mubr.f32.gmra.mrb[0].mxu0 %v1162
      %v1332 = vpop.f32.mrb[0].mxu0
      %v1333 = vadd.f32 0.0, %v1332
      %v1334 = vpop.f32.mrb[0].mxu0
      %1335 = vmatprep.mubr.f32.mxu0 0.0
      %1336 = vmatmul.mubr.f32.gmra.mrb[0].mxu0 %v1165
      %v1337 = vpop.f32.mrb[0].mxu0
      %v1338 = vadd.f32 0.0, %v1337
      %v1339 = vpop.f32.mrb[0].mxu0
      %1340 = vmatprep.mubr.f32.mxu0 0.0
      %1341 = vmatmul.mubr.f32.gmra.mrb[0].mxu0 %v1168
      %v1342 = vpop.f32.mrb[0].mxu0
      %v1343 = vadd.f32 0.0, %v1342
      %v1344 = vpop.f32.mrb[0].mxu0
      %1345 = vmatprep.mubr.f32.mxu0 0.0
      %1346 = vmatmul.mubr.f32.gmra.mrb[0].mxu0 %v1171
      %v1347 = vpop.f32.mrb[0].mxu0
      %v1348 = vadd.f32 0.0, %v1347
      %v1349 = vpop.f32.mrb[0].mxu0
      %1350 = vmatprep.mubr.f32.mxu0 0.0
      %1351 = vmatmul.mubr.f32.gmra.mrb[0].mxu0 %v1174
      %v1352 = vpop.f32.mrb[0].mxu0
      %v1353 = vadd.f32 0.0, %v1352
      %v1354 = vpop.f32.mrb[0].mxu0
      %1355 = vmatprep.mubr.f32.mxu0 0.0
      %1356 = vmatmul.mubr.f32.gmra.mrb[0].mxu0 %v1177
      %v1357 = vpop.f32.mrb[0].mxu0
      %v1358 = vadd.f32 0.0, %v1357
      %v1359 = vpop.f32.mrb[0].mxu0
      %1360 = vmatprep.mubr.f32.mxu0 0.0
      %1361 = vmatmul.mubr.f32.gmra.mrb[0].mxu0 %v1180
      %v1362 = vpop.f32.mrb[0].mxu0
      %v1363 = vadd.f32 0.0, %v1362
      %v1364 = vpop.f32.mrb[0].mxu0
      %1365 = vmatprep.mubr.f32.mxu0 0.0
      %1366 = vmatmul.mubr.f32.gmra.mrb[0].mxu0 %v1183
      %v1367 = vpop.f32.mrb[0].mxu0
      %v1368 = vadd.f32 0.0, %v1367
      %v1369 = vpop.f32.mrb[0].mxu0
      %1370 = vmatprep.mubr.f32.mxu0 0.0
      %1371 = vmatmul.mubr.f32.gmra.mrb[0].mxu0 %v1186
      %v1372 = vpop.f32.mrb[0].mxu0
      %v1373 = vadd.f32 0.0, %v1372
      %v1374 = vpop.f32.mrb[0].mxu0
      %1375 = vmatprep.mubr.f32.mxu0 0.0
      %1376 = vmatmul.mubr.f32.gmra.mrb[0].mxu0 %v1189
      %v1377 = vpop.f32.mrb[0].mxu0
      %v1378 = vadd.f32 0.0, %v1377
      %v1379 = vpop.f32.mrb[0].mxu0
      %1380 = vmatprep.mubr.f32.mxu0 0.0
      %1381 = vmatmul.mubr.f32.gmra.mrb[0].mxu0 %v1192
      %v1382 = vpop.f32.mrb[0].mxu0
      %v1383 = vadd.f32 0.0, %v1382
      %v1384 = vpop.f32.mrb[0].mxu0
      %1385 = vmatprep.mubr.f32.mxu0 0.0
      %1386 = vmatmul.mubr.f32.gmra.mrb[0].mxu0 %v1195
      %v1387 = vpop.f32.mrb[0].mxu0
      %v1388 = vadd.f32 0.0, %v1387
      %v1389 = vpop.f32.mrb[0].mxu0
      %1390 = vmatprep.mubr.f32.mxu0 0.0
      %1391 = vmatmul.mubr.f32.gmra.mrb[0].mxu0 %v1198
      %v1392 = vpop.f32.mrb[0].mxu0
      %v1393 = vadd.f32 0.0, %v1392
      %v1394 = vpop.f32.mrb[0].mxu0
      %1395 = vmatprep.mubr.f32.mxu0 0.0
      %1396 = vmatmul.mubr.f32.gmra.mrb[0].mxu0 %v1201
      %v1397 = vpop.f32.mrb[0].mxu0
      %v1398 = vadd.f32 0.0, %v1397
      %v1399 = vpop.f32.mrb[0].mxu0
      %1400 = vmatprep.mubr.f32.mxu0 0.0
      %1401 = vmatmul.mubr.f32.gmra.mrb[0].mxu0 %v1204
      %v1402 = vpop.f32.mrb[0].mxu0
      %v1403 = vadd.f32 0.0, %v1402
      %v1404 = vpop.f32.mrb[0].mxu0
      %1405 = vmatprep.mubr.f32.mxu0 0.0
      %1406 = vmatmul.mubr.f32.gmra.mrb[0].mxu0 %v1207
      %v1407 = vpop.f32.mrb[0].mxu0
      %v1408 = vadd.f32 0.0, %v1407
      %v1409 = vpop.f32.mrb[0].mxu0
      %1410 = vmatprep.mubr.f32.mxu0 0.0
      %1411 = vmatmul.mubr.f32.gmra.mrb[0].mxu0 %v1210
      %v1412 = vpop.f32.mrb[0].mxu0
      %v1413 = vadd.f32 0.0, %v1412
      %v1414 = vpop.f32.mrb[0].mxu0
      %1415 = vmatprep.mubr.f32.mxu0 0.0
      %1416 = vmatmul.mubr.f32.gmra.mrb[0].mxu0 %v1213
      %v1417 = vpop.f32.mrb[0].mxu0
      %v1418 = vadd.f32 0.0, %v1417
      %v1419 = vpop.f32.mrb[0].mxu0
      %1420 = vmatprep.mubr.f32.mxu0 0.0
      %1421 = vmatmul.mubr.f32.gmra.mrb[0].mxu0 %v1216
      %v1422 = vpop.f32.mrb[0].mxu0
      %v1423 = vadd.f32 0.0, %v1422
      %v1424 = vpop.f32.mrb[0].mxu0
      %1425 = vmatprep.mubr.f32.mxu0 0.0
      %1426 = vmatmul.mubr.f32.gmra.mrb[0].mxu0 %v1219
      %v1427 = vpop.f32.mrb[0].mxu0
      %v1428 = vadd.f32 0.0, %v1427
      %v1429 = vpop.f32.mrb[0].mxu0
      %1430 = vmatprep.mubr.f32.mxu0 0.0
      %1431 = vmatmul.mubr.f32.gmra.mrb[0].mxu0 %v1222
      %v1432 = vpop.f32.mrb[0].mxu0
      %v1433 = vadd.f32 0.0, %v1432
      %v1434 = vpop.f32.mrb[0].mxu0
      %1435 = vmatprep.mubr.f32.mxu0 0.0
      %1436 = vmatmul.mubr.f32.gmra.mrb[0].mxu0 %v1225
      %v1437 = vpop.f32.mrb[0].mxu0
      %v1438 = vadd.f32 0.0, %v1437
      %v1439 = vpop.f32.mrb[0].mxu0
      %1440 = vmatprep.mubr.f32.mxu0 0.0
      %1441 = vmatmul.mubr.f32.gmra.mrb[0].mxu0 %v1228
      %v1442 = vpop.f32.mrb[0].mxu0
      %v1443 = vadd.f32 0.0, %v1442
      %v1444 = vpop.f32.mrb[0].mxu0
      %1445 = vmatprep.mubr.f32.mxu0 0.0
      %1446 = vmatmul.mubr.f32.gmra.mrb[0].mxu0 %v1231
      %v1447 = vpop.f32.mrb[0].mxu0
      %v1448 = vadd.f32 0.0, %v1447
      %v1449 = vpop.f32.mrb[0].mxu0
      %1450 = vmatprep.mubr.f32.mxu0 0.0
      %1451 = vmatmul.mubr.f32.gmra.mrb[0].mxu0 %v1234
      %v1452 = vpop.f32.mrb[0].mxu0
      %v1453 = vadd.f32 0.0, %v1452
      %v1454 = vpop.f32.mrb[0].mxu0
      %1455 = vmatprep.mubr.f32.mxu0 0.0
      %1456 = vmatmul.mubr.f32.gmra.mrb[0].mxu0 %v1237
      %v1457 = vpop.f32.mrb[0].mxu0
      %v1458 = vadd.f32 0.0, %v1457
      %v1459 = vpop.f32.mrb[0].mxu0
      %1460 = vmatprep.mubr.f32.mxu0 0.0
      %1461 = vmatmul.mubr.f32.gmra.mrb[0].mxu0 %v1240
      %v1462 = vpop.f32.mrb[0].mxu0
      %v1463 = vadd.f32 0.0, %v1462
      %v1464 = vpop.f32.mrb[0].mxu0
      %1465 = vmatprep.mubr.f32.mxu0 0.0
      %1466 = vmatmul.mubr.f32.gmra.mrb[0].mxu0 %v1243
      %v1467 = vpop.f32.mrb[0].mxu0
      %v1468 = vadd.f32 0.0, %v1467
      %v1469 = vpop.f32.mrb[0].mxu0
      %1470 = vmatprep.mubr.f32.mxu0 0.0
      %1471 = vmatmul.mubr.f32.gmra.mrb[0].mxu0 %v1246
      %v1472 = vpop.f32.mrb[0].mxu0
      %v1473 = vadd.f32 0.0, %v1472
      %v1474 = vpop.f32.mrb[0].mxu0
      %1475 = vdwg.mxu0
      %v1476 = vadd.f32 %v1120, %v1318
      %v1477 = vadd.f32 %v1121, %v1323
      %v1478 = vadd.f32 %v1122, %v1328
      %v1479 = vadd.f32 %v1123, %v1333
      %v1480 = vadd.f32 %v1124, %v1338
      %v1481 = vadd.f32 %v1125, %v1343
      %v1482 = vadd.f32 %v1126, %v1348
      %v1483 = vadd.f32 %v1127, %v1353
      %v1484 = vadd.f32 %v1128, %v1358
      %v1485 = vadd.f32 %v1129, %v1363
      %v1486 = vadd.f32 %v1130, %v1368
      %v1487 = vadd.f32 %v1131, %v1373
      %v1488 = vadd.f32 %v1132, %v1378
      %v1489 = vadd.f32 %v1133, %v1383
      %v1490 = vadd.f32 %v1134, %v1388
      %v1491 = vadd.f32 %v1135, %v1393
      %v1492 = vadd.f32 %v1136, %v1398
      %v1493 = vadd.f32 %v1137, %v1403
      %v1494 = vadd.f32 %v1138, %v1408
      %v1495 = vadd.f32 %v1139, %v1413
      %v1496 = vadd.f32 %v1140, %v1418
      %v1497 = vadd.f32 %v1141, %v1423
      %v1498 = vadd.f32 %v1142, %v1428
      %v1499 = vadd.f32 %v1143, %v1433
      %v1500 = vadd.f32 %v1144, %v1438
      %v1501 = vadd.f32 %v1145, %v1443
      %v1502 = vadd.f32 %v1146, %v1448
      %v1503 = vadd.f32 %v1147, %v1453
      %v1504 = vadd.f32 %v1148, %v1458
      %v1505 = vadd.f32 %v1149, %v1463
      %v1506 = vadd.f32 %v1150, %v1468
      %v1507 = vadd.f32 %v1151, %v1473
      %1508 = vst.msk [vmem:[#allocation2] sm:$0xff] %vm144, %v1476
      %1509 = vst.msk [vmem:[#allocation2 + $0x8] sm:$0xff] %vm144, %v1477
      %1510 = vst.msk [vmem:[#allocation2 + $0x10] sm:$0xff] %vm144, %v1478
      %1511 = vst.msk [vmem:[#allocation2 + $0x18] sm:$0xff] %vm144, %v1479
      %1512 = vst.msk [vmem:[#allocation2 + $0x20] sm:$0xff] %vm144, %v1480
      %1513 = vst.msk [vmem:[#allocation2 + $0x28] sm:$0xff] %vm144, %v1481
      %1514 = vst.msk [vmem:[#allocation2 + $0x30] sm:$0xff] %vm144, %v1482
      %1515 = vst.msk [vmem:[#allocation2 + $0x38] sm:$0xff] %vm144, %v1483
      %1516 = vst.msk [vmem:[#allocation2 + $0x40] sm:$0xff] %vm144, %v1484
      %1517 = vst.msk [vmem:[#allocation2 + $0x48] sm:$0xff] %vm144, %v1485
      %1518 = vst.msk [vmem:[#allocation2 + $0x50] sm:$0xff] %vm144, %v1486
      %1519 = vst.msk [vmem:[#allocation2 + $0x58] sm:$0xff] %vm144, %v1487
      %1520 = vst.msk [vmem:[#allocation2 + $0x60] sm:$0xff] %vm144, %v1488
      %1521 = vst.msk [vmem:[#allocation2 + $0x68] sm:$0xff] %vm144, %v1489
      %1522 = vst.msk [vmem:[#allocation2 + $0x70] sm:$0xff] %vm144, %v1490
      %1523 = vst.msk [vmem:[#allocation2 + $0x78] sm:$0xff] %vm144, %v1491
      %1524 = vst.msk [vmem:[#allocation2 + $0x80] sm:$0xff] %vm144, %v1492
      %1525 = vst.msk [vmem:[#allocation2 + $0x88] sm:$0xff] %vm144, %v1493
      %1526 = vst.msk [vmem:[#allocation2 + $0x90] sm:$0xff] %vm144, %v1494
      %1527 = vst.msk [vmem:[#allocation2 + $0x98] sm:$0xff] %vm144, %v1495
      %1528 = vst.msk [vmem:[#allocation2 + $0xa0] sm:$0xff] %vm144, %v1496
      %1529 = vst.msk [vmem:[#allocation2 + $0xa8] sm:$0xff] %vm144, %v1497
      %1530 = vst.msk [vmem:[#allocation2 + $0xb0] sm:$0xff] %vm144, %v1498
      %1531 = vst.msk [vmem:[#allocation2 + $0xb8] sm:$0xff] %vm144, %v1499
      %1532 = vst.msk [vmem:[#allocation2 + $0xc0] sm:$0xff] %vm144, %v1500
      %1533 = vst.msk [vmem:[#allocation2 + $0xc8] sm:$0xff] %vm144, %v1501
      %1534 = vst.msk [vmem:[#allocation2 + $0xd0] sm:$0xff] %vm144, %v1502
      %1535 = vst.msk [vmem:[#allocation2 + $0xd8] sm:$0xff] %vm144, %v1503
      %1536 = vst.msk [vmem:[#allocation2 + $0xe0] sm:$0xff] %vm144, %v1504
      %1537 = vst.msk [vmem:[#allocation2 + $0xe8] sm:$0xff] %vm144, %v1505
      %1538 = vst.msk [vmem:[#allocation2 + $0xf0] sm:$0xff] %vm144, %v1506
      %1539 = vst.msk [vmem:[#allocation2 + $0xf8] sm:$0xff] %vm144, %v1507
      %s1540 = scalar_lea.vmem %s138, 24
      %v1541 = vld [vmem:[%s1540] sm:$0xff]
      %v1542 = vld [vmem:[%s1540 + $0x8] sm:$0xff]
      %v1543 = vld [vmem:[%s1540 + $0x18] sm:$0xff]
      %v1544 = vld [vmem:[%s1540 + $0x20] sm:$0xff]
      %v1545 = vld [vmem:[%s1540 + $0x30] sm:$0xff]
      %v1546 = vld [vmem:[%s1540 + $0x38] sm:$0xff]
      %v1547 = vld [vmem:[%s1540 + $0x48] sm:$0xff]
      %v1548 = vld [vmem:[%s1540 + $0x50] sm:$0xff]
      %v1549 = vld [vmem:[%s1540 + $0x60] sm:$0xff]
      %v1550 = vld [vmem:[%s1540 + $0x68] sm:$0xff]
      %v1551 = vld [vmem:[%s1540 + $0x78] sm:$0xff]
      %v1552 = vld [vmem:[%s1540 + $0x80] sm:$0xff]
      %v1553 = vld [vmem:[%s1540 + $0x90] sm:$0xff]
      %v1554 = vld [vmem:[%s1540 + $0x98] sm:$0xff]
      %v1555 = vld [vmem:[%s1540 + $0xa8] sm:$0xff]
      %v1556 = vld [vmem:[%s1540 + $0xb0] sm:$0xff]
      %v1557 = vld [vmem:[%s1540 + $0xc0] sm:$0xff]
      %v1558 = vld [vmem:[%s1540 + $0xc8] sm:$0xff]
      %v1559 = vld [vmem:[%s1540 + $0xd8] sm:$0xff]
      %v1560 = vld [vmem:[%s1540 + $0xe0] sm:$0xff]
      %v1561 = vld [vmem:[%s1540 + $0xf0] sm:$0xff]
      %v1562 = vld [vmem:[%s1540 + $0xf8] sm:$0xff]
      %v1563 = vld [vmem:[%s1540 + $0x108] sm:$0xff]
      %v1564 = vld [vmem:[%s1540 + $0x110] sm:$0xff]
      %v1565 = vld [vmem:[%s1540 + $0x120] sm:$0xff]
      %v1566 = vld [vmem:[%s1540 + $0x128] sm:$0xff]
      %v1567 = vld [vmem:[%s1540 + $0x138] sm:$0xff]
      %v1568 = vld [vmem:[%s1540 + $0x140] sm:$0xff]
      %v1569 = vld [vmem:[%s1540 + $0x150] sm:$0xff]
      %v1570 = vld [vmem:[%s1540 + $0x158] sm:$0xff]
      %v1571 = vld [vmem:[%s1540 + $0x168] sm:$0xff]
      %v1572 = vld [vmem:[%s1540 + $0x170] sm:$0xff]
      %s1573 = scalar_lea.vmem %s1, 12
      %v1574 = vld [vmem:[%s1573] sm:$0xf]
      %v1575 = vld [vmem:[#allocation2] sm:$0xff]
      %v1576 = vld [vmem:[#allocation2 + $0x8] sm:$0xff]
      %v1577 = vld [vmem:[#allocation2 + $0x10] sm:$0xff]
      %v1578 = vld [vmem:[#allocation2 + $0x18] sm:$0xff]
      %v1579 = vld [vmem:[#allocation2 + $0x20] sm:$0xff]
      %v1580 = vld [vmem:[#allocation2 + $0x28] sm:$0xff]
      %v1581 = vld [vmem:[#allocation2 + $0x30] sm:$0xff]
      %v1582 = vld [vmem:[#allocation2 + $0x38] sm:$0xff]
      %v1583 = vld [vmem:[#allocation2 + $0x40] sm:$0xff]
      %v1584 = vld [vmem:[#allocation2 + $0x48] sm:$0xff]
      %v1585 = vld [vmem:[#allocation2 + $0x50] sm:$0xff]
      %v1586 = vld [vmem:[#allocation2 + $0x58] sm:$0xff]
      %v1587 = vld [vmem:[#allocation2 + $0x60] sm:$0xff]
      %v1588 = vld [vmem:[#allocation2 + $0x68] sm:$0xff]
      %v1589 = vld [vmem:[#allocation2 + $0x70] sm:$0xff]
      %v1590 = vld [vmem:[#allocation2 + $0x78] sm:$0xff]
      %v1591 = vld [vmem:[#allocation2 + $0x80] sm:$0xff]
      %v1592 = vld [vmem:[#allocation2 + $0x88] sm:$0xff]
      %v1593 = vld [vmem:[#allocation2 + $0x90] sm:$0xff]
      %v1594 = vld [vmem:[#allocation2 + $0x98] sm:$0xff]
      %v1595 = vld [vmem:[#allocation2 + $0xa0] sm:$0xff]
      %v1596 = vld [vmem:[#allocation2 + $0xa8] sm:$0xff]
      %v1597 = vld [vmem:[#allocation2 + $0xb0] sm:$0xff]
      %v1598 = vld [vmem:[#allocation2 + $0xb8] sm:$0xff]
      %v1599 = vld [vmem:[#allocation2 + $0xc0] sm:$0xff]
      %v1600 = vld [vmem:[#allocation2 + $0xc8] sm:$0xff]
      %v1601 = vld [vmem:[#allocation2 + $0xd0] sm:$0xff]
      %v1602 = vld [vmem:[#allocation2 + $0xd8] sm:$0xff]
      %v1603 = vld [vmem:[#allocation2 + $0xe0] sm:$0xff]
      %v1604 = vld [vmem:[#allocation2 + $0xe8] sm:$0xff]
      %v1605 = vld [vmem:[#allocation2 + $0xf0] sm:$0xff]
      %v1606 = vld [vmem:[#allocation2 + $0xf8] sm:$0xff]
      %v1608 = vsel %vm242, %v1541, 0
      %v1611 = vsel %vm242, %v1542, 0
      %v1614 = vsel %vm242, %v1543, 0
      %v1617 = vsel %vm242, %v1544, 0
      %v1620 = vsel %vm242, %v1545, 0
      %v1623 = vsel %vm242, %v1546, 0
      %v1626 = vsel %vm242, %v1547, 0
      %v1629 = vsel %vm242, %v1548, 0
      %v1632 = vsel %vm242, %v1549, 0
      %v1635 = vsel %vm242, %v1550, 0
      %v1638 = vsel %vm242, %v1551, 0
      %v1641 = vsel %vm242, %v1552, 0
      %v1644 = vsel %vm242, %v1553, 0
      %v1647 = vsel %vm242, %v1554, 0
      %v1650 = vsel %vm242, %v1555, 0
      %v1653 = vsel %vm242, %v1556, 0
      %v1656 = vsel %vm242, %v1557, 0
      %v1659 = vsel %vm242, %v1558, 0
      %v1662 = vsel %vm242, %v1559, 0
      %v1665 = vsel %vm242, %v1560, 0
      %v1668 = vsel %vm242, %v1561, 0
      %v1671 = vsel %vm242, %v1562, 0
      %v1674 = vsel %vm242, %v1563, 0
      %v1677 = vsel %vm242, %v1564, 0
      %v1680 = vsel %vm242, %v1565, 0
      %v1683 = vsel %vm242, %v1566, 0
      %v1686 = vsel %vm242, %v1567, 0
      %v1689 = vsel %vm242, %v1568, 0
      %v1692 = vsel %vm242, %v1569, 0
      %v1695 = vsel %vm242, %v1570, 0
      %v1698 = vsel %vm242, %v1571, 0
      %v1701 = vsel %vm242, %v1572, 0
      %v1704 = vsel %vm339, %v1574, 0
      %1706 = vmatprep.subr.mxu0 0.0
      %1707 = vmatpush1.msra.mxu0 %v1704
      %1708 = vmatprep.subr.mxu0 0.0
      %1709 = vmatpush1.msra.mxu0 0.0
      %1710 = vmatprep.subr.mxu0 0.0
      %1711 = vmatpush1.msra.mxu0 0.0
      %1712 = vmatprep.subr.mxu0 0.0
      %1713 = vmatpush1.msra.mxu0 0.0
      %1714 = vmatprep.subr.mxu0 0.0
      %1715 = vmatpush1.msra.mxu0 0.0
      %1716 = vmatprep.subr.mxu0 0.0
      %1717 = vmatpush1.msra.mxu0 0.0
      %1718 = vmatprep.subr.mxu0 0.0
      %1719 = vmatpush1.msra.mxu0 0.0
      %1720 = vmatprep.subr.mxu0 0.0
      %1721 = vmatpush1.msra.mxu0 0.0
      %1722 = vmatprep.subr.mxu0 0.0
      %1723 = vmatpush1.msra.mxu0 0.0
      %1724 = vmatprep.subr.mxu0 0.0
      %1725 = vmatpush1.msra.mxu0 0.0
      %1726 = vmatprep.subr.mxu0 0.0
      %1727 = vmatpush1.msra.mxu0 0.0
      %1728 = vmatprep.subr.mxu0 0.0
      %1729 = vmatpush1.msra.mxu0 0.0
      %1730 = vmatprep.subr.mxu0 0.0
      %1731 = vmatpush1.msra.mxu0 0.0
      %1732 = vmatprep.subr.mxu0 0.0
      %1733 = vmatpush1.msra.mxu0 0.0
      %1734 = vmatprep.subr.mxu0 0.0
      %1735 = vmatpush1.msra.mxu0 0.0
      %1736 = vmatprep.subr.mxu0 0.0
      %1737 = vmatpush1.msra.mxu0 0.0
      %1738 = vmatprep.subr.mxu0 0.0
      %1739 = vmatpush1.msra.mxu0 0.0
      %1740 = vmatprep.subr.mxu0 0.0
      %1741 = vmatpush1.msra.mxu0 0.0
      %1742 = vmatprep.subr.mxu0 0.0
      %1743 = vmatpush1.msra.mxu0 0.0
      %1744 = vmatprep.subr.mxu0 0.0
      %1745 = vmatpush1.msra.mxu0 0.0
      %1746 = vmatprep.subr.mxu0 0.0
      %1747 = vmatpush1.msra.mxu0 0.0
      %1748 = vmatprep.subr.mxu0 0.0
      %1749 = vmatpush1.msra.mxu0 0.0
      %1750 = vmatprep.subr.mxu0 0.0
      %1751 = vmatpush1.msra.mxu0 0.0
      %1752 = vmatprep.subr.mxu0 0.0
      %1753 = vmatpush1.msra.mxu0 0.0
      %1754 = vmatprep.subr.mxu0 0.0
      %1755 = vmatpush1.msra.mxu0 0.0
      %1756 = vmatprep.subr.mxu0 0.0
      %1757 = vmatpush1.msra.mxu0 0.0
      %1758 = vmatprep.subr.mxu0 0.0
      %1759 = vmatpush1.msra.mxu0 0.0
      %1760 = vmatprep.subr.mxu0 0.0
      %1761 = vmatpush1.msra.mxu0 0.0
      %1762 = vmatprep.subr.mxu0 0.0
      %1763 = vmatpush1.msra.mxu0 0.0
      %1764 = vmatprep.subr.mxu0 0.0
      %1765 = vmatpush1.msra.mxu0 0.0
      %1766 = vmatprep.subr.mxu0 0.0
      %1767 = vmatpush1.msra.mxu0 0.0
      %1768 = vmatprep.subr.mxu0 0.0
      %1769 = vmatpush1.msra.mxu0 0.0
      %1770 = vmatprep.mubr.f32.mxu0 0.0
      %1771 = vmatmul.mubr.f32.gmra.mrb[0].mxu0 %v1608
      %v1772 = vpop.f32.mrb[0].mxu0
      %v1773 = vadd.f32 0.0, %v1772
      %v1774 = vpop.f32.mrb[0].mxu0
      %1775 = vmatprep.mubr.f32.mxu0 0.0
      %1776 = vmatmul.mubr.f32.gmra.mrb[0].mxu0 %v1611
      %v1777 = vpop.f32.mrb[0].mxu0
      %v1778 = vadd.f32 0.0, %v1777
      %v1779 = vpop.f32.mrb[0].mxu0
      %1780 = vmatprep.mubr.f32.mxu0 0.0
      %1781 = vmatmul.mubr.f32.gmra.mrb[0].mxu0 %v1614
      %v1782 = vpop.f32.mrb[0].mxu0
      %v1783 = vadd.f32 0.0, %v1782
      %v1784 = vpop.f32.mrb[0].mxu0
      %1785 = vmatprep.mubr.f32.mxu0 0.0
      %1786 = vmatmul.mubr.f32.gmra.mrb[0].mxu0 %v1617
      %v1787 = vpop.f32.mrb[0].mxu0
      %v1788 = vadd.f32 0.0, %v1787
      %v1789 = vpop.f32.mrb[0].mxu0
      %1790 = vmatprep.mubr.f32.mxu0 0.0
      %1791 = vmatmul.mubr.f32.gmra.mrb[0].mxu0 %v1620
      %v1792 = vpop.f32.mrb[0].mxu0
      %v1793 = vadd.f32 0.0, %v1792
      %v1794 = vpop.f32.mrb[0].mxu0
      %1795 = vmatprep.mubr.f32.mxu0 0.0
      %1796 = vmatmul.mubr.f32.gmra.mrb[0].mxu0 %v1623
      %v1797 = vpop.f32.mrb[0].mxu0
      %v1798 = vadd.f32 0.0, %v1797
      %v1799 = vpop.f32.mrb[0].mxu0
      %1800 = vmatprep.mubr.f32.mxu0 0.0
      %1801 = vmatmul.mubr.f32.gmra.mrb[0].mxu0 %v1626
      %v1802 = vpop.f32.mrb[0].mxu0
      %v1803 = vadd.f32 0.0, %v1802
      %v1804 = vpop.f32.mrb[0].mxu0
      %1805 = vmatprep.mubr.f32.mxu0 0.0
      %1806 = vmatmul.mubr.f32.gmra.mrb[0].mxu0 %v1629
      %v1807 = vpop.f32.mrb[0].mxu0
      %v1808 = vadd.f32 0.0, %v1807
      %v1809 = vpop.f32.mrb[0].mxu0
      %1810 = vmatprep.mubr.f32.mxu0 0.0
      %1811 = vmatmul.mubr.f32.gmra.mrb[0].mxu0 %v1632
      %v1812 = vpop.f32.mrb[0].mxu0
      %v1813 = vadd.f32 0.0, %v1812
      %v1814 = vpop.f32.mrb[0].mxu0
      %1815 = vmatprep.mubr.f32.mxu0 0.0
      %1816 = vmatmul.mubr.f32.gmra.mrb[0].mxu0 %v1635
      %v1817 = vpop.f32.mrb[0].mxu0
      %v1818 = vadd.f32 0.0, %v1817
      %v1819 = vpop.f32.mrb[0].mxu0
      %1820 = vmatprep.mubr.f32.mxu0 0.0
      %1821 = vmatmul.mubr.f32.gmra.mrb[0].mxu0 %v1638
      %v1822 = vpop.f32.mrb[0].mxu0
      %v1823 = vadd.f32 0.0, %v1822
      %v1824 = vpop.f32.mrb[0].mxu0
      %1825 = vmatprep.mubr.f32.mxu0 0.0
      %1826 = vmatmul.mubr.f32.gmra.mrb[0].mxu0 %v1641
      %v1827 = vpop.f32.mrb[0].mxu0
      %v1828 = vadd.f32 0.0, %v1827
      %v1829 = vpop.f32.mrb[0].mxu0
      %1830 = vmatprep.mubr.f32.mxu0 0.0
      %1831 = vmatmul.mubr.f32.gmra.mrb[0].mxu0 %v1644
      %v1832 = vpop.f32.mrb[0].mxu0
      %v1833 = vadd.f32 0.0, %v1832
      %v1834 = vpop.f32.mrb[0].mxu0
      %1835 = vmatprep.mubr.f32.mxu0 0.0
      %1836 = vmatmul.mubr.f32.gmra.mrb[0].mxu0 %v1647
      %v1837 = vpop.f32.mrb[0].mxu0
      %v1838 = vadd.f32 0.0, %v1837
      %v1839 = vpop.f32.mrb[0].mxu0
      %1840 = vmatprep.mubr.f32.mxu0 0.0
      %1841 = vmatmul.mubr.f32.gmra.mrb[0].mxu0 %v1650
      %v1842 = vpop.f32.mrb[0].mxu0
      %v1843 = vadd.f32 0.0, %v1842
      %v1844 = vpop.f32.mrb[0].mxu0
      %1845 = vmatprep.mubr.f32.mxu0 0.0
      %1846 = vmatmul.mubr.f32.gmra.mrb[0].mxu0 %v1653
      %v1847 = vpop.f32.mrb[0].mxu0
      %v1848 = vadd.f32 0.0, %v1847
      %v1849 = vpop.f32.mrb[0].mxu0
      %1850 = vmatprep.mubr.f32.mxu0 0.0
      %1851 = vmatmul.mubr.f32.gmra.mrb[0].mxu0 %v1656
      %v1852 = vpop.f32.mrb[0].mxu0
      %v1853 = vadd.f32 0.0, %v1852
      %v1854 = vpop.f32.mrb[0].mxu0
      %1855 = vmatprep.mubr.f32.mxu0 0.0
      %1856 = vmatmul.mubr.f32.gmra.mrb[0].mxu0 %v1659
      %v1857 = vpop.f32.mrb[0].mxu0
      %v1858 = vadd.f32 0.0, %v1857
      %v1859 = vpop.f32.mrb[0].mxu0
      %1860 = vmatprep.mubr.f32.mxu0 0.0
      %1861 = vmatmul.mubr.f32.gmra.mrb[0].mxu0 %v1662
      %v1862 = vpop.f32.mrb[0].mxu0
      %v1863 = vadd.f32 0.0, %v1862
      %v1864 = vpop.f32.mrb[0].mxu0
      %1865 = vmatprep.mubr.f32.mxu0 0.0
      %1866 = vmatmul.mubr.f32.gmra.mrb[0].mxu0 %v1665
      %v1867 = vpop.f32.mrb[0].mxu0
      %v1868 = vadd.f32 0.0, %v1867
      %v1869 = vpop.f32.mrb[0].mxu0
      %1870 = vmatprep.mubr.f32.mxu0 0.0
      %1871 = vmatmul.mubr.f32.gmra.mrb[0].mxu0 %v1668
      %v1872 = vpop.f32.mrb[0].mxu0
      %v1873 = vadd.f32 0.0, %v1872
      %v1874 = vpop.f32.mrb[0].mxu0
      %1875 = vmatprep.mubr.f32.mxu0 0.0
      %1876 = vmatmul.mubr.f32.gmra.mrb[0].mxu0 %v1671
      %v1877 = vpop.f32.mrb[0].mxu0
      %v1878 = vadd.f32 0.0, %v1877
      %v1879 = vpop.f32.mrb[0].mxu0
      %1880 = vmatprep.mubr.f32.mxu0 0.0
      %1881 = vmatmul.mubr.f32.gmra.mrb[0].mxu0 %v1674
      %v1882 = vpop.f32.mrb[0].mxu0
      %v1883 = vadd.f32 0.0, %v1882
      %v1884 = vpop.f32.mrb[0].mxu0
      %1885 = vmatprep.mubr.f32.mxu0 0.0
      %1886 = vmatmul.mubr.f32.gmra.mrb[0].mxu0 %v1677
      %v1887 = vpop.f32.mrb[0].mxu0
      %v1888 = vadd.f32 0.0, %v1887
      %v1889 = vpop.f32.mrb[0].mxu0
      %1890 = vmatprep.mubr.f32.mxu0 0.0
      %1891 = vmatmul.mubr.f32.gmra.mrb[0].mxu0 %v1680
      %v1892 = vpop.f32.mrb[0].mxu0
      %v1893 = vadd.f32 0.0, %v1892
      %v1894 = vpop.f32.mrb[0].mxu0
      %1895 = vmatprep.mubr.f32.mxu0 0.0
      %1896 = vmatmul.mubr.f32.gmra.mrb[0].mxu0 %v1683
      %v1897 = vpop.f32.mrb[0].mxu0
      %v1898 = vadd.f32 0.0, %v1897
      %v1899 = vpop.f32.mrb[0].mxu0
      %1900 = vmatprep.mubr.f32.mxu0 0.0
      %1901 = vmatmul.mubr.f32.gmra.mrb[0].mxu0 %v1686
      %v1902 = vpop.f32.mrb[0].mxu0
      %v1903 = vadd.f32 0.0, %v1902
      %v1904 = vpop.f32.mrb[0].mxu0
      %1905 = vmatprep.mubr.f32.mxu0 0.0
      %1906 = vmatmul.mubr.f32.gmra.mrb[0].mxu0 %v1689
      %v1907 = vpop.f32.mrb[0].mxu0
      %v1908 = vadd.f32 0.0, %v1907
      %v1909 = vpop.f32.mrb[0].mxu0
      %1910 = vmatprep.mubr.f32.mxu0 0.0
      %1911 = vmatmul.mubr.f32.gmra.mrb[0].mxu0 %v1692
      %v1912 = vpop.f32.mrb[0].mxu0
      %v1913 = vadd.f32 0.0, %v1912
      %v1914 = vpop.f32.mrb[0].mxu0
      %1915 = vmatprep.mubr.f32.mxu0 0.0
      %1916 = vmatmul.mubr.f32.gmra.mrb[0].mxu0 %v1695
      %v1917 = vpop.f32.mrb[0].mxu0
      %v1918 = vadd.f32 0.0, %v1917
      %v1919 = vpop.f32.mrb[0].mxu0
      %1920 = vmatprep.mubr.f32.mxu0 0.0
      %1921 = vmatmul.mubr.f32.gmra.mrb[0].mxu0 %v1698
      %v1922 = vpop.f32.mrb[0].mxu0
      %v1923 = vadd.f32 0.0, %v1922
      %v1924 = vpop.f32.mrb[0].mxu0
      %1925 = vmatprep.mubr.f32.mxu0 0.0
      %1926 = vmatmul.mubr.f32.gmra.mrb[0].mxu0 %v1701
      %v1927 = vpop.f32.mrb[0].mxu0
      %v1928 = vadd.f32 0.0, %v1927
      %v1929 = vpop.f32.mrb[0].mxu0
      %1930 = vdwg.mxu0
      %v1931 = vadd.f32 %v1575, %v1773
      %v1932 = vadd.f32 %v1576, %v1778
      %v1933 = vadd.f32 %v1577, %v1783
      %v1934 = vadd.f32 %v1578, %v1788
      %v1935 = vadd.f32 %v1579, %v1793
      %v1936 = vadd.f32 %v1580, %v1798
      %v1937 = vadd.f32 %v1581, %v1803
      %v1938 = vadd.f32 %v1582, %v1808
      %v1939 = vadd.f32 %v1583, %v1813
      %v1940 = vadd.f32 %v1584, %v1818
      %v1941 = vadd.f32 %v1585, %v1823
      %v1942 = vadd.f32 %v1586, %v1828
      %v1943 = vadd.f32 %v1587, %v1833
      %v1944 = vadd.f32 %v1588, %v1838
      %v1945 = vadd.f32 %v1589, %v1843
      %v1946 = vadd.f32 %v1590, %v1848
      %v1947 = vadd.f32 %v1591, %v1853
      %v1948 = vadd.f32 %v1592, %v1858
      %v1949 = vadd.f32 %v1593, %v1863
      %v1950 = vadd.f32 %v1594, %v1868
      %v1951 = vadd.f32 %v1595, %v1873
      %v1952 = vadd.f32 %v1596, %v1878
      %v1953 = vadd.f32 %v1597, %v1883
      %v1954 = vadd.f32 %v1598, %v1888
      %v1955 = vadd.f32 %v1599, %v1893
      %v1956 = vadd.f32 %v1600, %v1898
      %v1957 = vadd.f32 %v1601, %v1903
      %v1958 = vadd.f32 %v1602, %v1908
      %v1959 = vadd.f32 %v1603, %v1913
      %v1960 = vadd.f32 %v1604, %v1918
      %v1961 = vadd.f32 %v1605, %v1923
      %v1962 = vadd.f32 %v1606, %v1928
      %1963 = vst.msk [vmem:[#allocation2] sm:$0xff] %vm144, %v1931
      %1964 = vst.msk [vmem:[#allocation2 + $0x8] sm:$0xff] %vm144, %v1932
      %1965 = vst.msk [vmem:[#allocation2 + $0x10] sm:$0xff] %vm144, %v1933
      %1966 = vst.msk [vmem:[#allocation2 + $0x18] sm:$0xff] %vm144, %v1934
      %1967 = vst.msk [vmem:[#allocation2 + $0x20] sm:$0xff] %vm144, %v1935
      %1968 = vst.msk [vmem:[#allocation2 + $0x28] sm:$0xff] %vm144, %v1936
      %1969 = vst.msk [vmem:[#allocation2 + $0x30] sm:$0xff] %vm144, %v1937
      %1970 = vst.msk [vmem:[#allocation2 + $0x38] sm:$0xff] %vm144, %v1938
      %1971 = vst.msk [vmem:[#allocation2 + $0x40] sm:$0xff] %vm144, %v1939
      %1972 = vst.msk [vmem:[#allocation2 + $0x48] sm:$0xff] %vm144, %v1940
      %1973 = vst.msk [vmem:[#allocation2 + $0x50] sm:$0xff] %vm144, %v1941
      %1974 = vst.msk [vmem:[#allocation2 + $0x58] sm:$0xff] %vm144, %v1942
      %1975 = vst.msk [vmem:[#allocation2 + $0x60] sm:$0xff] %vm144, %v1943
      %1976 = vst.msk [vmem:[#allocation2 + $0x68] sm:$0xff] %vm144, %v1944
      %1977 = vst.msk [vmem:[#allocation2 + $0x70] sm:$0xff] %vm144, %v1945
      %1978 = vst.msk [vmem:[#allocation2 + $0x78] sm:$0xff] %vm144, %v1946
      %1979 = vst.msk [vmem:[#allocation2 + $0x80] sm:$0xff] %vm144, %v1947
      %1980 = vst.msk [vmem:[#allocation2 + $0x88] sm:$0xff] %vm144, %v1948
      %1981 = vst.msk [vmem:[#allocation2 + $0x90] sm:$0xff] %vm144, %v1949
      %1982 = vst.msk [vmem:[#allocation2 + $0x98] sm:$0xff] %vm144, %v1950
      %1983 = vst.msk [vmem:[#allocation2 + $0xa0] sm:$0xff] %vm144, %v1951
      %1984 = vst.msk [vmem:[#allocation2 + $0xa8] sm:$0xff] %vm144, %v1952
      %1985 = vst.msk [vmem:[#allocation2 + $0xb0] sm:$0xff] %vm144, %v1953
      %1986 = vst.msk [vmem:[#allocation2 + $0xb8] sm:$0xff] %vm144, %v1954
      %1987 = vst.msk [vmem:[#allocation2 + $0xc0] sm:$0xff] %vm144, %v1955
      %1988 = vst.msk [vmem:[#allocation2 + $0xc8] sm:$0xff] %vm144, %v1956
      %1989 = vst.msk [vmem:[#allocation2 + $0xd0] sm:$0xff] %vm144, %v1957
      %1990 = vst.msk [vmem:[#allocation2 + $0xd8] sm:$0xff] %vm144, %v1958
      %1991 = vst.msk [vmem:[#allocation2 + $0xe0] sm:$0xff] %vm144, %v1959
      %1992 = vst.msk [vmem:[#allocation2 + $0xe8] sm:$0xff] %vm144, %v1960
      %1993 = vst.msk [vmem:[#allocation2 + $0xf0] sm:$0xff] %vm144, %v1961
      %1994 = vst.msk [vmem:[#allocation2 + $0xf8] sm:$0xff] %vm144, %v1962
      %v1995 = vld [vmem:[%s1540 + $0x1] sm:$0xff]
      %v1996 = vld [vmem:[%s1540 + $0x9] sm:$0xff]
      %v1997 = vld [vmem:[%s1540 + $0x19] sm:$0xff]
      %v1998 = vld [vmem:[%s1540 + $0x21] sm:$0xff]
      %v1999 = vld [vmem:[%s1540 + $0x31] sm:$0xff]
      %v2000 = vld [vmem:[%s1540 + $0x39] sm:$0xff]
      %v2001 = vld [vmem:[%s1540 + $0x49] sm:$0xff]
      %v2002 = vld [vmem:[%s1540 + $0x51] sm:$0xff]
      %v2003 = vld [vmem:[%s1540 + $0x61] sm:$0xff]
      %v2004 = vld [vmem:[%s1540 + $0x69] sm:$0xff]
      %v2005 = vld [vmem:[%s1540 + $0x79] sm:$0xff]
      %v2006 = vld [vmem:[%s1540 + $0x81] sm:$0xff]
      %v2007 = vld [vmem:[%s1540 + $0x91] sm:$0xff]
      %v2008 = vld [vmem:[%s1540 + $0x99] sm:$0xff]
      %v2009 = vld [vmem:[%s1540 + $0xa9] sm:$0xff]
      %v2010 = vld [vmem:[%s1540 + $0xb1] sm:$0xff]
      %v2011 = vld [vmem:[%s1540 + $0xc1] sm:$0xff]
      %v2012 = vld [vmem:[%s1540 + $0xc9] sm:$0xff]
      %v2013 = vld [vmem:[%s1540 + $0xd9] sm:$0xff]
      %v2014 = vld [vmem:[%s1540 + $0xe1] sm:$0xff]
      %v2015 = vld [vmem:[%s1540 + $0xf1] sm:$0xff]
      %v2016 = vld [vmem:[%s1540 + $0xf9] sm:$0xff]
      %v2017 = vld [vmem:[%s1540 + $0x109] sm:$0xff]
      %v2018 = vld [vmem:[%s1540 + $0x111] sm:$0xff]
      %v2019 = vld [vmem:[%s1540 + $0x121] sm:$0xff]
      %v2020 = vld [vmem:[%s1540 + $0x129] sm:$0xff]
      %v2021 = vld [vmem:[%s1540 + $0x139] sm:$0xff]
      %v2022 = vld [vmem:[%s1540 + $0x141] sm:$0xff]
      %v2023 = vld [vmem:[%s1540 + $0x151] sm:$0xff]
      %v2024 = vld [vmem:[%s1540 + $0x159] sm:$0xff]
      %v2025 = vld [vmem:[%s1540 + $0x169] sm:$0xff]
      %v2026 = vld [vmem:[%s1540 + $0x171] sm:$0xff]
      %s2027 = scalar_lea.vmem %s1, 16
      %v2028 = vld [vmem:[%s2027] sm:$0xf]
      %v2029 = vld [vmem:[#allocation2] sm:$0xff]
      %v2030 = vld [vmem:[#allocation2 + $0x8] sm:$0xff]
      %v2031 = vld [vmem:[#allocation2 + $0x10] sm:$0xff]
      %v2032 = vld [vmem:[#allocation2 + $0x18] sm:$0xff]
      %v2033 = vld [vmem:[#allocation2 + $0x20] sm:$0xff]
      %v2034 = vld [vmem:[#allocation2 + $0x28] sm:$0xff]
      %v2035 = vld [vmem:[#allocation2 + $0x30] sm:$0xff]
      %v2036 = vld [vmem:[#allocation2 + $0x38] sm:$0xff]
      %v2037 = vld [vmem:[#allocation2 + $0x40] sm:$0xff]
      %v2038 = vld [vmem:[#allocation2 + $0x48] sm:$0xff]
      %v2039 = vld [vmem:[#allocation2 + $0x50] sm:$0xff]
      %v2040 = vld [vmem:[#allocation2 + $0x58] sm:$0xff]
      %v2041 = vld [vmem:[#allocation2 + $0x60] sm:$0xff]
      %v2042 = vld [vmem:[#allocation2 + $0x68] sm:$0xff]
      %v2043 = vld [vmem:[#allocation2 + $0x70] sm:$0xff]
      %v2044 = vld [vmem:[#allocation2 + $0x78] sm:$0xff]
      %v2045 = vld [vmem:[#allocation2 + $0x80] sm:$0xff]
      %v2046 = vld [vmem:[#allocation2 + $0x88] sm:$0xff]
      %v2047 = vld [vmem:[#allocation2 + $0x90] sm:$0xff]
      %v2048 = vld [vmem:[#allocation2 + $0x98] sm:$0xff]
      %v2049 = vld [vmem:[#allocation2 + $0xa0] sm:$0xff]
      %v2050 = vld [vmem:[#allocation2 + $0xa8] sm:$0xff]
      %v2051 = vld [vmem:[#allocation2 + $0xb0] sm:$0xff]
      %v2052 = vld [vmem:[#allocation2 + $0xb8] sm:$0xff]
      %v2053 = vld [vmem:[#allocation2 + $0xc0] sm:$0xff]
      %v2054 = vld [vmem:[#allocation2 + $0xc8] sm:$0xff]
      %v2055 = vld [vmem:[#allocation2 + $0xd0] sm:$0xff]
      %v2056 = vld [vmem:[#allocation2 + $0xd8] sm:$0xff]
      %v2057 = vld [vmem:[#allocation2 + $0xe0] sm:$0xff]
      %v2058 = vld [vmem:[#allocation2 + $0xe8] sm:$0xff]
      %v2059 = vld [vmem:[#allocation2 + $0xf0] sm:$0xff]
      %v2060 = vld [vmem:[#allocation2 + $0xf8] sm:$0xff]
      %v2062 = vsel %vm242, %v1995, 0
      %v2065 = vsel %vm242, %v1996, 0
      %v2068 = vsel %vm242, %v1997, 0
      %v2071 = vsel %vm242, %v1998, 0
      %v2074 = vsel %vm242, %v1999, 0
      %v2077 = vsel %vm242, %v2000, 0
      %v2080 = vsel %vm242, %v2001, 0
      %v2083 = vsel %vm242, %v2002, 0
      %v2086 = vsel %vm242, %v2003, 0
      %v2089 = vsel %vm242, %v2004, 0
      %v2092 = vsel %vm242, %v2005, 0
      %v2095 = vsel %vm242, %v2006, 0
      %v2098 = vsel %vm242, %v2007, 0
      %v2101 = vsel %vm242, %v2008, 0
      %v2104 = vsel %vm242, %v2009, 0
      %v2107 = vsel %vm242, %v2010, 0
      %v2110 = vsel %vm242, %v2011, 0
      %v2113 = vsel %vm242, %v2012, 0
      %v2116 = vsel %vm242, %v2013, 0
      %v2119 = vsel %vm242, %v2014, 0
      %v2122 = vsel %vm242, %v2015, 0
      %v2125 = vsel %vm242, %v2016, 0
      %v2128 = vsel %vm242, %v2017, 0
      %v2131 = vsel %vm242, %v2018, 0
      %v2134 = vsel %vm242, %v2019, 0
      %v2137 = vsel %vm242, %v2020, 0
      %v2140 = vsel %vm242, %v2021, 0
      %v2143 = vsel %vm242, %v2022, 0
      %v2146 = vsel %vm242, %v2023, 0
      %v2149 = vsel %vm242, %v2024, 0
      %v2152 = vsel %vm242, %v2025, 0
      %v2155 = vsel %vm242, %v2026, 0
      %v2158 = vsel %vm339, %v2028, 0
      %2160 = vmatprep.subr.mxu0 0.0
      %2161 = vmatpush1.msra.mxu0 %v2158
      %2162 = vmatprep.subr.mxu0 0.0
      %2163 = vmatpush1.msra.mxu0 0.0
      %2164 = vmatprep.subr.mxu0 0.0
      %2165 = vmatpush1.msra.mxu0 0.0
      %2166 = vmatprep.subr.mxu0 0.0
      %2167 = vmatpush1.msra.mxu0 0.0
      %2168 = vmatprep.subr.mxu0 0.0
      %2169 = vmatpush1.msra.mxu0 0.0
      %2170 = vmatprep.subr.mxu0 0.0
      %2171 = vmatpush1.msra.mxu0 0.0
      %2172 = vmatprep.subr.mxu0 0.0
      %2173 = vmatpush1.msra.mxu0 0.0
      %2174 = vmatprep.subr.mxu0 0.0
      %2175 = vmatpush1.msra.mxu0 0.0
      %2176 = vmatprep.subr.mxu0 0.0
      %2177 = vmatpush1.msra.mxu0 0.0
      %2178 = vmatprep.subr.mxu0 0.0
      %2179 = vmatpush1.msra.mxu0 0.0
      %2180 = vmatprep.subr.mxu0 0.0
      %2181 = vmatpush1.msra.mxu0 0.0
      %2182 = vmatprep.subr.mxu0 0.0
      %2183 = vmatpush1.msra.mxu0 0.0
      %2184 = vmatprep.subr.mxu0 0.0
      %2185 = vmatpush1.msra.mxu0 0.0
      %2186 = vmatprep.subr.mxu0 0.0
      %2187 = vmatpush1.msra.mxu0 0.0
      %2188 = vmatprep.subr.mxu0 0.0
      %2189 = vmatpush1.msra.mxu0 0.0
      %2190 = vmatprep.subr.mxu0 0.0
      %2191 = vmatpush1.msra.mxu0 0.0
      %2192 = vmatprep.subr.mxu0 0.0
      %2193 = vmatpush1.msra.mxu0 0.0
      %2194 = vmatprep.subr.mxu0 0.0
      %2195 = vmatpush1.msra.mxu0 0.0
      %2196 = vmatprep.subr.mxu0 0.0
      %2197 = vmatpush1.msra.mxu0 0.0
      %2198 = vmatprep.subr.mxu0 0.0
      %2199 = vmatpush1.msra.mxu0 0.0
      %2200 = vmatprep.subr.mxu0 0.0
      %2201 = vmatpush1.msra.mxu0 0.0
      %2202 = vmatprep.subr.mxu0 0.0
      %2203 = vmatpush1.msra.mxu0 0.0
      %2204 = vmatprep.subr.mxu0 0.0
      %2205 = vmatpush1.msra.mxu0 0.0
      %2206 = vmatprep.subr.mxu0 0.0
      %2207 = vmatpush1.msra.mxu0 0.0
      %2208 = vmatprep.subr.mxu0 0.0
      %2209 = vmatpush1.msra.mxu0 0.0
      %2210 = vmatprep.subr.mxu0 0.0
      %2211 = vmatpush1.msra.mxu0 0.0
      %2212 = vmatprep.subr.mxu0 0.0
      %2213 = vmatpush1.msra.mxu0 0.0
      %2214 = vmatprep.subr.mxu0 0.0
      %2215 = vmatpush1.msra.mxu0 0.0
      %2216 = vmatprep.subr.mxu0 0.0
      %2217 = vmatpush1.msra.mxu0 0.0
      %2218 = vmatprep.subr.mxu0 0.0
      %2219 = vmatpush1.msra.mxu0 0.0
      %2220 = vmatprep.subr.mxu0 0.0
      %2221 = vmatpush1.msra.mxu0 0.0
      %2222 = vmatprep.subr.mxu0 0.0
      %2223 = vmatpush1.msra.mxu0 0.0
      %2224 = vmatprep.mubr.f32.mxu0 0.0
      %2225 = vmatmul.mubr.f32.gmra.mrb[0].mxu0 %v2062
      %v2226 = vpop.f32.mrb[0].mxu0
      %v2227 = vadd.f32 0.0, %v2226
      %v2228 = vpop.f32.mrb[0].mxu0
      %2229 = vmatprep.mubr.f32.mxu0 0.0
      %2230 = vmatmul.mubr.f32.gmra.mrb[0].mxu0 %v2065
      %v2231 = vpop.f32.mrb[0].mxu0
      %v2232 = vadd.f32 0.0, %v2231
      %v2233 = vpop.f32.mrb[0].mxu0
      %2234 = vmatprep.mubr.f32.mxu0 0.0
      %2235 = vmatmul.mubr.f32.gmra.mrb[0].mxu0 %v2068
      %v2236 = vpop.f32.mrb[0].mxu0
      %v2237 = vadd.f32 0.0, %v2236
      %v2238 = vpop.f32.mrb[0].mxu0
      %2239 = vmatprep.mubr.f32.mxu0 0.0
      %2240 = vmatmul.mubr.f32.gmra.mrb[0].mxu0 %v2071
      %v2241 = vpop.f32.mrb[0].mxu0
      %v2242 = vadd.f32 0.0, %v2241
      %v2243 = vpop.f32.mrb[0].mxu0
      %2244 = vmatprep.mubr.f32.mxu0 0.0
      %2245 = vmatmul.mubr.f32.gmra.mrb[0].mxu0 %v2074
      %v2246 = vpop.f32.mrb[0].mxu0
      %v2247 = vadd.f32 0.0, %v2246
      %v2248 = vpop.f32.mrb[0].mxu0
      %2249 = vmatprep.mubr.f32.mxu0 0.0
      %2250 = vmatmul.mubr.f32.gmra.mrb[0].mxu0 %v2077
      %v2251 = vpop.f32.mrb[0].mxu0
      %v2252 = vadd.f32 0.0, %v2251
      %v2253 = vpop.f32.mrb[0].mxu0
      %2254 = vmatprep.mubr.f32.mxu0 0.0
      %2255 = vmatmul.mubr.f32.gmra.mrb[0].mxu0 %v2080
      %v2256 = vpop.f32.mrb[0].mxu0
      %v2257 = vadd.f32 0.0, %v2256
      %v2258 = vpop.f32.mrb[0].mxu0
      %2259 = vmatprep.mubr.f32.mxu0 0.0
      %2260 = vmatmul.mubr.f32.gmra.mrb[0].mxu0 %v2083
      %v2261 = vpop.f32.mrb[0].mxu0
      %v2262 = vadd.f32 0.0, %v2261
      %v2263 = vpop.f32.mrb[0].mxu0
      %2264 = vmatprep.mubr.f32.mxu0 0.0
      %2265 = vmatmul.mubr.f32.gmra.mrb[0].mxu0 %v2086
      %v2266 = vpop.f32.mrb[0].mxu0
      %v2267 = vadd.f32 0.0, %v2266
      %v2268 = vpop.f32.mrb[0].mxu0
      %2269 = vmatprep.mubr.f32.mxu0 0.0
      %2270 = vmatmul.mubr.f32.gmra.mrb[0].mxu0 %v2089
      %v2271 = vpop.f32.mrb[0].mxu0
      %v2272 = vadd.f32 0.0, %v2271
      %v2273 = vpop.f32.mrb[0].mxu0
      %2274 = vmatprep.mubr.f32.mxu0 0.0
      %2275 = vmatmul.mubr.f32.gmra.mrb[0].mxu0 %v2092
      %v2276 = vpop.f32.mrb[0].mxu0
      %v2277 = vadd.f32 0.0, %v2276
      %v2278 = vpop.f32.mrb[0].mxu0
      %2279 = vmatprep.mubr.f32.mxu0 0.0
      %2280 = vmatmul.mubr.f32.gmra.mrb[0].mxu0 %v2095
      %v2281 = vpop.f32.mrb[0].mxu0
      %v2282 = vadd.f32 0.0, %v2281
      %v2283 = vpop.f32.mrb[0].mxu0
      %2284 = vmatprep.mubr.f32.mxu0 0.0
      %2285 = vmatmul.mubr.f32.gmra.mrb[0].mxu0 %v2098
      %v2286 = vpop.f32.mrb[0].mxu0
      %v2287 = vadd.f32 0.0, %v2286
      %v2288 = vpop.f32.mrb[0].mxu0
      %2289 = vmatprep.mubr.f32.mxu0 0.0
      %2290 = vmatmul.mubr.f32.gmra.mrb[0].mxu0 %v2101
      %v2291 = vpop.f32.mrb[0].mxu0
      %v2292 = vadd.f32 0.0, %v2291
      %v2293 = vpop.f32.mrb[0].mxu0
      %2294 = vmatprep.mubr.f32.mxu0 0.0
      %2295 = vmatmul.mubr.f32.gmra.mrb[0].mxu0 %v2104
      %v2296 = vpop.f32.mrb[0].mxu0
      %v2297 = vadd.f32 0.0, %v2296
      %v2298 = vpop.f32.mrb[0].mxu0
      %2299 = vmatprep.mubr.f32.mxu0 0.0
      %2300 = vmatmul.mubr.f32.gmra.mrb[0].mxu0 %v2107
      %v2301 = vpop.f32.mrb[0].mxu0
      %v2302 = vadd.f32 0.0, %v2301
      %v2303 = vpop.f32.mrb[0].mxu0
      %2304 = vmatprep.mubr.f32.mxu0 0.0
      %2305 = vmatmul.mubr.f32.gmra.mrb[0].mxu0 %v2110
      %v2306 = vpop.f32.mrb[0].mxu0
      %v2307 = vadd.f32 0.0, %v2306
      %v2308 = vpop.f32.mrb[0].mxu0
      %2309 = vmatprep.mubr.f32.mxu0 0.0
      %2310 = vmatmul.mubr.f32.gmra.mrb[0].mxu0 %v2113
      %v2311 = vpop.f32.mrb[0].mxu0
      %v2312 = vadd.f32 0.0, %v2311
      %v2313 = vpop.f32.mrb[0].mxu0
      %2314 = vmatprep.mubr.f32.mxu0 0.0
      %2315 = vmatmul.mubr.f32.gmra.mrb[0].mxu0 %v2116
      %v2316 = vpop.f32.mrb[0].mxu0
      %v2317 = vadd.f32 0.0, %v2316
      %v2318 = vpop.f32.mrb[0].mxu0
      %2319 = vmatprep.mubr.f32.mxu0 0.0
      %2320 = vmatmul.mubr.f32.gmra.mrb[0].mxu0 %v2119
      %v2321 = vpop.f32.mrb[0].mxu0
      %v2322 = vadd.f32 0.0, %v2321
      %v2323 = vpop.f32.mrb[0].mxu0
      %2324 = vmatprep.mubr.f32.mxu0 0.0
      %2325 = vmatmul.mubr.f32.gmra.mrb[0].mxu0 %v2122
      %v2326 = vpop.f32.mrb[0].mxu0
      %v2327 = vadd.f32 0.0, %v2326
      %v2328 = vpop.f32.mrb[0].mxu0
      %2329 = vmatprep.mubr.f32.mxu0 0.0
      %2330 = vmatmul.mubr.f32.gmra.mrb[0].mxu0 %v2125
      %v2331 = vpop.f32.mrb[0].mxu0
      %v2332 = vadd.f32 0.0, %v2331
      %v2333 = vpop.f32.mrb[0].mxu0
      %2334 = vmatprep.mubr.f32.mxu0 0.0
      %2335 = vmatmul.mubr.f32.gmra.mrb[0].mxu0 %v2128
      %v2336 = vpop.f32.mrb[0].mxu0
      %v2337 = vadd.f32 0.0, %v2336
      %v2338 = vpop.f32.mrb[0].mxu0
      %2339 = vmatprep.mubr.f32.mxu0 0.0
      %2340 = vmatmul.mubr.f32.gmra.mrb[0].mxu0 %v2131
      %v2341 = vpop.f32.mrb[0].mxu0
      %v2342 = vadd.f32 0.0, %v2341
      %v2343 = vpop.f32.mrb[0].mxu0
      %2344 = vmatprep.mubr.f32.mxu0 0.0
      %2345 = vmatmul.mubr.f32.gmra.mrb[0].mxu0 %v2134
      %v2346 = vpop.f32.mrb[0].mxu0
      %v2347 = vadd.f32 0.0, %v2346
      %v2348 = vpop.f32.mrb[0].mxu0
      %2349 = vmatprep.mubr.f32.mxu0 0.0
      %2350 = vmatmul.mubr.f32.gmra.mrb[0].mxu0 %v2137
      %v2351 = vpop.f32.mrb[0].mxu0
      %v2352 = vadd.f32 0.0, %v2351
      %v2353 = vpop.f32.mrb[0].mxu0
      %2354 = vmatprep.mubr.f32.mxu0 0.0
      %2355 = vmatmul.mubr.f32.gmra.mrb[0].mxu0 %v2140
      %v2356 = vpop.f32.mrb[0].mxu0
      %v2357 = vadd.f32 0.0, %v2356
      %v2358 = vpop.f32.mrb[0].mxu0
      %2359 = vmatprep.mubr.f32.mxu0 0.0
      %2360 = vmatmul.mubr.f32.gmra.mrb[0].mxu0 %v2143
      %v2361 = vpop.f32.mrb[0].mxu0
      %v2362 = vadd.f32 0.0, %v2361
      %v2363 = vpop.f32.mrb[0].mxu0
      %2364 = vmatprep.mubr.f32.mxu0 0.0
      %2365 = vmatmul.mubr.f32.gmra.mrb[0].mxu0 %v2146
      %v2366 = vpop.f32.mrb[0].mxu0
      %v2367 = vadd.f32 0.0, %v2366
      %v2368 = vpop.f32.mrb[0].mxu0
      %2369 = vmatprep.mubr.f32.mxu0 0.0
      %2370 = vmatmul.mubr.f32.gmra.mrb[0].mxu0 %v2149
      %v2371 = vpop.f32.mrb[0].mxu0
      %v2372 = vadd.f32 0.0, %v2371
      %v2373 = vpop.f32.mrb[0].mxu0
      %2374 = vmatprep.mubr.f32.mxu0 0.0
      %2375 = vmatmul.mubr.f32.gmra.mrb[0].mxu0 %v2152
      %v2376 = vpop.f32.mrb[0].mxu0
      %v2377 = vadd.f32 0.0, %v2376
      %v2378 = vpop.f32.mrb[0].mxu0
      %2379 = vmatprep.mubr.f32.mxu0 0.0
      %2380 = vmatmul.mubr.f32.gmra.mrb[0].mxu0 %v2155
      %v2381 = vpop.f32.mrb[0].mxu0
      %v2382 = vadd.f32 0.0, %v2381
      %v2383 = vpop.f32.mrb[0].mxu0
      %2384 = vdwg.mxu0
      %v2385 = vadd.f32 %v2029, %v2227
      %v2386 = vadd.f32 %v2030, %v2232
      %v2387 = vadd.f32 %v2031, %v2237
      %v2388 = vadd.f32 %v2032, %v2242
      %v2389 = vadd.f32 %v2033, %v2247
      %v2390 = vadd.f32 %v2034, %v2252
      %v2391 = vadd.f32 %v2035, %v2257
      %v2392 = vadd.f32 %v2036, %v2262
      %v2393 = vadd.f32 %v2037, %v2267
      %v2394 = vadd.f32 %v2038, %v2272
      %v2395 = vadd.f32 %v2039, %v2277
      %v2396 = vadd.f32 %v2040, %v2282
      %v2397 = vadd.f32 %v2041, %v2287
      %v2398 = vadd.f32 %v2042, %v2292
      %v2399 = vadd.f32 %v2043, %v2297
      %v2400 = vadd.f32 %v2044, %v2302
      %v2401 = vadd.f32 %v2045, %v2307
      %v2402 = vadd.f32 %v2046, %v2312
      %v2403 = vadd.f32 %v2047, %v2317
      %v2404 = vadd.f32 %v2048, %v2322
      %v2405 = vadd.f32 %v2049, %v2327
      %v2406 = vadd.f32 %v2050, %v2332
      %v2407 = vadd.f32 %v2051, %v2337
      %v2408 = vadd.f32 %v2052, %v2342
      %v2409 = vadd.f32 %v2053, %v2347
      %v2410 = vadd.f32 %v2054, %v2352
      %v2411 = vadd.f32 %v2055, %v2357
      %v2412 = vadd.f32 %v2056, %v2362
      %v2413 = vadd.f32 %v2057, %v2367
      %v2414 = vadd.f32 %v2058, %v2372
      %v2415 = vadd.f32 %v2059, %v2377
      %v2416 = vadd.f32 %v2060, %v2382
      %2417 = vst.msk [vmem:[#allocation2] sm:$0xff] %vm144, %v2385
      %2418 = vst.msk [vmem:[#allocation2 + $0x8] sm:$0xff] %vm144, %v2386
      %2419 = vst.msk [vmem:[#allocation2 + $0x10] sm:$0xff] %vm144, %v2387
      %2420 = vst.msk [vmem:[#allocation2 + $0x18] sm:$0xff] %vm144, %v2388
      %2421 = vst.msk [vmem:[#allocation2 + $0x20] sm:$0xff] %vm144, %v2389
      %2422 = vst.msk [vmem:[#allocation2 + $0x28] sm:$0xff] %vm144, %v2390
      %2423 = vst.msk [vmem:[#allocation2 + $0x30] sm:$0xff] %vm144, %v2391
      %2424 = vst.msk [vmem:[#allocation2 + $0x38] sm:$0xff] %vm144, %v2392
      %2425 = vst.msk [vmem:[#allocation2 + $0x40] sm:$0xff] %vm144, %v2393
      %2426 = vst.msk [vmem:[#allocation2 + $0x48] sm:$0xff] %vm144, %v2394
      %2427 = vst.msk [vmem:[#allocation2 + $0x50] sm:$0xff] %vm144, %v2395
      %2428 = vst.msk [vmem:[#allocation2 + $0x58] sm:$0xff] %vm144, %v2396
      %2429 = vst.msk [vmem:[#allocation2 + $0x60] sm:$0xff] %vm144, %v2397
      %2430 = vst.msk [vmem:[#allocation2 + $0x68] sm:$0xff] %vm144, %v2398
      %2431 = vst.msk [vmem:[#allocation2 + $0x70] sm:$0xff] %vm144, %v2399
      %2432 = vst.msk [vmem:[#allocation2 + $0x78] sm:$0xff] %vm144, %v2400
      %2433 = vst.msk [vmem:[#allocation2 + $0x80] sm:$0xff] %vm144, %v2401
      %2434 = vst.msk [vmem:[#allocation2 + $0x88] sm:$0xff] %vm144, %v2402
      %2435 = vst.msk [vmem:[#allocation2 + $0x90] sm:$0xff] %vm144, %v2403
      %2436 = vst.msk [vmem:[#allocation2 + $0x98] sm:$0xff] %vm144, %v2404
      %2437 = vst.msk [vmem:[#allocation2 + $0xa0] sm:$0xff] %vm144, %v2405
      %2438 = vst.msk [vmem:[#allocation2 + $0xa8] sm:$0xff] %vm144, %v2406
      %2439 = vst.msk [vmem:[#allocation2 + $0xb0] sm:$0xff] %vm144, %v2407
      %2440 = vst.msk [vmem:[#allocation2 + $0xb8] sm:$0xff] %vm144, %v2408
      %2441 = vst.msk [vmem:[#allocation2 + $0xc0] sm:$0xff] %vm144, %v2409
      %2442 = vst.msk [vmem:[#allocation2 + $0xc8] sm:$0xff] %vm144, %v2410
      %2443 = vst.msk [vmem:[#allocation2 + $0xd0] sm:$0xff] %vm144, %v2411
      %2444 = vst.msk [vmem:[#allocation2 + $0xd8] sm:$0xff] %vm144, %v2412
      %2445 = vst.msk [vmem:[#allocation2 + $0xe0] sm:$0xff] %vm144, %v2413
      %2446 = vst.msk [vmem:[#allocation2 + $0xe8] sm:$0xff] %vm144, %v2414
      %2447 = vst.msk [vmem:[#allocation2 + $0xf0] sm:$0xff] %vm144, %v2415
      %2448 = vst.msk [vmem:[#allocation2 + $0xf8] sm:$0xff] %vm144, %v2416
      %v2449 = vld [vmem:[%s1540 + $0x2] sm:$0xff]
      %v2450 = vld [vmem:[%s1540 + $0xa] sm:$0xff]
      %v2451 = vld [vmem:[%s1540 + $0x1a] sm:$0xff]
      %v2452 = vld [vmem:[%s1540 + $0x22] sm:$0xff]
      %v2453 = vld [vmem:[%s1540 + $0x32] sm:$0xff]
      %v2454 = vld [vmem:[%s1540 + $0x3a] sm:$0xff]
      %v2455 = vld [vmem:[%s1540 + $0x4a] sm:$0xff]
      %v2456 = vld [vmem:[%s1540 + $0x52] sm:$0xff]
      %v2457 = vld [vmem:[%s1540 + $0x62] sm:$0xff]
      %v2458 = vld [vmem:[%s1540 + $0x6a] sm:$0xff]
      %v2459 = vld [vmem:[%s1540 + $0x7a] sm:$0xff]
      %v2460 = vld [vmem:[%s1540 + $0x82] sm:$0xff]
      %v2461 = vld [vmem:[%s1540 + $0x92] sm:$0xff]
      %v2462 = vld [vmem:[%s1540 + $0x9a] sm:$0xff]
      %v2463 = vld [vmem:[%s1540 + $0xaa] sm:$0xff]
      %v2464 = vld [vmem:[%s1540 + $0xb2] sm:$0xff]
      %v2465 = vld [vmem:[%s1540 + $0xc2] sm:$0xff]
      %v2466 = vld [vmem:[%s1540 + $0xca] sm:$0xff]
      %v2467 = vld [vmem:[%s1540 + $0xda] sm:$0xff]
      %v2468 = vld [vmem:[%s1540 + $0xe2] sm:$0xff]
      %v2469 = vld [vmem:[%s1540 + $0xf2] sm:$0xff]
      %v2470 = vld [vmem:[%s1540 + $0xfa] sm:$0xff]
      %v2471 = vld [vmem:[%s1540 + $0x10a] sm:$0xff]
      %v2472 = vld [vmem:[%s1540 + $0x112] sm:$0xff]
      %v2473 = vld [vmem:[%s1540 + $0x122] sm:$0xff]
      %v2474 = vld [vmem:[%s1540 + $0x12a] sm:$0xff]
      %v2475 = vld [vmem:[%s1540 + $0x13a] sm:$0xff]
      %v2476 = vld [vmem:[%s1540 + $0x142] sm:$0xff]
      %v2477 = vld [vmem:[%s1540 + $0x152] sm:$0xff]
      %v2478 = vld [vmem:[%s1540 + $0x15a] sm:$0xff]
      %v2479 = vld [vmem:[%s1540 + $0x16a] sm:$0xff]
      %v2480 = vld [vmem:[%s1540 + $0x172] sm:$0xff]
      %s2481 = scalar_lea.vmem %s1, 20
      %v2482 = vld [vmem:[%s2481] sm:$0xf]
      %v2483 = vld [vmem:[#allocation2] sm:$0xff]
      %v2484 = vld [vmem:[#allocation2 + $0x8] sm:$0xff]
      %v2485 = vld [vmem:[#allocation2 + $0x10] sm:$0xff]
      %v2486 = vld [vmem:[#allocation2 + $0x18] sm:$0xff]
      %v2487 = vld [vmem:[#allocation2 + $0x20] sm:$0xff]
      %v2488 = vld [vmem:[#allocation2 + $0x28] sm:$0xff]
      %v2489 = vld [vmem:[#allocation2 + $0x30] sm:$0xff]
      %v2490 = vld [vmem:[#allocation2 + $0x38] sm:$0xff]
      %v2491 = vld [vmem:[#allocation2 + $0x40] sm:$0xff]
      %v2492 = vld [vmem:[#allocation2 + $0x48] sm:$0xff]
      %v2493 = vld [vmem:[#allocation2 + $0x50] sm:$0xff]
      %v2494 = vld [vmem:[#allocation2 + $0x58] sm:$0xff]
      %v2495 = vld [vmem:[#allocation2 + $0x60] sm:$0xff]
      %v2496 = vld [vmem:[#allocation2 + $0x68] sm:$0xff]
      %v2497 = vld [vmem:[#allocation2 + $0x70] sm:$0xff]
      %v2498 = vld [vmem:[#allocation2 + $0x78] sm:$0xff]
      %v2499 = vld [vmem:[#allocation2 + $0x80] sm:$0xff]
      %v2500 = vld [vmem:[#allocation2 + $0x88] sm:$0xff]
      %v2501 = vld [vmem:[#allocation2 + $0x90] sm:$0xff]
      %v2502 = vld [vmem:[#allocation2 + $0x98] sm:$0xff]
      %v2503 = vld [vmem:[#allocation2 + $0xa0] sm:$0xff]
      %v2504 = vld [vmem:[#allocation2 + $0xa8] sm:$0xff]
      %v2505 = vld [vmem:[#allocation2 + $0xb0] sm:$0xff]
      %v2506 = vld [vmem:[#allocation2 + $0xb8] sm:$0xff]
      %v2507 = vld [vmem:[#allocation2 + $0xc0] sm:$0xff]
      %v2508 = vld [vmem:[#allocation2 + $0xc8] sm:$0xff]
      %v2509 = vld [vmem:[#allocation2 + $0xd0] sm:$0xff]
      %v2510 = vld [vmem:[#allocation2 + $0xd8] sm:$0xff]
      %v2511 = vld [vmem:[#allocation2 + $0xe0] sm:$0xff]
      %v2512 = vld [vmem:[#allocation2 + $0xe8] sm:$0xff]
      %v2513 = vld [vmem:[#allocation2 + $0xf0] sm:$0xff]
      %v2514 = vld [vmem:[#allocation2 + $0xf8] sm:$0xff]
      %v2516 = vsel %vm242, %v2449, 0
      %v2519 = vsel %vm242, %v2450, 0
      %v2522 = vsel %vm242, %v2451, 0
      %v2525 = vsel %vm242, %v2452, 0
      %v2528 = vsel %vm242, %v2453, 0
      %v2531 = vsel %vm242, %v2454, 0
      %v2534 = vsel %vm242, %v2455, 0
      %v2537 = vsel %vm242, %v2456, 0
      %v2540 = vsel %vm242, %v2457, 0
      %v2543 = vsel %vm242, %v2458, 0
      %v2546 = vsel %vm242, %v2459, 0
      %v2549 = vsel %vm242, %v2460, 0
      %v2552 = vsel %vm242, %v2461, 0
      %v2555 = vsel %vm242, %v2462, 0
      %v2558 = vsel %vm242, %v2463, 0
      %v2561 = vsel %vm242, %v2464, 0
      %v2564 = vsel %vm242, %v2465, 0
      %v2567 = vsel %vm242, %v2466, 0
      %v2570 = vsel %vm242, %v2467, 0
      %v2573 = vsel %vm242, %v2468, 0
      %v2576 = vsel %vm242, %v2469, 0
      %v2579 = vsel %vm242, %v2470, 0
      %v2582 = vsel %vm242, %v2471, 0
      %v2585 = vsel %vm242, %v2472, 0
      %v2588 = vsel %vm242, %v2473, 0
      %v2591 = vsel %vm242, %v2474, 0
      %v2594 = vsel %vm242, %v2475, 0
      %v2597 = vsel %vm242, %v2476, 0
      %v2600 = vsel %vm242, %v2477, 0
      %v2603 = vsel %vm242, %v2478, 0
      %v2606 = vsel %vm242, %v2479, 0
      %v2609 = vsel %vm242, %v2480, 0
      %v2612 = vsel %vm339, %v2482, 0
      %2614 = vmatprep.subr.mxu0 0.0
      %2615 = vmatpush1.msra.mxu0 %v2612
      %2616 = vmatprep.subr.mxu0 0.0
      %2617 = vmatpush1.msra.mxu0 0.0
      %2618 = vmatprep.subr.mxu0 0.0
      %2619 = vmatpush1.msra.mxu0 0.0
      %2620 = vmatprep.subr.mxu0 0.0
      %2621 = vmatpush1.msra.mxu0 0.0
      %2622 = vmatprep.subr.mxu0 0.0
      %2623 = vmatpush1.msra.mxu0 0.0
      %2624 = vmatprep.subr.mxu0 0.0
      %2625 = vmatpush1.msra.mxu0 0.0
      %2626 = vmatprep.subr.mxu0 0.0
      %2627 = vmatpush1.msra.mxu0 0.0
      %2628 = vmatprep.subr.mxu0 0.0
      %2629 = vmatpush1.msra.mxu0 0.0
      %2630 = vmatprep.subr.mxu0 0.0
      %2631 = vmatpush1.msra.mxu0 0.0
      %2632 = vmatprep.subr.mxu0 0.0
      %2633 = vmatpush1.msra.mxu0 0.0
      %2634 = vmatprep.subr.mxu0 0.0
      %2635 = vmatpush1.msra.mxu0 0.0
      %2636 = vmatprep.subr.mxu0 0.0
      %2637 = vmatpush1.msra.mxu0 0.0
      %2638 = vmatprep.subr.mxu0 0.0
      %2639 = vmatpush1.msra.mxu0 0.0
      %2640 = vmatprep.subr.mxu0 0.0
      %2641 = vmatpush1.msra.mxu0 0.0
      %2642 = vmatprep.subr.mxu0 0.0
      %2643 = vmatpush1.msra.mxu0 0.0
      %2644 = vmatprep.subr.mxu0 0.0
      %2645 = vmatpush1.msra.mxu0 0.0
      %2646 = vmatprep.subr.mxu0 0.0
      %2647 = vmatpush1.msra.mxu0 0.0
      %2648 = vmatprep.subr.mxu0 0.0
      %2649 = vmatpush1.msra.mxu0 0.0
      %2650 = vmatprep.subr.mxu0 0.0
      %2651 = vmatpush1.msra.mxu0 0.0
      %2652 = vmatprep.subr.mxu0 0.0
      %2653 = vmatpush1.msra.mxu0 0.0
      %2654 = vmatprep.subr.mxu0 0.0
      %2655 = vmatpush1.msra.mxu0 0.0
      %2656 = vmatprep.subr.mxu0 0.0
      %2657 = vmatpush1.msra.mxu0 0.0
      %2658 = vmatprep.subr.mxu0 0.0
      %2659 = vmatpush1.msra.mxu0 0.0
      %2660 = vmatprep.subr.mxu0 0.0
      %2661 = vmatpush1.msra.mxu0 0.0
      %2662 = vmatprep.subr.mxu0 0.0
      %2663 = vmatpush1.msra.mxu0 0.0
      %2664 = vmatprep.subr.mxu0 0.0
      %2665 = vmatpush1.msra.mxu0 0.0
      %2666 = vmatprep.subr.mxu0 0.0
      %2667 = vmatpush1.msra.mxu0 0.0
      %2668 = vmatprep.subr.mxu0 0.0
      %2669 = vmatpush1.msra.mxu0 0.0
      %2670 = vmatprep.subr.mxu0 0.0
      %2671 = vmatpush1.msra.mxu0 0.0
      %2672 = vmatprep.subr.mxu0 0.0
      %2673 = vmatpush1.msra.mxu0 0.0
      %2674 = vmatprep.subr.mxu0 0.0
      %2675 = vmatpush1.msra.mxu0 0.0
      %2676 = vmatprep.subr.mxu0 0.0
      %2677 = vmatpush1.msra.mxu0 0.0
      %2678 = vmatprep.mubr.f32.mxu0 0.0
      %2679 = vmatmul.mubr.f32.gmra.mrb[0].mxu0 %v2516
      %v2680 = vpop.f32.mrb[0].mxu0
      %v2681 = vadd.f32 0.0, %v2680
      %v2682 = vpop.f32.mrb[0].mxu0
      %2683 = vmatprep.mubr.f32.mxu0 0.0
      %2684 = vmatmul.mubr.f32.gmra.mrb[0].mxu0 %v2519
      %v2685 = vpop.f32.mrb[0].mxu0
      %v2686 = vadd.f32 0.0, %v2685
      %v2687 = vpop.f32.mrb[0].mxu0
      %2688 = vmatprep.mubr.f32.mxu0 0.0
      %2689 = vmatmul.mubr.f32.gmra.mrb[0].mxu0 %v2522
      %v2690 = vpop.f32.mrb[0].mxu0
      %v2691 = vadd.f32 0.0, %v2690
      %v2692 = vpop.f32.mrb[0].mxu0
      %2693 = vmatprep.mubr.f32.mxu0 0.0
      %2694 = vmatmul.mubr.f32.gmra.mrb[0].mxu0 %v2525
      %v2695 = vpop.f32.mrb[0].mxu0
      %v2696 = vadd.f32 0.0, %v2695
      %v2697 = vpop.f32.mrb[0].mxu0
      %2698 = vmatprep.mubr.f32.mxu0 0.0
      %2699 = vmatmul.mubr.f32.gmra.mrb[0].mxu0 %v2528
      %v2700 = vpop.f32.mrb[0].mxu0
      %v2701 = vadd.f32 0.0, %v2700
      %v2702 = vpop.f32.mrb[0].mxu0
      %2703 = vmatprep.mubr.f32.mxu0 0.0
      %2704 = vmatmul.mubr.f32.gmra.mrb[0].mxu0 %v2531
      %v2705 = vpop.f32.mrb[0].mxu0
      %v2706 = vadd.f32 0.0, %v2705
      %v2707 = vpop.f32.mrb[0].mxu0
      %2708 = vmatprep.mubr.f32.mxu0 0.0
      %2709 = vmatmul.mubr.f32.gmra.mrb[0].mxu0 %v2534
      %v2710 = vpop.f32.mrb[0].mxu0
      %v2711 = vadd.f32 0.0, %v2710
      %v2712 = vpop.f32.mrb[0].mxu0
      %2713 = vmatprep.mubr.f32.mxu0 0.0
      %2714 = vmatmul.mubr.f32.gmra.mrb[0].mxu0 %v2537
      %v2715 = vpop.f32.mrb[0].mxu0
      %v2716 = vadd.f32 0.0, %v2715
      %v2717 = vpop.f32.mrb[0].mxu0
      %2718 = vmatprep.mubr.f32.mxu0 0.0
      %2719 = vmatmul.mubr.f32.gmra.mrb[0].mxu0 %v2540
      %v2720 = vpop.f32.mrb[0].mxu0
      %v2721 = vadd.f32 0.0, %v2720
      %v2722 = vpop.f32.mrb[0].mxu0
      %2723 = vmatprep.mubr.f32.mxu0 0.0
      %2724 = vmatmul.mubr.f32.gmra.mrb[0].mxu0 %v2543
      %v2725 = vpop.f32.mrb[0].mxu0
      %v2726 = vadd.f32 0.0, %v2725
      %v2727 = vpop.f32.mrb[0].mxu0
      %2728 = vmatprep.mubr.f32.mxu0 0.0
      %2729 = vmatmul.mubr.f32.gmra.mrb[0].mxu0 %v2546
      %v2730 = vpop.f32.mrb[0].mxu0
      %v2731 = vadd.f32 0.0, %v2730
      %v2732 = vpop.f32.mrb[0].mxu0
      %2733 = vmatprep.mubr.f32.mxu0 0.0
      %2734 = vmatmul.mubr.f32.gmra.mrb[0].mxu0 %v2549
      %v2735 = vpop.f32.mrb[0].mxu0
      %v2736 = vadd.f32 0.0, %v2735
      %v2737 = vpop.f32.mrb[0].mxu0
      %2738 = vmatprep.mubr.f32.mxu0 0.0
      %2739 = vmatmul.mubr.f32.gmra.mrb[0].mxu0 %v2552
      %v2740 = vpop.f32.mrb[0].mxu0
      %v2741 = vadd.f32 0.0, %v2740
      %v2742 = vpop.f32.mrb[0].mxu0
      %2743 = vmatprep.mubr.f32.mxu0 0.0
      %2744 = vmatmul.mubr.f32.gmra.mrb[0].mxu0 %v2555
      %v2745 = vpop.f32.mrb[0].mxu0
      %v2746 = vadd.f32 0.0, %v2745
      %v2747 = vpop.f32.mrb[0].mxu0
      %2748 = vmatprep.mubr.f32.mxu0 0.0
      %2749 = vmatmul.mubr.f32.gmra.mrb[0].mxu0 %v2558
      %v2750 = vpop.f32.mrb[0].mxu0
      %v2751 = vadd.f32 0.0, %v2750
      %v2752 = vpop.f32.mrb[0].mxu0
      %2753 = vmatprep.mubr.f32.mxu0 0.0
      %2754 = vmatmul.mubr.f32.gmra.mrb[0].mxu0 %v2561
      %v2755 = vpop.f32.mrb[0].mxu0
      %v2756 = vadd.f32 0.0, %v2755
      %v2757 = vpop.f32.mrb[0].mxu0
      %2758 = vmatprep.mubr.f32.mxu0 0.0
      %2759 = vmatmul.mubr.f32.gmra.mrb[0].mxu0 %v2564
      %v2760 = vpop.f32.mrb[0].mxu0
      %v2761 = vadd.f32 0.0, %v2760
      %v2762 = vpop.f32.mrb[0].mxu0
      %2763 = vmatprep.mubr.f32.mxu0 0.0
      %2764 = vmatmul.mubr.f32.gmra.mrb[0].mxu0 %v2567
      %v2765 = vpop.f32.mrb[0].mxu0
      %v2766 = vadd.f32 0.0, %v2765
      %v2767 = vpop.f32.mrb[0].mxu0
      %2768 = vmatprep.mubr.f32.mxu0 0.0
      %2769 = vmatmul.mubr.f32.gmra.mrb[0].mxu0 %v2570
      %v2770 = vpop.f32.mrb[0].mxu0
      %v2771 = vadd.f32 0.0, %v2770
      %v2772 = vpop.f32.mrb[0].mxu0
      %2773 = vmatprep.mubr.f32.mxu0 0.0
      %2774 = vmatmul.mubr.f32.gmra.mrb[0].mxu0 %v2573
      %v2775 = vpop.f32.mrb[0].mxu0
      %v2776 = vadd.f32 0.0, %v2775
      %v2777 = vpop.f32.mrb[0].mxu0
      %2778 = vmatprep.mubr.f32.mxu0 0.0
      %2779 = vmatmul.mubr.f32.gmra.mrb[0].mxu0 %v2576
      %v2780 = vpop.f32.mrb[0].mxu0
      %v2781 = vadd.f32 0.0, %v2780
      %v2782 = vpop.f32.mrb[0].mxu0
      %2783 = vmatprep.mubr.f32.mxu0 0.0
      %2784 = vmatmul.mubr.f32.gmra.mrb[0].mxu0 %v2579
      %v2785 = vpop.f32.mrb[0].mxu0
      %v2786 = vadd.f32 0.0, %v2785
      %v2787 = vpop.f32.mrb[0].mxu0
      %2788 = vmatprep.mubr.f32.mxu0 0.0
      %2789 = vmatmul.mubr.f32.gmra.mrb[0].mxu0 %v2582
      %v2790 = vpop.f32.mrb[0].mxu0
      %v2791 = vadd.f32 0.0, %v2790
      %v2792 = vpop.f32.mrb[0].mxu0
      %2793 = vmatprep.mubr.f32.mxu0 0.0
      %2794 = vmatmul.mubr.f32.gmra.mrb[0].mxu0 %v2585
      %v2795 = vpop.f32.mrb[0].mxu0
      %v2796 = vadd.f32 0.0, %v2795
      %v2797 = vpop.f32.mrb[0].mxu0
      %2798 = vmatprep.mubr.f32.mxu0 0.0
      %2799 = vmatmul.mubr.f32.gmra.mrb[0].mxu0 %v2588
      %v2800 = vpop.f32.mrb[0].mxu0
      %v2801 = vadd.f32 0.0, %v2800
      %v2802 = vpop.f32.mrb[0].mxu0
      %2803 = vmatprep.mubr.f32.mxu0 0.0
      %2804 = vmatmul.mubr.f32.gmra.mrb[0].mxu0 %v2591
      %v2805 = vpop.f32.mrb[0].mxu0
      %v2806 = vadd.f32 0.0, %v2805
      %v2807 = vpop.f32.mrb[0].mxu0
      %2808 = vmatprep.mubr.f32.mxu0 0.0
      %2809 = vmatmul.mubr.f32.gmra.mrb[0].mxu0 %v2594
      %v2810 = vpop.f32.mrb[0].mxu0
      %v2811 = vadd.f32 0.0, %v2810
      %v2812 = vpop.f32.mrb[0].mxu0
      %2813 = vmatprep.mubr.f32.mxu0 0.0
      %2814 = vmatmul.mubr.f32.gmra.mrb[0].mxu0 %v2597
      %v2815 = vpop.f32.mrb[0].mxu0
      %v2816 = vadd.f32 0.0, %v2815
      %v2817 = vpop.f32.mrb[0].mxu0
      %2818 = vmatprep.mubr.f32.mxu0 0.0
      %2819 = vmatmul.mubr.f32.gmra.mrb[0].mxu0 %v2600
      %v2820 = vpop.f32.mrb[0].mxu0
      %v2821 = vadd.f32 0.0, %v2820
      %v2822 = vpop.f32.mrb[0].mxu0
      %2823 = vmatprep.mubr.f32.mxu0 0.0
      %2824 = vmatmul.mubr.f32.gmra.mrb[0].mxu0 %v2603
      %v2825 = vpop.f32.mrb[0].mxu0
      %v2826 = vadd.f32 0.0, %v2825
      %v2827 = vpop.f32.mrb[0].mxu0
      %2828 = vmatprep.mubr.f32.mxu0 0.0
      %2829 = vmatmul.mubr.f32.gmra.mrb[0].mxu0 %v2606
      %v2830 = vpop.f32.mrb[0].mxu0
      %v2831 = vadd.f32 0.0, %v2830
      %v2832 = vpop.f32.mrb[0].mxu0
      %2833 = vmatprep.mubr.f32.mxu0 0.0
      %2834 = vmatmul.mubr.f32.gmra.mrb[0].mxu0 %v2609
      %v2835 = vpop.f32.mrb[0].mxu0
      %v2836 = vadd.f32 0.0, %v2835
      %v2837 = vpop.f32.mrb[0].mxu0
      %2838 = vdwg.mxu0
      %v2839 = vadd.f32 %v2483, %v2681
      %v2840 = vadd.f32 %v2484, %v2686
      %v2841 = vadd.f32 %v2485, %v2691
      %v2842 = vadd.f32 %v2486, %v2696
      %v2843 = vadd.f32 %v2487, %v2701
      %v2844 = vadd.f32 %v2488, %v2706
      %v2845 = vadd.f32 %v2489, %v2711
      %v2846 = vadd.f32 %v2490, %v2716
      %v2847 = vadd.f32 %v2491, %v2721
      %v2848 = vadd.f32 %v2492, %v2726
      %v2849 = vadd.f32 %v2493, %v2731
      %v2850 = vadd.f32 %v2494, %v2736
      %v2851 = vadd.f32 %v2495, %v2741
      %v2852 = vadd.f32 %v2496, %v2746
      %v2853 = vadd.f32 %v2497, %v2751
      %v2854 = vadd.f32 %v2498, %v2756
      %v2855 = vadd.f32 %v2499, %v2761
      %v2856 = vadd.f32 %v2500, %v2766
      %v2857 = vadd.f32 %v2501, %v2771
      %v2858 = vadd.f32 %v2502, %v2776
      %v2859 = vadd.f32 %v2503, %v2781
      %v2860 = vadd.f32 %v2504, %v2786
      %v2861 = vadd.f32 %v2505, %v2791
      %v2862 = vadd.f32 %v2506, %v2796
      %v2863 = vadd.f32 %v2507, %v2801
      %v2864 = vadd.f32 %v2508, %v2806
      %v2865 = vadd.f32 %v2509, %v2811
      %v2866 = vadd.f32 %v2510, %v2816
      %v2867 = vadd.f32 %v2511, %v2821
      %v2868 = vadd.f32 %v2512, %v2826
      %v2869 = vadd.f32 %v2513, %v2831
      %v2870 = vadd.f32 %v2514, %v2836
      %2871 = vst.msk [vmem:[#allocation2] sm:$0xff] %vm144, %v2839
      %2872 = vst.msk [vmem:[#allocation2 + $0x8] sm:$0xff] %vm144, %v2840
      %2873 = vst.msk [vmem:[#allocation2 + $0x10] sm:$0xff] %vm144, %v2841
      %2874 = vst.msk [vmem:[#allocation2 + $0x18] sm:$0xff] %vm144, %v2842
      %2875 = vst.msk [vmem:[#allocation2 + $0x20] sm:$0xff] %vm144, %v2843
      %2876 = vst.msk [vmem:[#allocation2 + $0x28] sm:$0xff] %vm144, %v2844
      %2877 = vst.msk [vmem:[#allocation2 + $0x30] sm:$0xff] %vm144, %v2845
      %2878 = vst.msk [vmem:[#allocation2 + $0x38] sm:$0xff] %vm144, %v2846
      %2879 = vst.msk [vmem:[#allocation2 + $0x40] sm:$0xff] %vm144, %v2847
      %2880 = vst.msk [vmem:[#allocation2 + $0x48] sm:$0xff] %vm144, %v2848
      %2881 = vst.msk [vmem:[#allocation2 + $0x50] sm:$0xff] %vm144, %v2849
      %2882 = vst.msk [vmem:[#allocation2 + $0x58] sm:$0xff] %vm144, %v2850
      %2883 = vst.msk [vmem:[#allocation2 + $0x60] sm:$0xff] %vm144, %v2851
      %2884 = vst.msk [vmem:[#allocation2 + $0x68] sm:$0xff] %vm144, %v2852
      %2885 = vst.msk [vmem:[#allocation2 + $0x70] sm:$0xff] %vm144, %v2853
      %2886 = vst.msk [vmem:[#allocation2 + $0x78] sm:$0xff] %vm144, %v2854
      %2887 = vst.msk [vmem:[#allocation2 + $0x80] sm:$0xff] %vm144, %v2855
      %2888 = vst.msk [vmem:[#allocation2 + $0x88] sm:$0xff] %vm144, %v2856
      %2889 = vst.msk [vmem:[#allocation2 + $0x90] sm:$0xff] %vm144, %v2857
      %2890 = vst.msk [vmem:[#allocation2 + $0x98] sm:$0xff] %vm144, %v2858
      %2891 = vst.msk [vmem:[#allocation2 + $0xa0] sm:$0xff] %vm144, %v2859
      %2892 = vst.msk [vmem:[#allocation2 + $0xa8] sm:$0xff] %vm144, %v2860
      %2893 = vst.msk [vmem:[#allocation2 + $0xb0] sm:$0xff] %vm144, %v2861
      %2894 = vst.msk [vmem:[#allocation2 + $0xb8] sm:$0xff] %vm144, %v2862
      %2895 = vst.msk [vmem:[#allocation2 + $0xc0] sm:$0xff] %vm144, %v2863
      %2896 = vst.msk [vmem:[#allocation2 + $0xc8] sm:$0xff] %vm144, %v2864
      %2897 = vst.msk [vmem:[#allocation2 + $0xd0] sm:$0xff] %vm144, %v2865
      %2898 = vst.msk [vmem:[#allocation2 + $0xd8] sm:$0xff] %vm144, %v2866
      %2899 = vst.msk [vmem:[#allocation2 + $0xe0] sm:$0xff] %vm144, %v2867
      %2900 = vst.msk [vmem:[#allocation2 + $0xe8] sm:$0xff] %vm144, %v2868
      %2901 = vst.msk [vmem:[#allocation2 + $0xf0] sm:$0xff] %vm144, %v2869
      %2902 = vst.msk [vmem:[#allocation2 + $0xf8] sm:$0xff] %vm144, %v2870
      %s2903 = scalar_lea.vmem %s138, 48
      %v2904 = vld [vmem:[%s2903] sm:$0xff]
      %v2905 = vld [vmem:[%s2903 + $0x8] sm:$0xff]
      %v2906 = vld [vmem:[%s2903 + $0x18] sm:$0xff]
      %v2907 = vld [vmem:[%s2903 + $0x20] sm:$0xff]
      %v2908 = vld [vmem:[%s2903 + $0x30] sm:$0xff]
      %v2909 = vld [vmem:[%s2903 + $0x38] sm:$0xff]
      %v2910 = vld [vmem:[%s2903 + $0x48] sm:$0xff]
      %v2911 = vld [vmem:[%s2903 + $0x50] sm:$0xff]
      %v2912 = vld [vmem:[%s2903 + $0x60] sm:$0xff]
      %v2913 = vld [vmem:[%s2903 + $0x68] sm:$0xff]
      %v2914 = vld [vmem:[%s2903 + $0x78] sm:$0xff]
      %v2915 = vld [vmem:[%s2903 + $0x80] sm:$0xff]
      %v2916 = vld [vmem:[%s2903 + $0x90] sm:$0xff]
      %v2917 = vld [vmem:[%s2903 + $0x98] sm:$0xff]
      %v2918 = vld [vmem:[%s2903 + $0xa8] sm:$0xff]
      %v2919 = vld [vmem:[%s2903 + $0xb0] sm:$0xff]
      %v2920 = vld [vmem:[%s2903 + $0xc0] sm:$0xff]
      %v2921 = vld [vmem:[%s2903 + $0xc8] sm:$0xff]
      %v2922 = vld [vmem:[%s2903 + $0xd8] sm:$0xff]
      %v2923 = vld [vmem:[%s2903 + $0xe0] sm:$0xff]
      %v2924 = vld [vmem:[%s2903 + $0xf0] sm:$0xff]
      %v2925 = vld [vmem:[%s2903 + $0xf8] sm:$0xff]
      %v2926 = vld [vmem:[%s2903 + $0x108] sm:$0xff]
      %v2927 = vld [vmem:[%s2903 + $0x110] sm:$0xff]
      %v2928 = vld [vmem:[%s2903 + $0x120] sm:$0xff]
      %v2929 = vld [vmem:[%s2903 + $0x128] sm:$0xff]
      %v2930 = vld [vmem:[%s2903 + $0x138] sm:$0xff]
      %v2931 = vld [vmem:[%s2903 + $0x140] sm:$0xff]
      %v2932 = vld [vmem:[%s2903 + $0x150] sm:$0xff]
      %v2933 = vld [vmem:[%s2903 + $0x158] sm:$0xff]
      %v2934 = vld [vmem:[%s2903 + $0x168] sm:$0xff]
      %v2935 = vld [vmem:[%s2903 + $0x170] sm:$0xff]
      %s2936 = scalar_lea.vmem %s1, 24
      %v2937 = vld [vmem:[%s2936] sm:$0xf]
      %v2938 = vld [vmem:[#allocation2] sm:$0xff]
      %v2939 = vld [vmem:[#allocation2 + $0x8] sm:$0xff]
      %v2940 = vld [vmem:[#allocation2 + $0x10] sm:$0xff]
      %v2941 = vld [vmem:[#allocation2 + $0x18] sm:$0xff]
      %v2942 = vld [vmem:[#allocation2 + $0x20] sm:$0xff]
      %v2943 = vld [vmem:[#allocation2 + $0x28] sm:$0xff]
      %v2944 = vld [vmem:[#allocation2 + $0x30] sm:$0xff]
      %v2945 = vld [vmem:[#allocation2 + $0x38] sm:$0xff]
      %v2946 = vld [vmem:[#allocation2 + $0x40] sm:$0xff]
      %v2947 = vld [vmem:[#allocation2 + $0x48] sm:$0xff]
      %v2948 = vld [vmem:[#allocation2 + $0x50] sm:$0xff]
      %v2949 = vld [vmem:[#allocation2 + $0x58] sm:$0xff]
      %v2950 = vld [vmem:[#allocation2 + $0x60] sm:$0xff]
      %v2951 = vld [vmem:[#allocation2 + $0x68] sm:$0xff]
      %v2952 = vld [vmem:[#allocation2 + $0x70] sm:$0xff]
      %v2953 = vld [vmem:[#allocation2 + $0x78] sm:$0xff]
      %v2954 = vld [vmem:[#allocation2 + $0x80] sm:$0xff]
      %v2955 = vld [vmem:[#allocation2 + $0x88] sm:$0xff]
      %v2956 = vld [vmem:[#allocation2 + $0x90] sm:$0xff]
      %v2957 = vld [vmem:[#allocation2 + $0x98] sm:$0xff]
      %v2958 = vld [vmem:[#allocation2 + $0xa0] sm:$0xff]
      %v2959 = vld [vmem:[#allocation2 + $0xa8] sm:$0xff]
      %v2960 = vld [vmem:[#allocation2 + $0xb0] sm:$0xff]
      %v2961 = vld [vmem:[#allocation2 + $0xb8] sm:$0xff]
      %v2962 = vld [vmem:[#allocation2 + $0xc0] sm:$0xff]
      %v2963 = vld [vmem:[#allocation2 + $0xc8] sm:$0xff]
      %v2964 = vld [vmem:[#allocation2 + $0xd0] sm:$0xff]
      %v2965 = vld [vmem:[#allocation2 + $0xd8] sm:$0xff]
      %v2966 = vld [vmem:[#allocation2 + $0xe0] sm:$0xff]
      %v2967 = vld [vmem:[#allocation2 + $0xe8] sm:$0xff]
      %v2968 = vld [vmem:[#allocation2 + $0xf0] sm:$0xff]
      %v2969 = vld [vmem:[#allocation2 + $0xf8] sm:$0xff]
      %v2971 = vsel %vm242, %v2904, 0
      %v2974 = vsel %vm242, %v2905, 0
      %v2977 = vsel %vm242, %v2906, 0
      %v2980 = vsel %vm242, %v2907, 0
      %v2983 = vsel %vm242, %v2908, 0
      %v2986 = vsel %vm242, %v2909, 0
      %v2989 = vsel %vm242, %v2910, 0
      %v2992 = vsel %vm242, %v2911, 0
      %v2995 = vsel %vm242, %v2912, 0
      %v2998 = vsel %vm242, %v2913, 0
      %v3001 = vsel %vm242, %v2914, 0
      %v3004 = vsel %vm242, %v2915, 0
      %v3007 = vsel %vm242, %v2916, 0
      %v3010 = vsel %vm242, %v2917, 0
      %v3013 = vsel %vm242, %v2918, 0
      %v3016 = vsel %vm242, %v2919, 0
      %v3019 = vsel %vm242, %v2920, 0
      %v3022 = vsel %vm242, %v2921, 0
      %v3025 = vsel %vm242, %v2922, 0
      %v3028 = vsel %vm242, %v2923, 0
      %v3031 = vsel %vm242, %v2924, 0
      %v3034 = vsel %vm242, %v2925, 0
      %v3037 = vsel %vm242, %v2926, 0
      %v3040 = vsel %vm242, %v2927, 0
      %v3043 = vsel %vm242, %v2928, 0
      %v3046 = vsel %vm242, %v2929, 0
      %v3049 = vsel %vm242, %v2930, 0
      %v3052 = vsel %vm242, %v2931, 0
      %v3055 = vsel %vm242, %v2932, 0
      %v3058 = vsel %vm242, %v2933, 0
      %v3061 = vsel %vm242, %v2934, 0
      %v3064 = vsel %vm242, %v2935, 0
      %v3067 = vsel %vm339, %v2937, 0
      %3069 = vmatprep.subr.mxu0 0.0
      %3070 = vmatpush1.msra.mxu0 %v3067
      %3071 = vmatprep.subr.mxu0 0.0
      %3072 = vmatpush1.msra.mxu0 0.0
      %3073 = vmatprep.subr.mxu0 0.0
      %3074 = vmatpush1.msra.mxu0 0.0
      %3075 = vmatprep.subr.mxu0 0.0
      %3076 = vmatpush1.msra.mxu0 0.0
      %3077 = vmatprep.subr.mxu0 0.0
      %3078 = vmatpush1.msra.mxu0 0.0
      %3079 = vmatprep.subr.mxu0 0.0
      %3080 = vmatpush1.msra.mxu0 0.0
      %3081 = vmatprep.subr.mxu0 0.0
      %3082 = vmatpush1.msra.mxu0 0.0
      %3083 = vmatprep.subr.mxu0 0.0
      %3084 = vmatpush1.msra.mxu0 0.0
      %3085 = vmatprep.subr.mxu0 0.0
      %3086 = vmatpush1.msra.mxu0 0.0
      %3087 = vmatprep.subr.mxu0 0.0
      %3088 = vmatpush1.msra.mxu0 0.0
      %3089 = vmatprep.subr.mxu0 0.0
      %3090 = vmatpush1.msra.mxu0 0.0
      %3091 = vmatprep.subr.mxu0 0.0
      %3092 = vmatpush1.msra.mxu0 0.0
      %3093 = vmatprep.subr.mxu0 0.0
      %3094 = vmatpush1.msra.mxu0 0.0
      %3095 = vmatprep.subr.mxu0 0.0
      %3096 = vmatpush1.msra.mxu0 0.0
      %3097 = vmatprep.subr.mxu0 0.0
      %3098 = vmatpush1.msra.mxu0 0.0
      %3099 = vmatprep.subr.mxu0 0.0
      %3100 = vmatpush1.msra.mxu0 0.0
      %3101 = vmatprep.subr.mxu0 0.0
      %3102 = vmatpush1.msra.mxu0 0.0
      %3103 = vmatprep.subr.mxu0 0.0
      %3104 = vmatpush1.msra.mxu0 0.0
      %3105 = vmatprep.subr.mxu0 0.0
      %3106 = vmatpush1.msra.mxu0 0.0
      %3107 = vmatprep.subr.mxu0 0.0
      %3108 = vmatpush1.msra.mxu0 0.0
      %3109 = vmatprep.subr.mxu0 0.0
      %3110 = vmatpush1.msra.mxu0 0.0
      %3111 = vmatprep.subr.mxu0 0.0
      %3112 = vmatpush1.msra.mxu0 0.0
      %3113 = vmatprep.subr.mxu0 0.0
      %3114 = vmatpush1.msra.mxu0 0.0
      %3115 = vmatprep.subr.mxu0 0.0
      %3116 = vmatpush1.msra.mxu0 0.0
      %3117 = vmatprep.subr.mxu0 0.0
      %3118 = vmatpush1.msra.mxu0 0.0
      %3119 = vmatprep.subr.mxu0 0.0
      %3120 = vmatpush1.msra.mxu0 0.0
      %3121 = vmatprep.subr.mxu0 0.0
      %3122 = vmatpush1.msra.mxu0 0.0
      %3123 = vmatprep.subr.mxu0 0.0
      %3124 = vmatpush1.msra.mxu0 0.0
      %3125 = vmatprep.subr.mxu0 0.0
      %3126 = vmatpush1.msra.mxu0 0.0
      %3127 = vmatprep.subr.mxu0 0.0
      %3128 = vmatpush1.msra.mxu0 0.0
      %3129 = vmatprep.subr.mxu0 0.0
      %3130 = vmatpush1.msra.mxu0 0.0
      %3131 = vmatprep.subr.mxu0 0.0
      %3132 = vmatpush1.msra.mxu0 0.0
      %3133 = vmatprep.mubr.f32.mxu0 0.0
      %3134 = vmatmul.mubr.f32.gmra.mrb[0].mxu0 %v2971
      %v3135 = vpop.f32.mrb[0].mxu0
      %v3136 = vadd.f32 0.0, %v3135
      %v3137 = vpop.f32.mrb[0].mxu0
      %3138 = vmatprep.mubr.f32.mxu0 0.0
      %3139 = vmatmul.mubr.f32.gmra.mrb[0].mxu0 %v2974
      %v3140 = vpop.f32.mrb[0].mxu0
      %v3141 = vadd.f32 0.0, %v3140
      %v3142 = vpop.f32.mrb[0].mxu0
      %3143 = vmatprep.mubr.f32.mxu0 0.0
      %3144 = vmatmul.mubr.f32.gmra.mrb[0].mxu0 %v2977
      %v3145 = vpop.f32.mrb[0].mxu0
      %v3146 = vadd.f32 0.0, %v3145
      %v3147 = vpop.f32.mrb[0].mxu0
      %3148 = vmatprep.mubr.f32.mxu0 0.0
      %3149 = vmatmul.mubr.f32.gmra.mrb[0].mxu0 %v2980
      %v3150 = vpop.f32.mrb[0].mxu0
      %v3151 = vadd.f32 0.0, %v3150
      %v3152 = vpop.f32.mrb[0].mxu0
      %3153 = vmatprep.mubr.f32.mxu0 0.0
      %3154 = vmatmul.mubr.f32.gmra.mrb[0].mxu0 %v2983
      %v3155 = vpop.f32.mrb[0].mxu0
      %v3156 = vadd.f32 0.0, %v3155
      %v3157 = vpop.f32.mrb[0].mxu0
      %3158 = vmatprep.mubr.f32.mxu0 0.0
      %3159 = vmatmul.mubr.f32.gmra.mrb[0].mxu0 %v2986
      %v3160 = vpop.f32.mrb[0].mxu0
      %v3161 = vadd.f32 0.0, %v3160
      %v3162 = vpop.f32.mrb[0].mxu0
      %3163 = vmatprep.mubr.f32.mxu0 0.0
      %3164 = vmatmul.mubr.f32.gmra.mrb[0].mxu0 %v2989
      %v3165 = vpop.f32.mrb[0].mxu0
      %v3166 = vadd.f32 0.0, %v3165
      %v3167 = vpop.f32.mrb[0].mxu0
      %3168 = vmatprep.mubr.f32.mxu0 0.0
      %3169 = vmatmul.mubr.f32.gmra.mrb[0].mxu0 %v2992
      %v3170 = vpop.f32.mrb[0].mxu0
      %v3171 = vadd.f32 0.0, %v3170
      %v3172 = vpop.f32.mrb[0].mxu0
      %3173 = vmatprep.mubr.f32.mxu0 0.0
      %3174 = vmatmul.mubr.f32.gmra.mrb[0].mxu0 %v2995
      %v3175 = vpop.f32.mrb[0].mxu0
      %v3176 = vadd.f32 0.0, %v3175
      %v3177 = vpop.f32.mrb[0].mxu0
      %3178 = vmatprep.mubr.f32.mxu0 0.0
      %3179 = vmatmul.mubr.f32.gmra.mrb[0].mxu0 %v2998
      %v3180 = vpop.f32.mrb[0].mxu0
      %v3181 = vadd.f32 0.0, %v3180
      %v3182 = vpop.f32.mrb[0].mxu0
      %3183 = vmatprep.mubr.f32.mxu0 0.0
      %3184 = vmatmul.mubr.f32.gmra.mrb[0].mxu0 %v3001
      %v3185 = vpop.f32.mrb[0].mxu0
      %v3186 = vadd.f32 0.0, %v3185
      %v3187 = vpop.f32.mrb[0].mxu0
      %3188 = vmatprep.mubr.f32.mxu0 0.0
      %3189 = vmatmul.mubr.f32.gmra.mrb[0].mxu0 %v3004
      %v3190 = vpop.f32.mrb[0].mxu0
      %v3191 = vadd.f32 0.0, %v3190
      %v3192 = vpop.f32.mrb[0].mxu0
      %3193 = vmatprep.mubr.f32.mxu0 0.0
      %3194 = vmatmul.mubr.f32.gmra.mrb[0].mxu0 %v3007
      %v3195 = vpop.f32.mrb[0].mxu0
      %v3196 = vadd.f32 0.0, %v3195
      %v3197 = vpop.f32.mrb[0].mxu0
      %3198 = vmatprep.mubr.f32.mxu0 0.0
      %3199 = vmatmul.mubr.f32.gmra.mrb[0].mxu0 %v3010
      %v3200 = vpop.f32.mrb[0].mxu0
      %v3201 = vadd.f32 0.0, %v3200
      %v3202 = vpop.f32.mrb[0].mxu0
      %3203 = vmatprep.mubr.f32.mxu0 0.0
      %3204 = vmatmul.mubr.f32.gmra.mrb[0].mxu0 %v3013
      %v3205 = vpop.f32.mrb[0].mxu0
      %v3206 = vadd.f32 0.0, %v3205
      %v3207 = vpop.f32.mrb[0].mxu0
      %3208 = vmatprep.mubr.f32.mxu0 0.0
      %3209 = vmatmul.mubr.f32.gmra.mrb[0].mxu0 %v3016
      %v3210 = vpop.f32.mrb[0].mxu0
      %v3211 = vadd.f32 0.0, %v3210
      %v3212 = vpop.f32.mrb[0].mxu0
      %3213 = vmatprep.mubr.f32.mxu0 0.0
      %3214 = vmatmul.mubr.f32.gmra.mrb[0].mxu0 %v3019
      %v3215 = vpop.f32.mrb[0].mxu0
      %v3216 = vadd.f32 0.0, %v3215
      %v3217 = vpop.f32.mrb[0].mxu0
      %3218 = vmatprep.mubr.f32.mxu0 0.0
      %3219 = vmatmul.mubr.f32.gmra.mrb[0].mxu0 %v3022
      %v3220 = vpop.f32.mrb[0].mxu0
      %v3221 = vadd.f32 0.0, %v3220
      %v3222 = vpop.f32.mrb[0].mxu0
      %3223 = vmatprep.mubr.f32.mxu0 0.0
      %3224 = vmatmul.mubr.f32.gmra.mrb[0].mxu0 %v3025
      %v3225 = vpop.f32.mrb[0].mxu0
      %v3226 = vadd.f32 0.0, %v3225
      %v3227 = vpop.f32.mrb[0].mxu0
      %3228 = vmatprep.mubr.f32.mxu0 0.0
      %3229 = vmatmul.mubr.f32.gmra.mrb[0].mxu0 %v3028
      %v3230 = vpop.f32.mrb[0].mxu0
      %v3231 = vadd.f32 0.0, %v3230
      %v3232 = vpop.f32.mrb[0].mxu0
      %3233 = vmatprep.mubr.f32.mxu0 0.0
      %3234 = vmatmul.mubr.f32.gmra.mrb[0].mxu0 %v3031
      %v3235 = vpop.f32.mrb[0].mxu0
      %v3236 = vadd.f32 0.0, %v3235
      %v3237 = vpop.f32.mrb[0].mxu0
      %3238 = vmatprep.mubr.f32.mxu0 0.0
      %3239 = vmatmul.mubr.f32.gmra.mrb[0].mxu0 %v3034
      %v3240 = vpop.f32.mrb[0].mxu0
      %v3241 = vadd.f32 0.0, %v3240
      %v3242 = vpop.f32.mrb[0].mxu0
      %3243 = vmatprep.mubr.f32.mxu0 0.0
      %3244 = vmatmul.mubr.f32.gmra.mrb[0].mxu0 %v3037
      %v3245 = vpop.f32.mrb[0].mxu0
      %v3246 = vadd.f32 0.0, %v3245
      %v3247 = vpop.f32.mrb[0].mxu0
      %3248 = vmatprep.mubr.f32.mxu0 0.0
      %3249 = vmatmul.mubr.f32.gmra.mrb[0].mxu0 %v3040
      %v3250 = vpop.f32.mrb[0].mxu0
      %v3251 = vadd.f32 0.0, %v3250
      %v3252 = vpop.f32.mrb[0].mxu0
      %3253 = vmatprep.mubr.f32.mxu0 0.0
      %3254 = vmatmul.mubr.f32.gmra.mrb[0].mxu0 %v3043
      %v3255 = vpop.f32.mrb[0].mxu0
      %v3256 = vadd.f32 0.0, %v3255
      %v3257 = vpop.f32.mrb[0].mxu0
      %3258 = vmatprep.mubr.f32.mxu0 0.0
      %3259 = vmatmul.mubr.f32.gmra.mrb[0].mxu0 %v3046
      %v3260 = vpop.f32.mrb[0].mxu0
      %v3261 = vadd.f32 0.0, %v3260
      %v3262 = vpop.f32.mrb[0].mxu0
      %3263 = vmatprep.mubr.f32.mxu0 0.0
      %3264 = vmatmul.mubr.f32.gmra.mrb[0].mxu0 %v3049
      %v3265 = vpop.f32.mrb[0].mxu0
      %v3266 = vadd.f32 0.0, %v3265
      %v3267 = vpop.f32.mrb[0].mxu0
      %3268 = vmatprep.mubr.f32.mxu0 0.0
      %3269 = vmatmul.mubr.f32.gmra.mrb[0].mxu0 %v3052
      %v3270 = vpop.f32.mrb[0].mxu0
      %v3271 = vadd.f32 0.0, %v3270
      %v3272 = vpop.f32.mrb[0].mxu0
      %3273 = vmatprep.mubr.f32.mxu0 0.0
      %3274 = vmatmul.mubr.f32.gmra.mrb[0].mxu0 %v3055
      %v3275 = vpop.f32.mrb[0].mxu0
      %v3276 = vadd.f32 0.0, %v3275
      %v3277 = vpop.f32.mrb[0].mxu0
      %3278 = vmatprep.mubr.f32.mxu0 0.0
      %3279 = vmatmul.mubr.f32.gmra.mrb[0].mxu0 %v3058
      %v3280 = vpop.f32.mrb[0].mxu0
      %v3281 = vadd.f32 0.0, %v3280
      %v3282 = vpop.f32.mrb[0].mxu0
      %3283 = vmatprep.mubr.f32.mxu0 0.0
      %3284 = vmatmul.mubr.f32.gmra.mrb[0].mxu0 %v3061
      %v3285 = vpop.f32.mrb[0].mxu0
      %v3286 = vadd.f32 0.0, %v3285
      %v3287 = vpop.f32.mrb[0].mxu0
      %3288 = vmatprep.mubr.f32.mxu0 0.0
      %3289 = vmatmul.mubr.f32.gmra.mrb[0].mxu0 %v3064
      %v3290 = vpop.f32.mrb[0].mxu0
      %v3291 = vadd.f32 0.0, %v3290
      %v3292 = vpop.f32.mrb[0].mxu0
      %3293 = vdwg.mxu0
      %v3294 = vadd.f32 %v2938, %v3136
      %v3295 = vadd.f32 %v2939, %v3141
      %v3296 = vadd.f32 %v2940, %v3146
      %v3297 = vadd.f32 %v2941, %v3151
      %v3298 = vadd.f32 %v2942, %v3156
      %v3299 = vadd.f32 %v2943, %v3161
      %v3300 = vadd.f32 %v2944, %v3166
      %v3301 = vadd.f32 %v2945, %v3171
      %v3302 = vadd.f32 %v2946, %v3176
      %v3303 = vadd.f32 %v2947, %v3181
      %v3304 = vadd.f32 %v2948, %v3186
      %v3305 = vadd.f32 %v2949, %v3191
      %v3306 = vadd.f32 %v2950, %v3196
      %v3307 = vadd.f32 %v2951, %v3201
      %v3308 = vadd.f32 %v2952, %v3206
      %v3309 = vadd.f32 %v2953, %v3211
      %v3310 = vadd.f32 %v2954, %v3216
      %v3311 = vadd.f32 %v2955, %v3221
      %v3312 = vadd.f32 %v2956, %v3226
      %v3313 = vadd.f32 %v2957, %v3231
      %v3314 = vadd.f32 %v2958, %v3236
      %v3315 = vadd.f32 %v2959, %v3241
      %v3316 = vadd.f32 %v2960, %v3246
      %v3317 = vadd.f32 %v2961, %v3251
      %v3318 = vadd.f32 %v2962, %v3256
      %v3319 = vadd.f32 %v2963, %v3261
      %v3320 = vadd.f32 %v2964, %v3266
      %v3321 = vadd.f32 %v2965, %v3271
      %v3322 = vadd.f32 %v2966, %v3276
      %v3323 = vadd.f32 %v2967, %v3281
      %v3324 = vadd.f32 %v2968, %v3286
      %v3325 = vadd.f32 %v2969, %v3291
      %3326 = vst.msk [vmem:[#allocation2] sm:$0xff] %vm144, %v3294
      %3327 = vst.msk [vmem:[#allocation2 + $0x8] sm:$0xff] %vm144, %v3295
      %3328 = vst.msk [vmem:[#allocation2 + $0x10] sm:$0xff] %vm144, %v3296
      %3329 = vst.msk [vmem:[#allocation2 + $0x18] sm:$0xff] %vm144, %v3297
      %3330 = vst.msk [vmem:[#allocation2 + $0x20] sm:$0xff] %vm144, %v3298
      %3331 = vst.msk [vmem:[#allocation2 + $0x28] sm:$0xff] %vm144, %v3299
      %3332 = vst.msk [vmem:[#allocation2 + $0x30] sm:$0xff] %vm144, %v3300
      %3333 = vst.msk [vmem:[#allocation2 + $0x38] sm:$0xff] %vm144, %v3301
      %3334 = vst.msk [vmem:[#allocation2 + $0x40] sm:$0xff] %vm144, %v3302
      %3335 = vst.msk [vmem:[#allocation2 + $0x48] sm:$0xff] %vm144, %v3303
      %3336 = vst.msk [vmem:[#allocation2 + $0x50] sm:$0xff] %vm144, %v3304
      %3337 = vst.msk [vmem:[#allocation2 + $0x58] sm:$0xff] %vm144, %v3305
      %3338 = vst.msk [vmem:[#allocation2 + $0x60] sm:$0xff] %vm144, %v3306
      %3339 = vst.msk [vmem:[#allocation2 + $0x68] sm:$0xff] %vm144, %v3307
      %3340 = vst.msk [vmem:[#allocation2 + $0x70] sm:$0xff] %vm144, %v3308
      %3341 = vst.msk [vmem:[#allocation2 + $0x78] sm:$0xff] %vm144, %v3309
      %3342 = vst.msk [vmem:[#allocation2 + $0x80] sm:$0xff] %vm144, %v3310
      %3343 = vst.msk [vmem:[#allocation2 + $0x88] sm:$0xff] %vm144, %v3311
      %3344 = vst.msk [vmem:[#allocation2 + $0x90] sm:$0xff] %vm144, %v3312
      %3345 = vst.msk [vmem:[#allocation2 + $0x98] sm:$0xff] %vm144, %v3313
      %3346 = vst.msk [vmem:[#allocation2 + $0xa0] sm:$0xff] %vm144, %v3314
      %3347 = vst.msk [vmem:[#allocation2 + $0xa8] sm:$0xff] %vm144, %v3315
      %3348 = vst.msk [vmem:[#allocation2 + $0xb0] sm:$0xff] %vm144, %v3316
      %3349 = vst.msk [vmem:[#allocation2 + $0xb8] sm:$0xff] %vm144, %v3317
      %3350 = vst.msk [vmem:[#allocation2 + $0xc0] sm:$0xff] %vm144, %v3318
      %3351 = vst.msk [vmem:[#allocation2 + $0xc8] sm:$0xff] %vm144, %v3319
      %3352 = vst.msk [vmem:[#allocation2 + $0xd0] sm:$0xff] %vm144, %v3320
      %3353 = vst.msk [vmem:[#allocation2 + $0xd8] sm:$0xff] %vm144, %v3321
      %3354 = vst.msk [vmem:[#allocation2 + $0xe0] sm:$0xff] %vm144, %v3322
      %3355 = vst.msk [vmem:[#allocation2 + $0xe8] sm:$0xff] %vm144, %v3323
      %3356 = vst.msk [vmem:[#allocation2 + $0xf0] sm:$0xff] %vm144, %v3324
      %3357 = vst.msk [vmem:[#allocation2 + $0xf8] sm:$0xff] %vm144, %v3325
      %v3358 = vld [vmem:[%s2903 + $0x1] sm:$0xff]
      %v3359 = vld [vmem:[%s2903 + $0x9] sm:$0xff]
      %v3360 = vld [vmem:[%s2903 + $0x19] sm:$0xff]
      %v3361 = vld [vmem:[%s2903 + $0x21] sm:$0xff]
      %v3362 = vld [vmem:[%s2903 + $0x31] sm:$0xff]
      %v3363 = vld [vmem:[%s2903 + $0x39] sm:$0xff]
      %v3364 = vld [vmem:[%s2903 + $0x49] sm:$0xff]
      %v3365 = vld [vmem:[%s2903 + $0x51] sm:$0xff]
      %v3366 = vld [vmem:[%s2903 + $0x61] sm:$0xff]
      %v3367 = vld [vmem:[%s2903 + $0x69] sm:$0xff]
      %v3368 = vld [vmem:[%s2903 + $0x79] sm:$0xff]
      %v3369 = vld [vmem:[%s2903 + $0x81] sm:$0xff]
      %v3370 = vld [vmem:[%s2903 + $0x91] sm:$0xff]
      %v3371 = vld [vmem:[%s2903 + $0x99] sm:$0xff]
      %v3372 = vld [vmem:[%s2903 + $0xa9] sm:$0xff]
      %v3373 = vld [vmem:[%s2903 + $0xb1] sm:$0xff]
      %v3374 = vld [vmem:[%s2903 + $0xc1] sm:$0xff]
      %v3375 = vld [vmem:[%s2903 + $0xc9] sm:$0xff]
      %v3376 = vld [vmem:[%s2903 + $0xd9] sm:$0xff]
      %v3377 = vld [vmem:[%s2903 + $0xe1] sm:$0xff]
      %v3378 = vld [vmem:[%s2903 + $0xf1] sm:$0xff]
      %v3379 = vld [vmem:[%s2903 + $0xf9] sm:$0xff]
      %v3380 = vld [vmem:[%s2903 + $0x109] sm:$0xff]
      %v3381 = vld [vmem:[%s2903 + $0x111] sm:$0xff]
      %v3382 = vld [vmem:[%s2903 + $0x121] sm:$0xff]
      %v3383 = vld [vmem:[%s2903 + $0x129] sm:$0xff]
      %v3384 = vld [vmem:[%s2903 + $0x139] sm:$0xff]
      %v3385 = vld [vmem:[%s2903 + $0x141] sm:$0xff]
      %v3386 = vld [vmem:[%s2903 + $0x151] sm:$0xff]
      %v3387 = vld [vmem:[%s2903 + $0x159] sm:$0xff]
      %v3388 = vld [vmem:[%s2903 + $0x169] sm:$0xff]
      %v3389 = vld [vmem:[%s2903 + $0x171] sm:$0xff]
      %s3390 = scalar_lea.vmem %s1, 28
      %v3391 = vld [vmem:[%s3390] sm:$0xf]
      %v3392 = vld [vmem:[#allocation2] sm:$0xff]
      %v3393 = vld [vmem:[#allocation2 + $0x8] sm:$0xff]
      %v3394 = vld [vmem:[#allocation2 + $0x10] sm:$0xff]
      %v3395 = vld [vmem:[#allocation2 + $0x18] sm:$0xff]
      %v3396 = vld [vmem:[#allocation2 + $0x20] sm:$0xff]
      %v3397 = vld [vmem:[#allocation2 + $0x28] sm:$0xff]
      %v3398 = vld [vmem:[#allocation2 + $0x30] sm:$0xff]
      %v3399 = vld [vmem:[#allocation2 + $0x38] sm:$0xff]
      %v3400 = vld [vmem:[#allocation2 + $0x40] sm:$0xff]
      %v3401 = vld [vmem:[#allocation2 + $0x48] sm:$0xff]
      %v3402 = vld [vmem:[#allocation2 + $0x50] sm:$0xff]
      %v3403 = vld [vmem:[#allocation2 + $0x58] sm:$0xff]
      %v3404 = vld [vmem:[#allocation2 + $0x60] sm:$0xff]
      %v3405 = vld [vmem:[#allocation2 + $0x68] sm:$0xff]
      %v3406 = vld [vmem:[#allocation2 + $0x70] sm:$0xff]
      %v3407 = vld [vmem:[#allocation2 + $0x78] sm:$0xff]
      %v3408 = vld [vmem:[#allocation2 + $0x80] sm:$0xff]
      %v3409 = vld [vmem:[#allocation2 + $0x88] sm:$0xff]
      %v3410 = vld [vmem:[#allocation2 + $0x90] sm:$0xff]
      %v3411 = vld [vmem:[#allocation2 + $0x98] sm:$0xff]
      %v3412 = vld [vmem:[#allocation2 + $0xa0] sm:$0xff]
      %v3413 = vld [vmem:[#allocation2 + $0xa8] sm:$0xff]
      %v3414 = vld [vmem:[#allocation2 + $0xb0] sm:$0xff]
      %v3415 = vld [vmem:[#allocation2 + $0xb8] sm:$0xff]
      %v3416 = vld [vmem:[#allocation2 + $0xc0] sm:$0xff]
      %v3417 = vld [vmem:[#allocation2 + $0xc8] sm:$0xff]
      %v3418 = vld [vmem:[#allocation2 + $0xd0] sm:$0xff]
      %v3419 = vld [vmem:[#allocation2 + $0xd8] sm:$0xff]
      %v3420 = vld [vmem:[#allocation2 + $0xe0] sm:$0xff]
      %v3421 = vld [vmem:[#allocation2 + $0xe8] sm:$0xff]
      %v3422 = vld [vmem:[#allocation2 + $0xf0] sm:$0xff]
      %v3423 = vld [vmem:[#allocation2 + $0xf8] sm:$0xff]
      %v3425 = vsel %vm242, %v3358, 0
      %v3428 = vsel %vm242, %v3359, 0
      %v3431 = vsel %vm242, %v3360, 0
      %v3434 = vsel %vm242, %v3361, 0
      %v3437 = vsel %vm242, %v3362, 0
      %v3440 = vsel %vm242, %v3363, 0
      %v3443 = vsel %vm242, %v3364, 0
      %v3446 = vsel %vm242, %v3365, 0
      %v3449 = vsel %vm242, %v3366, 0
      %v3452 = vsel %vm242, %v3367, 0
      %v3455 = vsel %vm242, %v3368, 0
      %v3458 = vsel %vm242, %v3369, 0
      %v3461 = vsel %vm242, %v3370, 0
      %v3464 = vsel %vm242, %v3371, 0
      %v3467 = vsel %vm242, %v3372, 0
      %v3470 = vsel %vm242, %v3373, 0
      %v3473 = vsel %vm242, %v3374, 0
      %v3476 = vsel %vm242, %v3375, 0
      %v3479 = vsel %vm242, %v3376, 0
      %v3482 = vsel %vm242, %v3377, 0
      %v3485 = vsel %vm242, %v3378, 0
      %v3488 = vsel %vm242, %v3379, 0
      %v3491 = vsel %vm242, %v3380, 0
      %v3494 = vsel %vm242, %v3381, 0
      %v3497 = vsel %vm242, %v3382, 0
      %v3500 = vsel %vm242, %v3383, 0
      %v3503 = vsel %vm242, %v3384, 0
      %v3506 = vsel %vm242, %v3385, 0
      %v3509 = vsel %vm242, %v3386, 0
      %v3512 = vsel %vm242, %v3387, 0
      %v3515 = vsel %vm242, %v3388, 0
      %v3518 = vsel %vm242, %v3389, 0
      %v3521 = vsel %vm339, %v3391, 0
      %3523 = vmatprep.subr.mxu0 0.0
      %3524 = vmatpush1.msra.mxu0 %v3521
      %3525 = vmatprep.subr.mxu0 0.0
      %3526 = vmatpush1.msra.mxu0 0.0
      %3527 = vmatprep.subr.mxu0 0.0
      %3528 = vmatpush1.msra.mxu0 0.0
      %3529 = vmatprep.subr.mxu0 0.0
      %3530 = vmatpush1.msra.mxu0 0.0
      %3531 = vmatprep.subr.mxu0 0.0
      %3532 = vmatpush1.msra.mxu0 0.0
      %3533 = vmatprep.subr.mxu0 0.0
      %3534 = vmatpush1.msra.mxu0 0.0
      %3535 = vmatprep.subr.mxu0 0.0
      %3536 = vmatpush1.msra.mxu0 0.0
      %3537 = vmatprep.subr.mxu0 0.0
      %3538 = vmatpush1.msra.mxu0 0.0
      %3539 = vmatprep.subr.mxu0 0.0
      %3540 = vmatpush1.msra.mxu0 0.0
      %3541 = vmatprep.subr.mxu0 0.0
      %3542 = vmatpush1.msra.mxu0 0.0
      %3543 = vmatprep.subr.mxu0 0.0
      %3544 = vmatpush1.msra.mxu0 0.0
      %3545 = vmatprep.subr.mxu0 0.0
      %3546 = vmatpush1.msra.mxu0 0.0
      %3547 = vmatprep.subr.mxu0 0.0
      %3548 = vmatpush1.msra.mxu0 0.0
      %3549 = vmatprep.subr.mxu0 0.0
      %3550 = vmatpush1.msra.mxu0 0.0
      %3551 = vmatprep.subr.mxu0 0.0
      %3552 = vmatpush1.msra.mxu0 0.0
      %3553 = vmatprep.subr.mxu0 0.0
      %3554 = vmatpush1.msra.mxu0 0.0
      %3555 = vmatprep.subr.mxu0 0.0
      %3556 = vmatpush1.msra.mxu0 0.0
      %3557 = vmatprep.subr.mxu0 0.0
      %3558 = vmatpush1.msra.mxu0 0.0
      %3559 = vmatprep.subr.mxu0 0.0
      %3560 = vmatpush1.msra.mxu0 0.0
      %3561 = vmatprep.subr.mxu0 0.0
      %3562 = vmatpush1.msra.mxu0 0.0
      %3563 = vmatprep.subr.mxu0 0.0
      %3564 = vmatpush1.msra.mxu0 0.0
      %3565 = vmatprep.subr.mxu0 0.0
      %3566 = vmatpush1.msra.mxu0 0.0
      %3567 = vmatprep.subr.mxu0 0.0
      %3568 = vmatpush1.msra.mxu0 0.0
      %3569 = vmatprep.subr.mxu0 0.0
      %3570 = vmatpush1.msra.mxu0 0.0
      %3571 = vmatprep.subr.mxu0 0.0
      %3572 = vmatpush1.msra.mxu0 0.0
      %3573 = vmatprep.subr.mxu0 0.0
      %3574 = vmatpush1.msra.mxu0 0.0
      %3575 = vmatprep.subr.mxu0 0.0
      %3576 = vmatpush1.msra.mxu0 0.0
      %3577 = vmatprep.subr.mxu0 0.0
      %3578 = vmatpush1.msra.mxu0 0.0
      %3579 = vmatprep.subr.mxu0 0.0
      %3580 = vmatpush1.msra.mxu0 0.0
      %3581 = vmatprep.subr.mxu0 0.0
      %3582 = vmatpush1.msra.mxu0 0.0
      %3583 = vmatprep.subr.mxu0 0.0
      %3584 = vmatpush1.msra.mxu0 0.0
      %3585 = vmatprep.subr.mxu0 0.0
      %3586 = vmatpush1.msra.mxu0 0.0
      %3587 = vmatprep.mubr.f32.mxu0 0.0
      %3588 = vmatmul.mubr.f32.gmra.mrb[0].mxu0 %v3425
      %v3589 = vpop.f32.mrb[0].mxu0
      %v3590 = vadd.f32 0.0, %v3589
      %v3591 = vpop.f32.mrb[0].mxu0
      %3592 = vmatprep.mubr.f32.mxu0 0.0
      %3593 = vmatmul.mubr.f32.gmra.mrb[0].mxu0 %v3428
      %v3594 = vpop.f32.mrb[0].mxu0
      %v3595 = vadd.f32 0.0, %v3594
      %v3596 = vpop.f32.mrb[0].mxu0
      %3597 = vmatprep.mubr.f32.mxu0 0.0
      %3598 = vmatmul.mubr.f32.gmra.mrb[0].mxu0 %v3431
      %v3599 = vpop.f32.mrb[0].mxu0
      %v3600 = vadd.f32 0.0, %v3599
      %v3601 = vpop.f32.mrb[0].mxu0
      %3602 = vmatprep.mubr.f32.mxu0 0.0
      %3603 = vmatmul.mubr.f32.gmra.mrb[0].mxu0 %v3434
      %v3604 = vpop.f32.mrb[0].mxu0
      %v3605 = vadd.f32 0.0, %v3604
      %v3606 = vpop.f32.mrb[0].mxu0
      %3607 = vmatprep.mubr.f32.mxu0 0.0
      %3608 = vmatmul.mubr.f32.gmra.mrb[0].mxu0 %v3437
      %v3609 = vpop.f32.mrb[0].mxu0
      %v3610 = vadd.f32 0.0, %v3609
      %v3611 = vpop.f32.mrb[0].mxu0
      %3612 = vmatprep.mubr.f32.mxu0 0.0
      %3613 = vmatmul.mubr.f32.gmra.mrb[0].mxu0 %v3440
      %v3614 = vpop.f32.mrb[0].mxu0
      %v3615 = vadd.f32 0.0, %v3614
      %v3616 = vpop.f32.mrb[0].mxu0
      %3617 = vmatprep.mubr.f32.mxu0 0.0
      %3618 = vmatmul.mubr.f32.gmra.mrb[0].mxu0 %v3443
      %v3619 = vpop.f32.mrb[0].mxu0
      %v3620 = vadd.f32 0.0, %v3619
      %v3621 = vpop.f32.mrb[0].mxu0
      %3622 = vmatprep.mubr.f32.mxu0 0.0
      %3623 = vmatmul.mubr.f32.gmra.mrb[0].mxu0 %v3446
      %v3624 = vpop.f32.mrb[0].mxu0
      %v3625 = vadd.f32 0.0, %v3624
      %v3626 = vpop.f32.mrb[0].mxu0
      %3627 = vmatprep.mubr.f32.mxu0 0.0
      %3628 = vmatmul.mubr.f32.gmra.mrb[0].mxu0 %v3449
      %v3629 = vpop.f32.mrb[0].mxu0
      %v3630 = vadd.f32 0.0, %v3629
      %v3631 = vpop.f32.mrb[0].mxu0
      %3632 = vmatprep.mubr.f32.mxu0 0.0
      %3633 = vmatmul.mubr.f32.gmra.mrb[0].mxu0 %v3452
      %v3634 = vpop.f32.mrb[0].mxu0
      %v3635 = vadd.f32 0.0, %v3634
      %v3636 = vpop.f32.mrb[0].mxu0
      %3637 = vmatprep.mubr.f32.mxu0 0.0
      %3638 = vmatmul.mubr.f32.gmra.mrb[0].mxu0 %v3455
      %v3639 = vpop.f32.mrb[0].mxu0
      %v3640 = vadd.f32 0.0, %v3639
      %v3641 = vpop.f32.mrb[0].mxu0
      %3642 = vmatprep.mubr.f32.mxu0 0.0
      %3643 = vmatmul.mubr.f32.gmra.mrb[0].mxu0 %v3458
      %v3644 = vpop.f32.mrb[0].mxu0
      %v3645 = vadd.f32 0.0, %v3644
      %v3646 = vpop.f32.mrb[0].mxu0
      %3647 = vmatprep.mubr.f32.mxu0 0.0
      %3648 = vmatmul.mubr.f32.gmra.mrb[0].mxu0 %v3461
      %v3649 = vpop.f32.mrb[0].mxu0
      %v3650 = vadd.f32 0.0, %v3649
      %v3651 = vpop.f32.mrb[0].mxu0
      %3652 = vmatprep.mubr.f32.mxu0 0.0
      %3653 = vmatmul.mubr.f32.gmra.mrb[0].mxu0 %v3464
      %v3654 = vpop.f32.mrb[0].mxu0
      %v3655 = vadd.f32 0.0, %v3654
      %v3656 = vpop.f32.mrb[0].mxu0
      %3657 = vmatprep.mubr.f32.mxu0 0.0
      %3658 = vmatmul.mubr.f32.gmra.mrb[0].mxu0 %v3467
      %v3659 = vpop.f32.mrb[0].mxu0
      %v3660 = vadd.f32 0.0, %v3659
      %v3661 = vpop.f32.mrb[0].mxu0
      %3662 = vmatprep.mubr.f32.mxu0 0.0
      %3663 = vmatmul.mubr.f32.gmra.mrb[0].mxu0 %v3470
      %v3664 = vpop.f32.mrb[0].mxu0
      %v3665 = vadd.f32 0.0, %v3664
      %v3666 = vpop.f32.mrb[0].mxu0
      %3667 = vmatprep.mubr.f32.mxu0 0.0
      %3668 = vmatmul.mubr.f32.gmra.mrb[0].mxu0 %v3473
      %v3669 = vpop.f32.mrb[0].mxu0
      %v3670 = vadd.f32 0.0, %v3669
      %v3671 = vpop.f32.mrb[0].mxu0
      %3672 = vmatprep.mubr.f32.mxu0 0.0
      %3673 = vmatmul.mubr.f32.gmra.mrb[0].mxu0 %v3476
      %v3674 = vpop.f32.mrb[0].mxu0
      %v3675 = vadd.f32 0.0, %v3674
      %v3676 = vpop.f32.mrb[0].mxu0
      %3677 = vmatprep.mubr.f32.mxu0 0.0
      %3678 = vmatmul.mubr.f32.gmra.mrb[0].mxu0 %v3479
      %v3679 = vpop.f32.mrb[0].mxu0
      %v3680 = vadd.f32 0.0, %v3679
      %v3681 = vpop.f32.mrb[0].mxu0
      %3682 = vmatprep.mubr.f32.mxu0 0.0
      %3683 = vmatmul.mubr.f32.gmra.mrb[0].mxu0 %v3482
      %v3684 = vpop.f32.mrb[0].mxu0
      %v3685 = vadd.f32 0.0, %v3684
      %v3686 = vpop.f32.mrb[0].mxu0
      %3687 = vmatprep.mubr.f32.mxu0 0.0
      %3688 = vmatmul.mubr.f32.gmra.mrb[0].mxu0 %v3485
      %v3689 = vpop.f32.mrb[0].mxu0
      %v3690 = vadd.f32 0.0, %v3689
      %v3691 = vpop.f32.mrb[0].mxu0
      %3692 = vmatprep.mubr.f32.mxu0 0.0
      %3693 = vmatmul.mubr.f32.gmra.mrb[0].mxu0 %v3488
      %v3694 = vpop.f32.mrb[0].mxu0
      %v3695 = vadd.f32 0.0, %v3694
      %v3696 = vpop.f32.mrb[0].mxu0
      %3697 = vmatprep.mubr.f32.mxu0 0.0
      %3698 = vmatmul.mubr.f32.gmra.mrb[0].mxu0 %v3491
      %v3699 = vpop.f32.mrb[0].mxu0
      %v3700 = vadd.f32 0.0, %v3699
      %v3701 = vpop.f32.mrb[0].mxu0
      %3702 = vmatprep.mubr.f32.mxu0 0.0
      %3703 = vmatmul.mubr.f32.gmra.mrb[0].mxu0 %v3494
      %v3704 = vpop.f32.mrb[0].mxu0
      %v3705 = vadd.f32 0.0, %v3704
      %v3706 = vpop.f32.mrb[0].mxu0
      %3707 = vmatprep.mubr.f32.mxu0 0.0
      %3708 = vmatmul.mubr.f32.gmra.mrb[0].mxu0 %v3497
      %v3709 = vpop.f32.mrb[0].mxu0
      %v3710 = vadd.f32 0.0, %v3709
      %v3711 = vpop.f32.mrb[0].mxu0
      %3712 = vmatprep.mubr.f32.mxu0 0.0
      %3713 = vmatmul.mubr.f32.gmra.mrb[0].mxu0 %v3500
      %v3714 = vpop.f32.mrb[0].mxu0
      %v3715 = vadd.f32 0.0, %v3714
      %v3716 = vpop.f32.mrb[0].mxu0
      %3717 = vmatprep.mubr.f32.mxu0 0.0
      %3718 = vmatmul.mubr.f32.gmra.mrb[0].mxu0 %v3503
      %v3719 = vpop.f32.mrb[0].mxu0
      %v3720 = vadd.f32 0.0, %v3719
      %v3721 = vpop.f32.mrb[0].mxu0
      %3722 = vmatprep.mubr.f32.mxu0 0.0
      %3723 = vmatmul.mubr.f32.gmra.mrb[0].mxu0 %v3506
      %v3724 = vpop.f32.mrb[0].mxu0
      %v3725 = vadd.f32 0.0, %v3724
      %v3726 = vpop.f32.mrb[0].mxu0
      %3727 = vmatprep.mubr.f32.mxu0 0.0
      %3728 = vmatmul.mubr.f32.gmra.mrb[0].mxu0 %v3509
      %v3729 = vpop.f32.mrb[0].mxu0
      %v3730 = vadd.f32 0.0, %v3729
      %v3731 = vpop.f32.mrb[0].mxu0
      %3732 = vmatprep.mubr.f32.mxu0 0.0
      %3733 = vmatmul.mubr.f32.gmra.mrb[0].mxu0 %v3512
      %v3734 = vpop.f32.mrb[0].mxu0
      %v3735 = vadd.f32 0.0, %v3734
      %v3736 = vpop.f32.mrb[0].mxu0
      %3737 = vmatprep.mubr.f32.mxu0 0.0
      %3738 = vmatmul.mubr.f32.gmra.mrb[0].mxu0 %v3515
      %v3739 = vpop.f32.mrb[0].mxu0
      %v3740 = vadd.f32 0.0, %v3739
      %v3741 = vpop.f32.mrb[0].mxu0
      %3742 = vmatprep.mubr.f32.mxu0 0.0
      %3743 = vmatmul.mubr.f32.gmra.mrb[0].mxu0 %v3518
      %v3744 = vpop.f32.mrb[0].mxu0
      %v3745 = vadd.f32 0.0, %v3744
      %v3746 = vpop.f32.mrb[0].mxu0
      %3747 = vdwg.mxu0
      %v3748 = vadd.f32 %v3392, %v3590
      %v3749 = vadd.f32 %v3393, %v3595
      %v3750 = vadd.f32 %v3394, %v3600
      %v3751 = vadd.f32 %v3395, %v3605
      %v3752 = vadd.f32 %v3396, %v3610
      %v3753 = vadd.f32 %v3397, %v3615
      %v3754 = vadd.f32 %v3398, %v3620
      %v3755 = vadd.f32 %v3399, %v3625
      %v3756 = vadd.f32 %v3400, %v3630
      %v3757 = vadd.f32 %v3401, %v3635
      %v3758 = vadd.f32 %v3402, %v3640
      %v3759 = vadd.f32 %v3403, %v3645
      %v3760 = vadd.f32 %v3404, %v3650
      %v3761 = vadd.f32 %v3405, %v3655
      %v3762 = vadd.f32 %v3406, %v3660
      %v3763 = vadd.f32 %v3407, %v3665
      %v3764 = vadd.f32 %v3408, %v3670
      %v3765 = vadd.f32 %v3409, %v3675
      %v3766 = vadd.f32 %v3410, %v3680
      %v3767 = vadd.f32 %v3411, %v3685
      %v3768 = vadd.f32 %v3412, %v3690
      %v3769 = vadd.f32 %v3413, %v3695
      %v3770 = vadd.f32 %v3414, %v3700
      %v3771 = vadd.f32 %v3415, %v3705
      %v3772 = vadd.f32 %v3416, %v3710
      %v3773 = vadd.f32 %v3417, %v3715
      %v3774 = vadd.f32 %v3418, %v3720
      %v3775 = vadd.f32 %v3419, %v3725
      %v3776 = vadd.f32 %v3420, %v3730
      %v3777 = vadd.f32 %v3421, %v3735
      %v3778 = vadd.f32 %v3422, %v3740
      %v3779 = vadd.f32 %v3423, %v3745
      %3780 = vst.msk [vmem:[#allocation2] sm:$0xff] %vm144, %v3748
      %3781 = vst.msk [vmem:[#allocation2 + $0x8] sm:$0xff] %vm144, %v3749
      %3782 = vst.msk [vmem:[#allocation2 + $0x10] sm:$0xff] %vm144, %v3750
      %3783 = vst.msk [vmem:[#allocation2 + $0x18] sm:$0xff] %vm144, %v3751
      %3784 = vst.msk [vmem:[#allocation2 + $0x20] sm:$0xff] %vm144, %v3752
      %3785 = vst.msk [vmem:[#allocation2 + $0x28] sm:$0xff] %vm144, %v3753
      %3786 = vst.msk [vmem:[#allocation2 + $0x30] sm:$0xff] %vm144, %v3754
      %3787 = vst.msk [vmem:[#allocation2 + $0x38] sm:$0xff] %vm144, %v3755
      %3788 = vst.msk [vmem:[#allocation2 + $0x40] sm:$0xff] %vm144, %v3756
      %3789 = vst.msk [vmem:[#allocation2 + $0x48] sm:$0xff] %vm144, %v3757
      %3790 = vst.msk [vmem:[#allocation2 + $0x50] sm:$0xff] %vm144, %v3758
      %3791 = vst.msk [vmem:[#allocation2 + $0x58] sm:$0xff] %vm144, %v3759
      %3792 = vst.msk [vmem:[#allocation2 + $0x60] sm:$0xff] %vm144, %v3760
      %3793 = vst.msk [vmem:[#allocation2 + $0x68] sm:$0xff] %vm144, %v3761
      %3794 = vst.msk [vmem:[#allocation2 + $0x70] sm:$0xff] %vm144, %v3762
      %3795 = vst.msk [vmem:[#allocation2 + $0x78] sm:$0xff] %vm144, %v3763
      %3796 = vst.msk [vmem:[#allocation2 + $0x80] sm:$0xff] %vm144, %v3764
      %3797 = vst.msk [vmem:[#allocation2 + $0x88] sm:$0xff] %vm144, %v3765
      %3798 = vst.msk [vmem:[#allocation2 + $0x90] sm:$0xff] %vm144, %v3766
      %3799 = vst.msk [vmem:[#allocation2 + $0x98] sm:$0xff] %vm144, %v3767
      %3800 = vst.msk [vmem:[#allocation2 + $0xa0] sm:$0xff] %vm144, %v3768
      %3801 = vst.msk [vmem:[#allocation2 + $0xa8] sm:$0xff] %vm144, %v3769
      %3802 = vst.msk [vmem:[#allocation2 + $0xb0] sm:$0xff] %vm144, %v3770
      %3803 = vst.msk [vmem:[#allocation2 + $0xb8] sm:$0xff] %vm144, %v3771
      %3804 = vst.msk [vmem:[#allocation2 + $0xc0] sm:$0xff] %vm144, %v3772
      %3805 = vst.msk [vmem:[#allocation2 + $0xc8] sm:$0xff] %vm144, %v3773
      %3806 = vst.msk [vmem:[#allocation2 + $0xd0] sm:$0xff] %vm144, %v3774
      %3807 = vst.msk [vmem:[#allocation2 + $0xd8] sm:$0xff] %vm144, %v3775
      %3808 = vst.msk [vmem:[#allocation2 + $0xe0] sm:$0xff] %vm144, %v3776
      %3809 = vst.msk [vmem:[#allocation2 + $0xe8] sm:$0xff] %vm144, %v3777
      %3810 = vst.msk [vmem:[#allocation2 + $0xf0] sm:$0xff] %vm144, %v3778
      %3811 = vst.msk [vmem:[#allocation2 + $0xf8] sm:$0xff] %vm144, %v3779
      %v3812 = vld [vmem:[%s2903 + $0x2] sm:$0xff]
      %v3813 = vld [vmem:[%s2903 + $0xa] sm:$0xff]
      %v3814 = vld [vmem:[%s2903 + $0x1a] sm:$0xff]
      %v3815 = vld [vmem:[%s2903 + $0x22] sm:$0xff]
      %v3816 = vld [vmem:[%s2903 + $0x32] sm:$0xff]
      %v3817 = vld [vmem:[%s2903 + $0x3a] sm:$0xff]
      %v3818 = vld [vmem:[%s2903 + $0x4a] sm:$0xff]
      %v3819 = vld [vmem:[%s2903 + $0x52] sm:$0xff]
      %v3820 = vld [vmem:[%s2903 + $0x62] sm:$0xff]
      %v3821 = vld [vmem:[%s2903 + $0x6a] sm:$0xff]
      %v3822 = vld [vmem:[%s2903 + $0x7a] sm:$0xff]
      %v3823 = vld [vmem:[%s2903 + $0x82] sm:$0xff]
      %v3824 = vld [vmem:[%s2903 + $0x92] sm:$0xff]
      %v3825 = vld [vmem:[%s2903 + $0x9a] sm:$0xff]
      %v3826 = vld [vmem:[%s2903 + $0xaa] sm:$0xff]
      %v3827 = vld [vmem:[%s2903 + $0xb2] sm:$0xff]
      %v3828 = vld [vmem:[%s2903 + $0xc2] sm:$0xff]
      %v3829 = vld [vmem:[%s2903 + $0xca] sm:$0xff]
      %v3830 = vld [vmem:[%s2903 + $0xda] sm:$0xff]
      %v3831 = vld [vmem:[%s2903 + $0xe2] sm:$0xff]
      %v3832 = vld [vmem:[%s2903 + $0xf2] sm:$0xff]
      %v3833 = vld [vmem:[%s2903 + $0xfa] sm:$0xff]
      %v3834 = vld [vmem:[%s2903 + $0x10a] sm:$0xff]
      %v3835 = vld [vmem:[%s2903 + $0x112] sm:$0xff]
      %v3836 = vld [vmem:[%s2903 + $0x122] sm:$0xff]
      %v3837 = vld [vmem:[%s2903 + $0x12a] sm:$0xff]
      %v3838 = vld [vmem:[%s2903 + $0x13a] sm:$0xff]
      %v3839 = vld [vmem:[%s2903 + $0x142] sm:$0xff]
      %v3840 = vld [vmem:[%s2903 + $0x152] sm:$0xff]
      %v3841 = vld [vmem:[%s2903 + $0x15a] sm:$0xff]
      %v3842 = vld [vmem:[%s2903 + $0x16a] sm:$0xff]
      %v3843 = vld [vmem:[%s2903 + $0x172] sm:$0xff]
      %s3844 = scalar_lea.vmem %s1, 32
      %v3845 = vld [vmem:[%s3844] sm:$0xf]
      %v3846 = vld [vmem:[#allocation2] sm:$0xff]
      %v3847 = vld [vmem:[#allocation2 + $0x8] sm:$0xff]
      %v3848 = vld [vmem:[#allocation2 + $0x10] sm:$0xff]
      %v3849 = vld [vmem:[#allocation2 + $0x18] sm:$0xff]
      %v3850 = vld [vmem:[#allocation2 + $0x20] sm:$0xff]
      %v3851 = vld [vmem:[#allocation2 + $0x28] sm:$0xff]
      %v3852 = vld [vmem:[#allocation2 + $0x30] sm:$0xff]
      %v3853 = vld [vmem:[#allocation2 + $0x38] sm:$0xff]
      %v3854 = vld [vmem:[#allocation2 + $0x40] sm:$0xff]
      %v3855 = vld [vmem:[#allocation2 + $0x48] sm:$0xff]
      %v3856 = vld [vmem:[#allocation2 + $0x50] sm:$0xff]
      %v3857 = vld [vmem:[#allocation2 + $0x58] sm:$0xff]
      %v3858 = vld [vmem:[#allocation2 + $0x60] sm:$0xff]
      %v3859 = vld [vmem:[#allocation2 + $0x68] sm:$0xff]
      %v3860 = vld [vmem:[#allocation2 + $0x70] sm:$0xff]
      %v3861 = vld [vmem:[#allocation2 + $0x78] sm:$0xff]
      %v3862 = vld [vmem:[#allocation2 + $0x80] sm:$0xff]
      %v3863 = vld [vmem:[#allocation2 + $0x88] sm:$0xff]
      %v3864 = vld [vmem:[#allocation2 + $0x90] sm:$0xff]
      %v3865 = vld [vmem:[#allocation2 + $0x98] sm:$0xff]
      %v3866 = vld [vmem:[#allocation2 + $0xa0] sm:$0xff]
      %v3867 = vld [vmem:[#allocation2 + $0xa8] sm:$0xff]
      %v3868 = vld [vmem:[#allocation2 + $0xb0] sm:$0xff]
      %v3869 = vld [vmem:[#allocation2 + $0xb8] sm:$0xff]
      %v3870 = vld [vmem:[#allocation2 + $0xc0] sm:$0xff]
      %v3871 = vld [vmem:[#allocation2 + $0xc8] sm:$0xff]
      %v3872 = vld [vmem:[#allocation2 + $0xd0] sm:$0xff]
      %v3873 = vld [vmem:[#allocation2 + $0xd8] sm:$0xff]
      %v3874 = vld [vmem:[#allocation2 + $0xe0] sm:$0xff]
      %v3875 = vld [vmem:[#allocation2 + $0xe8] sm:$0xff]
      %v3876 = vld [vmem:[#allocation2 + $0xf0] sm:$0xff]
      %v3877 = vld [vmem:[#allocation2 + $0xf8] sm:$0xff]
      %v3879 = vsel %vm242, %v3812, 0
      %v3882 = vsel %vm242, %v3813, 0
      %v3885 = vsel %vm242, %v3814, 0
      %v3888 = vsel %vm242, %v3815, 0
      %v3891 = vsel %vm242, %v3816, 0
      %v3894 = vsel %vm242, %v3817, 0
      %v3897 = vsel %vm242, %v3818, 0
      %v3900 = vsel %vm242, %v3819, 0
      %v3903 = vsel %vm242, %v3820, 0
      %v3906 = vsel %vm242, %v3821, 0
      %v3909 = vsel %vm242, %v3822, 0
      %v3912 = vsel %vm242, %v3823, 0
      %v3915 = vsel %vm242, %v3824, 0
      %v3918 = vsel %vm242, %v3825, 0
      %v3921 = vsel %vm242, %v3826, 0
      %v3924 = vsel %vm242, %v3827, 0
      %v3927 = vsel %vm242, %v3828, 0
      %v3930 = vsel %vm242, %v3829, 0
      %v3933 = vsel %vm242, %v3830, 0
      %v3936 = vsel %vm242, %v3831, 0
      %v3939 = vsel %vm242, %v3832, 0
      %v3942 = vsel %vm242, %v3833, 0
      %v3945 = vsel %vm242, %v3834, 0
      %v3948 = vsel %vm242, %v3835, 0
      %v3951 = vsel %vm242, %v3836, 0
      %v3954 = vsel %vm242, %v3837, 0
      %v3957 = vsel %vm242, %v3838, 0
      %v3960 = vsel %vm242, %v3839, 0
      %v3963 = vsel %vm242, %v3840, 0
      %v3966 = vsel %vm242, %v3841, 0
      %v3969 = vsel %vm242, %v3842, 0
      %v3972 = vsel %vm242, %v3843, 0
      %v3975 = vsel %vm339, %v3845, 0
      %3977 = vmatprep.subr.mxu0 0.0
      %3978 = vmatpush1.msra.mxu0 %v3975
      %3979 = vmatprep.subr.mxu0 0.0
      %3980 = vmatpush1.msra.mxu0 0.0
      %3981 = vmatprep.subr.mxu0 0.0
      %3982 = vmatpush1.msra.mxu0 0.0
      %3983 = vmatprep.subr.mxu0 0.0
      %3984 = vmatpush1.msra.mxu0 0.0
      %3985 = vmatprep.subr.mxu0 0.0
      %3986 = vmatpush1.msra.mxu0 0.0
      %3987 = vmatprep.subr.mxu0 0.0
      %3988 = vmatpush1.msra.mxu0 0.0
      %3989 = vmatprep.subr.mxu0 0.0
      %3990 = vmatpush1.msra.mxu0 0.0
      %3991 = vmatprep.subr.mxu0 0.0
      %3992 = vmatpush1.msra.mxu0 0.0
      %3993 = vmatprep.subr.mxu0 0.0
      %3994 = vmatpush1.msra.mxu0 0.0
      %3995 = vmatprep.subr.mxu0 0.0
      %3996 = vmatpush1.msra.mxu0 0.0
      %3997 = vmatprep.subr.mxu0 0.0
      %3998 = vmatpush1.msra.mxu0 0.0
      %3999 = vmatprep.subr.mxu0 0.0
      %4000 = vmatpush1.msra.mxu0 0.0
      %4001 = vmatprep.subr.mxu0 0.0
      %4002 = vmatpush1.msra.mxu0 0.0
      %4003 = vmatprep.subr.mxu0 0.0
      %4004 = vmatpush1.msra.mxu0 0.0
      %4005 = vmatprep.subr.mxu0 0.0
      %4006 = vmatpush1.msra.mxu0 0.0
      %4007 = vmatprep.subr.mxu0 0.0
      %4008 = vmatpush1.msra.mxu0 0.0
      %4009 = vmatprep.subr.mxu0 0.0
      %4010 = vmatpush1.msra.mxu0 0.0
      %4011 = vmatprep.subr.mxu0 0.0
      %4012 = vmatpush1.msra.mxu0 0.0
      %4013 = vmatprep.subr.mxu0 0.0
      %4014 = vmatpush1.msra.mxu0 0.0
      %4015 = vmatprep.subr.mxu0 0.0
      %4016 = vmatpush1.msra.mxu0 0.0
      %4017 = vmatprep.subr.mxu0 0.0
      %4018 = vmatpush1.msra.mxu0 0.0
      %4019 = vmatprep.subr.mxu0 0.0
      %4020 = vmatpush1.msra.mxu0 0.0
      %4021 = vmatprep.subr.mxu0 0.0
      %4022 = vmatpush1.msra.mxu0 0.0
      %4023 = vmatprep.subr.mxu0 0.0
      %4024 = vmatpush1.msra.mxu0 0.0
      %4025 = vmatprep.subr.mxu0 0.0
      %4026 = vmatpush1.msra.mxu0 0.0
      %4027 = vmatprep.subr.mxu0 0.0
      %4028 = vmatpush1.msra.mxu0 0.0
      %4029 = vmatprep.subr.mxu0 0.0
      %4030 = vmatpush1.msra.mxu0 0.0
      %4031 = vmatprep.subr.mxu0 0.0
      %4032 = vmatpush1.msra.mxu0 0.0
      %4033 = vmatprep.subr.mxu0 0.0
      %4034 = vmatpush1.msra.mxu0 0.0
      %4035 = vmatprep.subr.mxu0 0.0
      %4036 = vmatpush1.msra.mxu0 0.0
      %4037 = vmatprep.subr.mxu0 0.0
      %4038 = vmatpush1.msra.mxu0 0.0
      %4039 = vmatprep.subr.mxu0 0.0
      %4040 = vmatpush1.msra.mxu0 0.0
      %4041 = vmatprep.mubr.f32.mxu0 0.0
      %4042 = vmatmul.mubr.f32.gmra.mrb[0].mxu0 %v3879
      %v4043 = vpop.f32.mrb[0].mxu0
      %v4044 = vadd.f32 0.0, %v4043
      %v4045 = vpop.f32.mrb[0].mxu0
      %4046 = vmatprep.mubr.f32.mxu0 0.0
      %4047 = vmatmul.mubr.f32.gmra.mrb[0].mxu0 %v3882
      %v4048 = vpop.f32.mrb[0].mxu0
      %v4049 = vadd.f32 0.0, %v4048
      %v4050 = vpop.f32.mrb[0].mxu0
      %4051 = vmatprep.mubr.f32.mxu0 0.0
      %4052 = vmatmul.mubr.f32.gmra.mrb[0].mxu0 %v3885
      %v4053 = vpop.f32.mrb[0].mxu0
      %v4054 = vadd.f32 0.0, %v4053
      %v4055 = vpop.f32.mrb[0].mxu0
      %4056 = vmatprep.mubr.f32.mxu0 0.0
      %4057 = vmatmul.mubr.f32.gmra.mrb[0].mxu0 %v3888
      %v4058 = vpop.f32.mrb[0].mxu0
      %v4059 = vadd.f32 0.0, %v4058
      %v4060 = vpop.f32.mrb[0].mxu0
      %4061 = vmatprep.mubr.f32.mxu0 0.0
      %4062 = vmatmul.mubr.f32.gmra.mrb[0].mxu0 %v3891
      %v4063 = vpop.f32.mrb[0].mxu0
      %v4064 = vadd.f32 0.0, %v4063
      %v4065 = vpop.f32.mrb[0].mxu0
      %4066 = vmatprep.mubr.f32.mxu0 0.0
      %4067 = vmatmul.mubr.f32.gmra.mrb[0].mxu0 %v3894
      %v4068 = vpop.f32.mrb[0].mxu0
      %v4069 = vadd.f32 0.0, %v4068
      %v4070 = vpop.f32.mrb[0].mxu0
      %4071 = vmatprep.mubr.f32.mxu0 0.0
      %4072 = vmatmul.mubr.f32.gmra.mrb[0].mxu0 %v3897
      %v4073 = vpop.f32.mrb[0].mxu0
      %v4074 = vadd.f32 0.0, %v4073
      %v4075 = vpop.f32.mrb[0].mxu0
      %4076 = vmatprep.mubr.f32.mxu0 0.0
      %4077 = vmatmul.mubr.f32.gmra.mrb[0].mxu0 %v3900
      %v4078 = vpop.f32.mrb[0].mxu0
      %v4079 = vadd.f32 0.0, %v4078
      %v4080 = vpop.f32.mrb[0].mxu0
      %4081 = vmatprep.mubr.f32.mxu0 0.0
      %4082 = vmatmul.mubr.f32.gmra.mrb[0].mxu0 %v3903
      %v4083 = vpop.f32.mrb[0].mxu0
      %v4084 = vadd.f32 0.0, %v4083
      %v4085 = vpop.f32.mrb[0].mxu0
      %4086 = vmatprep.mubr.f32.mxu0 0.0
      %4087 = vmatmul.mubr.f32.gmra.mrb[0].mxu0 %v3906
      %v4088 = vpop.f32.mrb[0].mxu0
      %v4089 = vadd.f32 0.0, %v4088
      %v4090 = vpop.f32.mrb[0].mxu0
      %4091 = vmatprep.mubr.f32.mxu0 0.0
      %4092 = vmatmul.mubr.f32.gmra.mrb[0].mxu0 %v3909
      %v4093 = vpop.f32.mrb[0].mxu0
      %v4094 = vadd.f32 0.0, %v4093
      %v4095 = vpop.f32.mrb[0].mxu0
      %4096 = vmatprep.mubr.f32.mxu0 0.0
      %4097 = vmatmul.mubr.f32.gmra.mrb[0].mxu0 %v3912
      %v4098 = vpop.f32.mrb[0].mxu0
      %v4099 = vadd.f32 0.0, %v4098
      %v4100 = vpop.f32.mrb[0].mxu0
      %4101 = vmatprep.mubr.f32.mxu0 0.0
      %4102 = vmatmul.mubr.f32.gmra.mrb[0].mxu0 %v3915
      %v4103 = vpop.f32.mrb[0].mxu0
      %v4104 = vadd.f32 0.0, %v4103
      %v4105 = vpop.f32.mrb[0].mxu0
      %4106 = vmatprep.mubr.f32.mxu0 0.0
      %4107 = vmatmul.mubr.f32.gmra.mrb[0].mxu0 %v3918
      %v4108 = vpop.f32.mrb[0].mxu0
      %v4109 = vadd.f32 0.0, %v4108
      %v4110 = vpop.f32.mrb[0].mxu0
      %4111 = vmatprep.mubr.f32.mxu0 0.0
      %4112 = vmatmul.mubr.f32.gmra.mrb[0].mxu0 %v3921
      %v4113 = vpop.f32.mrb[0].mxu0
      %v4114 = vadd.f32 0.0, %v4113
      %v4115 = vpop.f32.mrb[0].mxu0
      %4116 = vmatprep.mubr.f32.mxu0 0.0
      %4117 = vmatmul.mubr.f32.gmra.mrb[0].mxu0 %v3924
      %v4118 = vpop.f32.mrb[0].mxu0
      %v4119 = vadd.f32 0.0, %v4118
      %v4120 = vpop.f32.mrb[0].mxu0
      %4121 = vmatprep.mubr.f32.mxu0 0.0
      %4122 = vmatmul.mubr.f32.gmra.mrb[0].mxu0 %v3927
      %v4123 = vpop.f32.mrb[0].mxu0
      %v4124 = vadd.f32 0.0, %v4123
      %v4125 = vpop.f32.mrb[0].mxu0
      %4126 = vmatprep.mubr.f32.mxu0 0.0
      %4127 = vmatmul.mubr.f32.gmra.mrb[0].mxu0 %v3930
      %v4128 = vpop.f32.mrb[0].mxu0
      %v4129 = vadd.f32 0.0, %v4128
      %v4130 = vpop.f32.mrb[0].mxu0
      %4131 = vmatprep.mubr.f32.mxu0 0.0
      %4132 = vmatmul.mubr.f32.gmra.mrb[0].mxu0 %v3933
      %v4133 = vpop.f32.mrb[0].mxu0
      %v4134 = vadd.f32 0.0, %v4133
      %v4135 = vpop.f32.mrb[0].mxu0
      %4136 = vmatprep.mubr.f32.mxu0 0.0
      %4137 = vmatmul.mubr.f32.gmra.mrb[0].mxu0 %v3936
      %v4138 = vpop.f32.mrb[0].mxu0
      %v4139 = vadd.f32 0.0, %v4138
      %v4140 = vpop.f32.mrb[0].mxu0
      %4141 = vmatprep.mubr.f32.mxu0 0.0
      %4142 = vmatmul.mubr.f32.gmra.mrb[0].mxu0 %v3939
      %v4143 = vpop.f32.mrb[0].mxu0
      %v4144 = vadd.f32 0.0, %v4143
      %v4145 = vpop.f32.mrb[0].mxu0
      %4146 = vmatprep.mubr.f32.mxu0 0.0
      %4147 = vmatmul.mubr.f32.gmra.mrb[0].mxu0 %v3942
      %v4148 = vpop.f32.mrb[0].mxu0
      %v4149 = vadd.f32 0.0, %v4148
      %v4150 = vpop.f32.mrb[0].mxu0
      %4151 = vmatprep.mubr.f32.mxu0 0.0
      %4152 = vmatmul.mubr.f32.gmra.mrb[0].mxu0 %v3945
      %v4153 = vpop.f32.mrb[0].mxu0
      %v4154 = vadd.f32 0.0, %v4153
      %v4155 = vpop.f32.mrb[0].mxu0
      %4156 = vmatprep.mubr.f32.mxu0 0.0
      %4157 = vmatmul.mubr.f32.gmra.mrb[0].mxu0 %v3948
      %v4158 = vpop.f32.mrb[0].mxu0
      %v4159 = vadd.f32 0.0, %v4158
      %v4160 = vpop.f32.mrb[0].mxu0
      %4161 = vmatprep.mubr.f32.mxu0 0.0
      %4162 = vmatmul.mubr.f32.gmra.mrb[0].mxu0 %v3951
      %v4163 = vpop.f32.mrb[0].mxu0
      %v4164 = vadd.f32 0.0, %v4163
      %v4165 = vpop.f32.mrb[0].mxu0
      %4166 = vmatprep.mubr.f32.mxu0 0.0
      %4167 = vmatmul.mubr.f32.gmra.mrb[0].mxu0 %v3954
      %v4168 = vpop.f32.mrb[0].mxu0
      %v4169 = vadd.f32 0.0, %v4168
      %v4170 = vpop.f32.mrb[0].mxu0
      %4171 = vmatprep.mubr.f32.mxu0 0.0
      %4172 = vmatmul.mubr.f32.gmra.mrb[0].mxu0 %v3957
      %v4173 = vpop.f32.mrb[0].mxu0
      %v4174 = vadd.f32 0.0, %v4173
      %v4175 = vpop.f32.mrb[0].mxu0
      %4176 = vmatprep.mubr.f32.mxu0 0.0
      %4177 = vmatmul.mubr.f32.gmra.mrb[0].mxu0 %v3960
      %v4178 = vpop.f32.mrb[0].mxu0
      %v4179 = vadd.f32 0.0, %v4178
      %v4180 = vpop.f32.mrb[0].mxu0
      %4181 = vmatprep.mubr.f32.mxu0 0.0
      %4182 = vmatmul.mubr.f32.gmra.mrb[0].mxu0 %v3963
      %v4183 = vpop.f32.mrb[0].mxu0
      %v4184 = vadd.f32 0.0, %v4183
      %v4185 = vpop.f32.mrb[0].mxu0
      %4186 = vmatprep.mubr.f32.mxu0 0.0
      %4187 = vmatmul.mubr.f32.gmra.mrb[0].mxu0 %v3966
      %v4188 = vpop.f32.mrb[0].mxu0
      %v4189 = vadd.f32 0.0, %v4188
      %v4190 = vpop.f32.mrb[0].mxu0
      %4191 = vmatprep.mubr.f32.mxu0 0.0
      %4192 = vmatmul.mubr.f32.gmra.mrb[0].mxu0 %v3969
      %v4193 = vpop.f32.mrb[0].mxu0
      %v4194 = vadd.f32 0.0, %v4193
      %v4195 = vpop.f32.mrb[0].mxu0
      %4196 = vmatprep.mubr.f32.mxu0 0.0
      %4197 = vmatmul.mubr.f32.gmra.mrb[0].mxu0 %v3972
      %v4198 = vpop.f32.mrb[0].mxu0
      %v4199 = vadd.f32 0.0, %v4198
      %v4200 = vpop.f32.mrb[0].mxu0
      %4201 = vdwg.mxu0
      %v4202 = vadd.f32 %v3846, %v4044
      %v4203 = vadd.f32 %v3847, %v4049
      %v4204 = vadd.f32 %v3848, %v4054
      %v4205 = vadd.f32 %v3849, %v4059
      %v4206 = vadd.f32 %v3850, %v4064
      %v4207 = vadd.f32 %v3851, %v4069
      %v4208 = vadd.f32 %v3852, %v4074
      %v4209 = vadd.f32 %v3853, %v4079
      %v4210 = vadd.f32 %v3854, %v4084
      %v4211 = vadd.f32 %v3855, %v4089
      %v4212 = vadd.f32 %v3856, %v4094
      %v4213 = vadd.f32 %v3857, %v4099
      %v4214 = vadd.f32 %v3858, %v4104
      %v4215 = vadd.f32 %v3859, %v4109
      %v4216 = vadd.f32 %v3860, %v4114
      %v4217 = vadd.f32 %v3861, %v4119
      %v4218 = vadd.f32 %v3862, %v4124
      %v4219 = vadd.f32 %v3863, %v4129
      %v4220 = vadd.f32 %v3864, %v4134
      %v4221 = vadd.f32 %v3865, %v4139
      %v4222 = vadd.f32 %v3866, %v4144
      %v4223 = vadd.f32 %v3867, %v4149
      %v4224 = vadd.f32 %v3868, %v4154
      %v4225 = vadd.f32 %v3869, %v4159
      %v4226 = vadd.f32 %v3870, %v4164
      %v4227 = vadd.f32 %v3871, %v4169
      %v4228 = vadd.f32 %v3872, %v4174
      %v4229 = vadd.f32 %v3873, %v4179
      %v4230 = vadd.f32 %v3874, %v4184
      %v4231 = vadd.f32 %v3875, %v4189
      %v4232 = vadd.f32 %v3876, %v4194
      %v4233 = vadd.f32 %v3877, %v4199
      %4234 = vst.msk [vmem:[#allocation2] sm:$0xff] %vm144, %v4202
      %4235 = vst.msk [vmem:[#allocation2 + $0x8] sm:$0xff] %vm144, %v4203
      %4236 = vst.msk [vmem:[#allocation2 + $0x10] sm:$0xff] %vm144, %v4204
      %4237 = vst.msk [vmem:[#allocation2 + $0x18] sm:$0xff] %vm144, %v4205
      %4238 = vst.msk [vmem:[#allocation2 + $0x20] sm:$0xff] %vm144, %v4206
      %4239 = vst.msk [vmem:[#allocation2 + $0x28] sm:$0xff] %vm144, %v4207
      %4240 = vst.msk [vmem:[#allocation2 + $0x30] sm:$0xff] %vm144, %v4208
      %4241 = vst.msk [vmem:[#allocation2 + $0x38] sm:$0xff] %vm144, %v4209
      %4242 = vst.msk [vmem:[#allocation2 + $0x40] sm:$0xff] %vm144, %v4210
      %4243 = vst.msk [vmem:[#allocation2 + $0x48] sm:$0xff] %vm144, %v4211
      %4244 = vst.msk [vmem:[#allocation2 + $0x50] sm:$0xff] %vm144, %v4212
      %4245 = vst.msk [vmem:[#allocation2 + $0x58] sm:$0xff] %vm144, %v4213
      %4246 = vst.msk [vmem:[#allocation2 + $0x60] sm:$0xff] %vm144, %v4214
      %4247 = vst.msk [vmem:[#allocation2 + $0x68] sm:$0xff] %vm144, %v4215
      %4248 = vst.msk [vmem:[#allocation2 + $0x70] sm:$0xff] %vm144, %v4216
      %4249 = vst.msk [vmem:[#allocation2 + $0x78] sm:$0xff] %vm144, %v4217
      %4250 = vst.msk [vmem:[#allocation2 + $0x80] sm:$0xff] %vm144, %v4218
      %4251 = vst.msk [vmem:[#allocation2 + $0x88] sm:$0xff] %vm144, %v4219
      %4252 = vst.msk [vmem:[#allocation2 + $0x90] sm:$0xff] %vm144, %v4220
      %4253 = vst.msk [vmem:[#allocation2 + $0x98] sm:$0xff] %vm144, %v4221
      %4254 = vst.msk [vmem:[#allocation2 + $0xa0] sm:$0xff] %vm144, %v4222
      %4255 = vst.msk [vmem:[#allocation2 + $0xa8] sm:$0xff] %vm144, %v4223
      %4256 = vst.msk [vmem:[#allocation2 + $0xb0] sm:$0xff] %vm144, %v4224
      %4257 = vst.msk [vmem:[#allocation2 + $0xb8] sm:$0xff] %vm144, %v4225
      %4258 = vst.msk [vmem:[#allocation2 + $0xc0] sm:$0xff] %vm144, %v4226
      %4259 = vst.msk [vmem:[#allocation2 + $0xc8] sm:$0xff] %vm144, %v4227
      %4260 = vst.msk [vmem:[#allocation2 + $0xd0] sm:$0xff] %vm144, %v4228
      %4261 = vst.msk [vmem:[#allocation2 + $0xd8] sm:$0xff] %vm144, %v4229
      %4262 = vst.msk [vmem:[#allocation2 + $0xe0] sm:$0xff] %vm144, %v4230
      %4263 = vst.msk [vmem:[#allocation2 + $0xe8] sm:$0xff] %vm144, %v4231
      %4264 = vst.msk [vmem:[#allocation2 + $0xf0] sm:$0xff] %vm144, %v4232
      %4265 = vst.msk [vmem:[#allocation2 + $0xf8] sm:$0xff] %vm144, %v4233
      %v4266 = vld [vmem:[#allocation2] sm:$0xff]
      %v4267 = vld [vmem:[#allocation2 + $0x8] sm:$0xff]
      %v4268 = vld [vmem:[#allocation2 + $0x10] sm:$0xff]
      %v4269 = vld [vmem:[#allocation2 + $0x18] sm:$0xff]
      %v4270 = vld [vmem:[#allocation2 + $0x20] sm:$0xff]
      %v4271 = vld [vmem:[#allocation2 + $0x28] sm:$0xff]
      %v4272 = vld [vmem:[#allocation2 + $0x30] sm:$0xff]
      %v4273 = vld [vmem:[#allocation2 + $0x38] sm:$0xff]
      %v4274 = vld [vmem:[#allocation2 + $0x40] sm:$0xff]
      %v4275 = vld [vmem:[#allocation2 + $0x48] sm:$0xff]
      %v4276 = vld [vmem:[#allocation2 + $0x50] sm:$0xff]
      %v4277 = vld [vmem:[#allocation2 + $0x58] sm:$0xff]
      %v4278 = vld [vmem:[#allocation2 + $0x60] sm:$0xff]
      %v4279 = vld [vmem:[#allocation2 + $0x68] sm:$0xff]
      %v4280 = vld [vmem:[#allocation2 + $0x70] sm:$0xff]
      %v4281 = vld [vmem:[#allocation2 + $0x78] sm:$0xff]
      %v4282 = vld [vmem:[#allocation2 + $0x80] sm:$0xff]
      %v4283 = vld [vmem:[#allocation2 + $0x88] sm:$0xff]
      %v4284 = vld [vmem:[#allocation2 + $0x90] sm:$0xff]
      %v4285 = vld [vmem:[#allocation2 + $0x98] sm:$0xff]
      %v4286 = vld [vmem:[#allocation2 + $0xa0] sm:$0xff]
      %v4287 = vld [vmem:[#allocation2 + $0xa8] sm:$0xff]
      %v4288 = vld [vmem:[#allocation2 + $0xb0] sm:$0xff]
      %v4289 = vld [vmem:[#allocation2 + $0xb8] sm:$0xff]
      %v4290 = vld [vmem:[#allocation2 + $0xc0] sm:$0xff]
      %v4291 = vld [vmem:[#allocation2 + $0xc8] sm:$0xff]
      %v4292 = vld [vmem:[#allocation2 + $0xd0] sm:$0xff]
      %v4293 = vld [vmem:[#allocation2 + $0xd8] sm:$0xff]
      %v4294 = vld [vmem:[#allocation2 + $0xe0] sm:$0xff]
      %v4295 = vld [vmem:[#allocation2 + $0xe8] sm:$0xff]
      %v4296 = vld [vmem:[#allocation2 + $0xf0] sm:$0xff]
      %v4297 = vld [vmem:[#allocation2 + $0xf8] sm:$0xff]
      %4298 = vst.msk [vmem:[%s143] sm:$0xff] %vm144, %v4266
      %4299 = vst.msk [vmem:[%s143 + $0x8] sm:$0xff] %vm144, %v4267
      %4300 = vst.msk [vmem:[%s143 + $0x10] sm:$0xff] %vm144, %v4268
      %4301 = vst.msk [vmem:[%s143 + $0x18] sm:$0xff] %vm144, %v4269
      %4302 = vst.msk [vmem:[%s143 + $0x20] sm:$0xff] %vm144, %v4270
      %4303 = vst.msk [vmem:[%s143 + $0x28] sm:$0xff] %vm144, %v4271
      %4304 = vst.msk [vmem:[%s143 + $0x30] sm:$0xff] %vm144, %v4272
      %4305 = vst.msk [vmem:[%s143 + $0x38] sm:$0xff] %vm144, %v4273
      %4306 = vst.msk [vmem:[%s143 + $0x40] sm:$0xff] %vm144, %v4274
      %4307 = vst.msk [vmem:[%s143 + $0x48] sm:$0xff] %vm144, %v4275
      %4308 = vst.msk [vmem:[%s143 + $0x50] sm:$0xff] %vm144, %v4276
      %4309 = vst.msk [vmem:[%s143 + $0x58] sm:$0xff] %vm144, %v4277
      %4310 = vst.msk [vmem:[%s143 + $0x60] sm:$0xff] %vm144, %v4278
      %4311 = vst.msk [vmem:[%s143 + $0x68] sm:$0xff] %vm144, %v4279
      %4312 = vst.msk [vmem:[%s143 + $0x70] sm:$0xff] %vm144, %v4280
      %4313 = vst.msk [vmem:[%s143 + $0x78] sm:$0xff] %vm144, %v4281
      %4314 = vst.msk [vmem:[%s143 + $0x80] sm:$0xff] %vm144, %v4282
      %4315 = vst.msk [vmem:[%s143 + $0x88] sm:$0xff] %vm144, %v4283
      %4316 = vst.msk [vmem:[%s143 + $0x90] sm:$0xff] %vm144, %v4284
      %4317 = vst.msk [vmem:[%s143 + $0x98] sm:$0xff] %vm144, %v4285
      %4318 = vst.msk [vmem:[%s143 + $0xa0] sm:$0xff] %vm144, %v4286
      %4319 = vst.msk [vmem:[%s143 + $0xa8] sm:$0xff] %vm144, %v4287
      %4320 = vst.msk [vmem:[%s143 + $0xb0] sm:$0xff] %vm144, %v4288
      %4321 = vst.msk [vmem:[%s143 + $0xb8] sm:$0xff] %vm144, %v4289
      %4322 = vst.msk [vmem:[%s143 + $0xc0] sm:$0xff] %vm144, %v4290
      %4323 = vst.msk [vmem:[%s143 + $0xc8] sm:$0xff] %vm144, %v4291
      %4324 = vst.msk [vmem:[%s143 + $0xd0] sm:$0xff] %vm144, %v4292
      %4325 = vst.msk [vmem:[%s143 + $0xd8] sm:$0xff] %vm144, %v4293
      %4326 = vst.msk [vmem:[%s143 + $0xe0] sm:$0xff] %vm144, %v4294
      %4327 = vst.msk [vmem:[%s143 + $0xe8] sm:$0xff] %vm144, %v4295
      %4328 = vst.msk [vmem:[%s143 + $0xf0] sm:$0xff] %vm144, %v4296
      %4329 = vst.msk [vmem:[%s143 + $0xf8] sm:$0xff] %vm144, %v4297
      %p4330 = scmp.lt.s32.totalorder %s13, 1
      %s4331 = scalar_select %p4330, %s13, 1
      %s4332 = smul.addr %s4331, 32
      %s4333 = smul.addr %s4332, 8
      %s4334 = scalar_lea.vmem %s2, %s4333
      // Predicated region
      $region29: #{tpu_custom_call.1} parent=27 // pred_check
        %p4335 = pneg %p78
      $region30: #{tpu_custom_call.1} parent=27 // pred_check_branch
        %4337 = sbr.rel (%p4335) target = $region32
      $region31: #{tpu_custom_call.1} parent=27 // pred_region
        _
      $region32: #{tpu_custom_call.1} parent=27 // pred_fallthru
        _
    $region28: #{tpu_custom_call.1} parent=5 // pred_fallthru
      _
    %p4338 = scmp.le.s32.totalorder 2, %s8
    // Predicated region
    $region33: #{tpu_custom_call.1} parent=5 // pred_check
      %p4339 = pneg %p4338
    $region34: #{tpu_custom_call.1} parent=5 // pred_check_branch
      %4341 = sbr.rel (%p4339) target = $region36
    $region35: #{tpu_custom_call.1} parent=5 // pred_region
      %s4342 = ssub.s32 %s8, 2
      // Predicated region
      $region37: #{tpu_custom_call.1} parent=35 // pred_check
        %p4343 = pneg %p84
      $region38: #{tpu_custom_call.1} parent=35 // pred_check_branch
        %4345 = sbr.rel (%p4343) target = $region40
      $region39: #{tpu_custom_call.1} parent=35 // pred_region
        %p4346 = scmp.lt.s32.totalorder %s14, 1
        %s4347 = scalar_select %p4346, %s14, 1
        %s4348 = smul.addr %s4347, 32
        %s4349 = smul.addr %s4348, 8
        %s4350 = scalar_lea.vmem %s2, %s4349
      $region40: #{tpu_custom_call.1} parent=35 // pred_fallthru
        _
    $region36: #{tpu_custom_call.1} parent=5 // pred_fallthru
      _
  $region6: #{tpu_custom_call.1} parent=0 // loop_footer
    %s12 = sadd.s32 1, %s8
  $region7: #{tpu_custom_call.1} parent=0 // loop_footer_branch
    %7 = sbr.rel target = $region3
  $region8: #{tpu_custom_call.1} parent=0 // loop_exit
    _

</llo_original>
